<compile_context>
chip_gen: v6e
topology: v6e:2x2x1
jax: 0.10.0
libtpu: 0.0.40
codegen_flags: <defaults>
</compile_context>

<pallas_src>
import functools

import jax
import jax.numpy as jnp
import numpy as np
from jax.experimental import pallas as pl
from jax.experimental.pallas import tpu as pltpu


def _corr_kernel(x1_ref, x2_ref, out_ref, acc_ref, *, D, stride2, base, md, K,
                 H_out, W_out, Wband, inv_sumelems, use_mxu):
    """One (batch, dy-displacement) grid point.

    x1_ref, x2_ref: (1, Hp, Wp, C) padded NHWC blocks (full spatial extent).
    out_ref:        (1, D, H_out, W_out) -> the D x-displacement channels for this dy.
    acc_ref:        VMEM scratch (D, H_out, W_out) float32 accumulator.
    """
    dy = pl.program_id(1)
    oy = base + dy * stride2          # dynamic row offset (major axis only -> cheap)

    acc_ref[...] = jnp.zeros_like(acc_ref)

    if use_mxu:
        # Static diagonal-selection masks: displacement dxi picks band column x + dxi*stride2.
        w_idx = jax.lax.broadcasted_iota(jnp.int32, (W_out, Wband), 0)
        v_idx = jax.lax.broadcasted_iota(jnp.int32, (W_out, Wband), 1)
        sels = [v_idx == (w_idx + dxi * stride2) for dxi in range(D)]

    for ky in range(K):               # kernel window: static unroll (K <= 3 in practice)
        for kx in range(K):
            # x1 window does not depend on the displacement -> slice it ONCE per (ky, kx).
            a = x1_ref[0, pl.ds(md + ky, H_out), pl.ds(md + kx, W_out), :]

            if use_mxu:
                # Row-band cross-correlation on the MXU:
                #   S[h, x, v] = sum_c a[h, x, c] * band[h, v, c]
                band = x2_ref[0, pl.ds(oy + ky, H_out), pl.ds(base + kx, Wband), :]
                s = jnp.einsum("hwc,hvc->hwv", a, band,
                               preferred_element_type=jnp.float32)
                for dxi in range(D):  # extract the D strided diagonals of the band
                    acc_ref[dxi] += jnp.where(sels[dxi][None, :, :], s, 0.0).sum(axis=-1)
            else:
                af = a.astype(jnp.float32)
                for dxi in range(D):  # x-displacements: static unroll
                    ox = base + kx + dxi * stride2      # static column offset
                    b = x2_ref[0, pl.ds(oy + ky, H_out), pl.ds(ox, W_out), :]
                    acc_ref[dxi] += jnp.sum(af * b.astype(jnp.float32), axis=-1)

    out_ref[0] = (acc_ref[...] * inv_sumelems).astype(out_ref.dtype)


def correlation_pallas(input1, input2, pad_size, kernel_size, max_displacement,
                       stride1, stride2, corr_multiply, *, use_mxu=None):
    assert stride1 == 1, "TODO(synk): stride1 > 1 (strided output sampling) not implemented"
    assert corr_multiply == 1, "TODO(synk): only multiplicative correlation implemented"

    B, C, H, W = input1.shape
    assert input2.shape == input1.shape
    kr = (kernel_size - 1) // 2
    border = max_displacement + kr
    ngr = max_displacement // stride2
    D = 2 * ngr + 1
    H_out = H + 2 * pad_size - 2 * border
    W_out = W + 2 * pad_size - 2 * border
    assert H_out > 0 and W_out > 0, "pad_size too small for this kernel/displacement"
    base = max_displacement - ngr * stride2
    Wband = W_out + (D - 1) * stride2
    inv_sumelems = 1.0 / float(kernel_size * kernel_size * C)

    # NCHW -> NHWC (channels on the lane axis) + zero pad, keeping the caller's dtype
    # (bf16 stays bf16 in HBM/VMEM; the kernel accumulates in f32).
    x1 = jnp.pad(jnp.transpose(input1, (0, 2, 3, 1)),
                 ((0, 0), (pad_size, pad_size), (pad_size, pad_size), (0, 0)))
    x2 = jnp.pad(jnp.transpose(input2, (0, 2, 3, 1)),
                 ((0, 0), (pad_size, pad_size), (pad_size, pad_size), (0, 0)))
    Hp, Wp = H + 2 * pad_size, W + 2 * pad_size

    if use_mxu is None:
        # The band matmul pays off when the channel contraction (moved onto the MXU) is
        # at least as wide as the diagonal-extraction reduce that replaces it; restrict
        # the automatic choice to low-precision inputs so f32 numerics stay identical
        # to the plain VPU path.
        use_mxu = (jnp.dtype(input1.dtype).itemsize <= 2 and C >= Wband and C >= 32)

    kernel = functools.partial(
        _corr_kernel, D=D, stride2=stride2, base=base, md=max_displacement,
        K=kernel_size, H_out=H_out, W_out=W_out, Wband=Wband,
        inv_sumelems=inv_sumelems, use_mxu=use_mxu)

    # VMEM budget: 2 inputs x 2 pipeline buffers + 2 output buffers + accumulator scratch.
    itemsize = jnp.dtype(x1.dtype).itemsize
    vmem_need = (2 * 2 * Hp * Wp * C * itemsize
                 + 2 * D * H_out * W_out * 4
                 + D * H_out * W_out * 4
                 + (2 << 20))
    vmem_limit = int(min(max(vmem_need, 32 * 2 ** 20), 64 * 2 ** 20))

    out = pl.pallas_call(
        kernel,
        out_shape=jax.ShapeDtypeStruct((B, D * D, H_out, W_out), jnp.float32),
        grid_spec=pltpu.PrefetchScalarGridSpec(
            num_scalar_prefetch=0,
            grid=(B, D),                       # dy innermost: input blocks are revisited,
            in_specs=[                         # so they are not re-copied across dy.
                pl.BlockSpec((1, Hp, Wp, C), lambda b, dy: (b, 0, 0, 0)),
                pl.BlockSpec((1, Hp, Wp, C), lambda b, dy: (b, 0, 0, 0)),
            ],
            out_specs=pl.BlockSpec((1, D, H_out, W_out), lambda b, dy: (b, dy, 0, 0)),
            scratch_shapes=[pltpu.VMEM((D, H_out, W_out), jnp.float32)],
        ),
        compiler_params=pltpu.CompilerParams(
            dimension_semantics=("parallel", "arbitrary"),
            vmem_limit_bytes=vmem_limit),
    )(x1, x2)
    return out


class CorrelationProj:
    """JAX/Pallas counterpart of the PyTorch CorrelationProj module.

    The original module wraps a CUDA `correlation_proj_op` that correlates query
    features (input1: [B, C, H, W]) against each of N scene feature maps
    (input2: [B, N, C, H, W]) inside a (2*max_displacement/stride + 1)^2 window.

    TODO(synk): the projection-guided window centering (query_coords, scene_coords,
    scene_P) has no faithful equivalent without the CUDA op's source; coordinates and
    projection matrices are accepted but the window is centred at the identity pixel.
    """

    def __init__(self, max_displacement=None, stride=1):
        self.max_displacement = max_displacement
        self.stride = stride

    def __call__(self, input1, input2, query_coords=None, scene_coords=None, scene_P=None):
        del query_coords, scene_coords, scene_P   # TODO(synk): see class docstring.
        B, N, C, H, W = input2.shape
        outs = [
            correlation_pallas(input1, input2[:, n],
                               pad_size=self.max_displacement, kernel_size=1,
                               max_displacement=self.max_displacement,
                               stride1=1, stride2=self.stride, corr_multiply=1)
            for n in range(N)
        ]
        return jnp.stack(outs, axis=1)   # (B, N, D*D, H_out, W_out)


def correlation_ref(input1, input2, pad_size, kernel_size, max_displacement,
                    stride1, stride2, corr_multiply):
    """Pure-JAX reference (same Caffe/FlowNet semantics), NCHW in/out."""
    assert stride1 == 1 and corr_multiply == 1
    B, C, H, W = input1.shape
    kr = (kernel_size - 1) // 2
    border = max_displacement + kr
    ngr = max_displacement // stride2
    D = 2 * ngr + 1
    H_out = H + 2 * pad_size - 2 * border
    W_out = W + 2 * pad_size - 2 * border
    md = max_displacement
    a = jnp.pad(input1.astype(jnp.float32),
                ((0, 0), (0, 0), (pad_size, pad_size), (pad_size, pad_size)))
    b = jnp.pad(input2.astype(jnp.float32),
                ((0, 0), (0, 0), (pad_size, pad_size), (pad_size, pad_size)))
    outs = []
    for di in range(D):
        for dj in range(D):
            sy = (di - ngr) * stride2
            sx = (dj - ngr) * stride2
            acc = jnp.zeros((B, H_out, W_out), jnp.float32)
            for ky in range(kernel_size):
                for kx in range(kernel_size):
                    aa = a[:, :, md + ky: md + ky + H_out, md + kx: md + kx + W_out]
                    bb = b[:, :, md + ky + sy: md + ky + sy + H_out,
                           md + kx + sx: md + kx + sx + W_out]
                    acc = acc + jnp.sum(aa * bb, axis=1)
            outs.append(acc / float(kernel_size * kernel_size * C))
    return jnp.stack(outs, axis=1)


if __name__ == "__main__":
    key = jax.random.PRNGKey(0)
    k1, k2, k3, k4 = jax.random.split(key, 4)
    B, H, W = 2, 16, 16

    tests = [
        # (C, dtype, config, use_mxu override, tolerance)
        (4, jnp.float32,
         dict(pad_size=4, kernel_size=1, max_displacement=4, stride1=1, stride2=1,
              corr_multiply=1), None, 1e-5),
        (4, jnp.float32,
         dict(pad_size=3, kernel_size=3, max_displacement=2, stride1=1, stride2=2,
              corr_multiply=1), None, 1e-5),
        # larger C + bf16 storage -> exercises the MXU band-matmul path
        (64, jnp.bfloat16,
         dict(pad_size=4, kernel_size=1, max_displacement=4, stride1=1, stride2=1,
              corr_multiply=1), True, 2e-3),
    ]
    for C, dtype, cfg, mxu, tol in tests:
        x1 = jax.random.normal(k1, (B, C, H, W), dtype=jnp.float32).astype(dtype)
        x2 = jax.random.normal(k2, (B, C, H, W), dtype=jnp.float32).astype(dtype)
        out = jax.block_until_ready(correlation_pallas(x1, x2, use_mxu=mxu, **cfg))
        ref = correlation_ref(x1, x2, **cfg)
        np.testing.assert_allclose(np.asarray(out), np.asarray(ref), rtol=tol, atol=tol)

    # Module-style smoke test (projection guidance is a documented TODO).
    corr_proj = CorrelationProj(max_displacement=4, stride=1)
    f1 = jax.random.normal(k3, (B, 4, H, W), dtype=jnp.float32)
    f2 = jax.random.normal(k4, (B, 2, 4, H, W), dtype=jnp.float32)
    proj_out = jax.block_until_ready(corr_proj(f1, f2, None, None, None))
    assert proj_out.shape == (B, 2, 81, H, W), proj_out.shape

    print("KERNEL_OK")
</pallas_src>

<mosaic_0001>
module attributes {stable_mosaic.version = 11 : i64} {
  func.func @_corr_kernel(%arg0: i32, %arg1: i32, %arg2: memref<1x24x24x4xf32, #tpu.memory_space<vmem>>, %arg3: memref<1x24x24x4xf32, #tpu.memory_space<vmem>>, %arg4: memref<1x9x16x16xf32, #tpu.memory_space<vmem>>, %arg5: memref<9x16x16xf32, #tpu.memory_space<vmem>>) attributes {dimension_semantics = [#tpu.dimension_semantics<parallel>, #tpu.dimension_semantics<arbitrary>], iteration_bounds = array<i64: 2, 9>, scalar_prefetch = 0 : i64, scratch_operands = 1 : i64, tpu.core_type = #tpu.core_type<tc>, window_params = [{transform_indices = @transform_0, window_bounds = array<i64: 1, 24, 24, 4>}, {transform_indices = @transform_1, window_bounds = array<i64: 1, 24, 24, 4>}, {transform_indices = @transform_2, window_bounds = array<i64: 1, 9, 16, 16>}]} {
    %c1_i32 = arith.constant 1 : i32
    %0 = arith.muli %arg1, %c1_i32 : i32
    %c0_i32 = arith.constant 0 : i32
    %1 = arith.addi %c0_i32, %0 : i32
    %cst = arith.constant 0.000000e+00 : f32
    %2 = vector.broadcast %cst : f32 to vector<9x16x16xf32>
    %c0 = arith.constant 0 : index
    %c0_0 = arith.constant 0 : index
    %c0_1 = arith.constant 0 : index
    %3 = vector.load %arg5[%c0, %c0_0, %c0_1] : memref<9x16x16xf32, #tpu.memory_space<vmem>>, vector<9x16x16xf32>
    tpu.vector_store %arg5[%c0, %c0_0, %c0_1], %2 {strides = array<i32>} : memref<9x16x16xf32, #tpu.memory_space<vmem>>, vector<9x16x16xf32>,
    %c0_2 = arith.constant 0 : index
    %c4 = arith.constant 4 : index
    %c4_3 = arith.constant 4 : index
    %c0_4 = arith.constant 0 : index
    %4 = vector.load %arg2[%c0_2, %c4, %c4_3, %c0_4] : memref<1x24x24x4xf32, #tpu.memory_space<vmem>>, vector<1x16x16x4xf32>
    %5 = vector.shape_cast %4 : vector<1x16x16x4xf32> to vector<16x16x4xf32>
    %c0_i32_5 = arith.constant 0 : i32
    %6 = arith.addi %1, %c0_i32_5 : i32
    %c0_6 = arith.constant 0 : index
    %7 = arith.index_cast %6 : i32 to index
    %c0_7 = arith.constant 0 : index
    %c0_8 = arith.constant 0 : index
    %8 = vector.load %arg3[%c0_6, %7, %c0_7, %c0_8] : memref<1x24x24x4xf32, #tpu.memory_space<vmem>>, vector<1x16x16x4xf32>
    %9 = vector.shape_cast %8 : vector<1x16x16x4xf32> to vector<16x16x4xf32>
    %c0_9 = arith.constant 0 : index
    %c0_10 = arith.constant 0 : index
    %c0_11 = arith.constant 0 : index
    %10 = vector.load %arg5[%c0_9, %c0_10, %c0_11] : memref<9x16x16xf32, #tpu.memory_space<vmem>>, vector<1x16x16xf32>
    %11 = vector.shape_cast %10 : vector<1x16x16xf32> to vector<16x16xf32>
    %12 = arith.mulf %5, %9 : vector<16x16x4xf32>
    %cst_12 = arith.constant dense<0.000000e+00> : vector<16x16xf32>
    %13 = vector.multi_reduction <add>, %12, %cst_12 [2] : vector<16x16x4xf32> to vector<16x16xf32>
    %14 = arith.addf %11, %13 : vector<16x16xf32>
    %c0_13 = arith.constant 0 : index
    %c0_14 = arith.constant 0 : index
    %c0_15 = arith.constant 0 : index
    %15 = vector.load %arg5[%c0_13, %c0_14, %c0_15] : memref<9x16x16xf32, #tpu.memory_space<vmem>>, vector<1x16x16xf32>
    %16 = vector.shape_cast %15 : vector<1x16x16xf32> to vector<16x16xf32>
    %17 = vector.shape_cast %14 : vector<16x16xf32> to vector<1x16x16xf32>
    tpu.vector_store %arg5[%c0_13, %c0_14, %c0_15], %17 {strides = array<i32>} : memref<9x16x16xf32, #tpu.memory_space<vmem>>, vector<1x16x16xf32>,
    %c0_i32_16 = arith.constant 0 : i32
    %18 = arith.addi %1, %c0_i32_16 : i32
    %c0_17 = arith.constant 0 : index
    %19 = arith.index_cast %18 : i32 to index
    %c1 = arith.constant 1 : index
    %c0_18 = arith.constant 0 : index
    %20 = vector.load %arg3[%c0_17, %19, %c1, %c0_18] : memref<1x24x24x4xf32, #tpu.memory_space<vmem>>, vector<1x16x16x4xf32>
    %21 = vector.shape_cast %20 : vector<1x16x16x4xf32> to vector<16x16x4xf32>
    %c1_19 = arith.constant 1 : index
    %c0_20 = arith.constant 0 : index
    %c0_21 = arith.constant 0 : index
    %22 = vector.load %arg5[%c1_19, %c0_20, %c0_21] : memref<9x16x16xf32, #tpu.memory_space<vmem>>, vector<1x16x16xf32>
    %23 = vector.shape_cast %22 : vector<1x16x16xf32> to vector<16x16xf32>
    %24 = arith.mulf %5, %21 : vector<16x16x4xf32>
    %cst_22 = arith.constant dense<0.000000e+00> : vector<16x16xf32>
    %25 = vector.multi_reduction <add>, %24, %cst_22 [2] : vector<16x16x4xf32> to vector<16x16xf32>
    %26 = arith.addf %23, %25 : vector<16x16xf32>
    %c1_23 = arith.constant 1 : index
    %c0_24 = arith.constant 0 : index
    %c0_25 = arith.constant 0 : index
    %27 = vector.load %arg5[%c1_23, %c0_24, %c0_25] : memref<9x16x16xf32, #tpu.memory_space<vmem>>, vector<1x16x16xf32>
    %28 = vector.shape_cast %27 : vector<1x16x16xf32> to vector<16x16xf32>
    %29 = vector.shape_cast %26 : vector<16x16xf32> to vector<1x16x16xf32>
    tpu.vector_store %arg5[%c1_23, %c0_24, %c0_25], %29 {strides = array<i32>} : memref<9x16x16xf32, #tpu.memory_space<vmem>>, vector<1x16x16xf32>,
    %c0_i32_26 = arith.constant 0 : i32
    %30 = arith.addi %1, %c0_i32_26 : i32
    %c0_27 = arith.constant 0 : index
    %31 = arith.index_cast %30 : i32 to index
    %c2 = arith.constant 2 : index
    %c0_28 = arith.constant 0 : index
    %32 = vector.load %arg3[%c0_27, %31, %c2, %c0_28] : memref<1x24x24x4xf32, #tpu.memory_space<vmem>>, vector<1x16x16x4xf32>
    %33 = vector.shape_cast %32 : vector<1x16x16x4xf32> to vector<16x16x4xf32>
    %c2_29 = arith.constant 2 : index
    %c0_30 = arith.constant 0 : index
    %c0_31 = arith.constant 0 : index
    %34 = vector.load %arg5[%c2_29, %c0_30, %c0_31] : memref<9x16x16xf32, #tpu.memory_space<vmem>>, vector<1x16x16xf32>
    %35 = vector.shape_cast %34 : vector<1x16x16xf32> to vector<16x16xf32>
    %36 = arith.mulf %5, %33 : vector<16x16x4xf32>
    %cst_32 = arith.constant dense<0.000000e+00> : vector<16x16xf32>
    %37 = vector.multi_reduction <add>, %36, %cst_32 [2] : vector<16x16x4xf32> to vector<16x16xf32>
    %38 = arith.addf %35, %37 : vector<16x16xf32>
    %c2_33 = arith.constant 2 : index
    %c0_34 = arith.constant 0 : index
    %c0_35 = arith.constant 0 : index
    %39 = vector.load %arg5[%c2_33, %c0_34, %c0_35] : memref<9x16x16xf32, #tpu.memory_space<vmem>>, vector<1x16x16xf32>
    %40 = vector.shape_cast %39 : vector<1x16x16xf32> to vector<16x16xf32>
    %41 = vector.shape_cast %38 : vector<16x16xf32> to vector<1x16x16xf32>
    tpu.vector_store %arg5[%c2_33, %c0_34, %c0_35], %41 {strides = array<i32>} : memref<9x16x16xf32, #tpu.memory_space<vmem>>, vector<1x16x16xf32>,
    %c0_i32_36 = arith.constant 0 : i32
    %42 = arith.addi %1, %c0_i32_36 : i32
    %c0_37 = arith.constant 0 : index
    %43 = arith.index_cast %42 : i32 to index
    %c3 = arith.constant 3 : index
    %c0_38 = arith.constant 0 : index
    %44 = vector.load %arg3[%c0_37, %43, %c3, %c0_38] : memref<1x24x24x4xf32, #tpu.memory_space<vmem>>, vector<1x16x16x4xf32>
    %45 = vector.shape_cast %44 : vector<1x16x16x4xf32> to vector<16x16x4xf32>
    %c3_39 = arith.constant 3 : index
    %c0_40 = arith.constant 0 : index
    %c0_41 = arith.constant 0 : index
    %46 = vector.load %arg5[%c3_39, %c0_40, %c0_41] : memref<9x16x16xf32, #tpu.memory_space<vmem>>, vector<1x16x16xf32>
    %47 = vector.shape_cast %46 : vector<1x16x16xf32> to vector<16x16xf32>
    %48 = arith.mulf %5, %45 : vector<16x16x4xf32>
    %cst_42 = arith.constant dense<0.000000e+00> : vector<16x16xf32>
    %49 = vector.multi_reduction <add>, %48, %cst_42 [2] : vector<16x16x4xf32> to vector<16x16xf32>
    %50 = arith.addf %47, %49 : vector<16x16xf32>
    %c3_43 = arith.constant 3 : index
    %c0_44 = arith.constant 0 : index
    %c0_45 = arith.constant 0 : index
    %51 = vector.load %arg5[%c3_43, %c0_44, %c0_45] : memref<9x16x16xf32, #tpu.memory_space<vmem>>, vector<1x16x16xf32>
    %52 = vector.shape_cast %51 : vector<1x16x16xf32> to vector<16x16xf32>
    %53 = vector.shape_cast %50 : vector<16x16xf32> to vector<1x16x16xf32>
    tpu.vector_store %arg5[%c3_43, %c0_44, %c0_45], %53 {strides = array<i32>} : memref<9x16x16xf32, #tpu.memory_space<vmem>>, vector<1x16x16xf32>,
    %c0_i32_46 = arith.constant 0 : i32
    %54 = arith.addi %1, %c0_i32_46 : i32
    %c0_47 = arith.constant 0 : index
    %55 = arith.index_cast %54 : i32 to index
    %c4_48 = arith.constant 4 : index
    %c0_49 = arith.constant 0 : index
    %56 = vector.load %arg3[%c0_47, %55, %c4_48, %c0_49] : memref<1x24x24x4xf32, #tpu.memory_space<vmem>>, vector<1x16x16x4xf32>
    %57 = vector.shape_cast %56 : vector<1x16x16x4xf32> to vector<16x16x4xf32>
    %c4_50 = arith.constant 4 : index
    %c0_51 = arith.constant 0 : index
    %c0_52 = arith.constant 0 : index
    %58 = vector.load %arg5[%c4_50, %c0_51, %c0_52] : memref<9x16x16xf32, #tpu.memory_space<vmem>>, vector<1x16x16xf32>
    %59 = vector.shape_cast %58 : vector<1x16x16xf32> to vector<16x16xf32>
    %60 = arith.mulf %5, %57 : vector<16x16x4xf32>
    %cst_53 = arith.constant dense<0.000000e+00> : vector<16x16xf32>
    %61 = vector.multi_reduction <add>, %60, %cst_53 [2] : vector<16x16x4xf32> to vector<16x16xf32>
    %62 = arith.addf %59, %61 : vector<16x16xf32>
    %c4_54 = arith.constant 4 : index
    %c0_55 = arith.constant 0 : index
    %c0_56 = arith.constant 0 : index
    %63 = vector.load %arg5[%c4_54, %c0_55, %c0_56] : memref<9x16x16xf32, #tpu.memory_space<vmem>>, vector<1x16x16xf32>
    %64 = vector.shape_cast %63 : vector<1x16x16xf32> to vector<16x16xf32>
    %65 = vector.shape_cast %62 : vector<16x16xf32> to vector<1x16x16xf32>
    tpu.vector_store %arg5[%c4_54, %c0_55, %c0_56], %65 {strides = array<i32>} : memref<9x16x16xf32, #tpu.memory_space<vmem>>, vector<1x16x16xf32>,
    %c0_i32_57 = arith.constant 0 : i32
    %66 = arith.addi %1, %c0_i32_57 : i32
    %c0_58 = arith.constant 0 : index
    %67 = arith.index_cast %66 : i32 to index
    %c5 = arith.constant 5 : index
    %c0_59 = arith.constant 0 : index
    %68 = vector.load %arg3[%c0_58, %67, %c5, %c0_59] : memref<1x24x24x4xf32, #tpu.memory_space<vmem>>, vector<1x16x16x4xf32>
    %69 = vector.shape_cast %68 : vector<1x16x16x4xf32> to vector<16x16x4xf32>
    %c5_60 = arith.constant 5 : index
    %c0_61 = arith.constant 0 : index
    %c0_62 = arith.constant 0 : index
    %70 = vector.load %arg5[%c5_60, %c0_61, %c0_62] : memref<9x16x16xf32, #tpu.memory_space<vmem>>, vector<1x16x16xf32>
    %71 = vector.shape_cast %70 : vector<1x16x16xf32> to vector<16x16xf32>
    %72 = arith.mulf %5, %69 : vector<16x16x4xf32>
    %cst_63 = arith.constant dense<0.000000e+00> : vector<16x16xf32>
    %73 = vector.multi_reduction <add>, %72, %cst_63 [2] : vector<16x16x4xf32> to vector<16x16xf32>
    %74 = arith.addf %71, %73 : vector<16x16xf32>
    %c5_64 = arith.constant 5 : index
    %c0_65 = arith.constant 0 : index
    %c0_66 = arith.constant 0 : index
    %75 = vector.load %arg5[%c5_64, %c0_65, %c0_66] : memref<9x16x16xf32, #tpu.memory_space<vmem>>, vector<1x16x16xf32>
    %76 = vector.shape_cast %75 : vector<1x16x16xf32> to vector<16x16xf32>
    %77 = vector.shape_cast %74 : vector<16x16xf32> to vector<1x16x16xf32>
    tpu.vector_store %arg5[%c5_64, %c0_65, %c0_66], %77 {strides = array<i32>} : memref<9x16x16xf32, #tpu.memory_space<vmem>>, vector<1x16x16xf32>,
    %c0_i32_67 = arith.constant 0 : i32
    %78 = arith.addi %1, %c0_i32_67 : i32
    %c0_68 = arith.constant 0 : index
    %79 = arith.index_cast %78 : i32 to index
    %c6 = arith.constant 6 : index
    %c0_69 = arith.constant 0 : index
    %80 = vector.load %arg3[%c0_68, %79, %c6, %c0_69] : memref<1x24x24x4xf32, #tpu.memory_space<vmem>>, vector<1x16x16x4xf32>
    %81 = vector.shape_cast %80 : vector<1x16x16x4xf32> to vector<16x16x4xf32>
    %c6_70 = arith.constant 6 : index
    %c0_71 = arith.constant 0 : index
    %c0_72 = arith.constant 0 : index
    %82 = vector.load %arg5[%c6_70, %c0_71, %c0_72] : memref<9x16x16xf32, #tpu.memory_space<vmem>>, vector<1x16x16xf32>
    %83 = vector.shape_cast %82 : vector<1x16x16xf32> to vector<16x16xf32>
    %84 = arith.mulf %5, %81 : vector<16x16x4xf32>
    %cst_73 = arith.constant dense<0.000000e+00> : vector<16x16xf32>
    %85 = vector.multi_reduction <add>, %84, %cst_73 [2] : vector<16x16x4xf32> to vector<16x16xf32>
    %86 = arith.addf %83, %85 : vector<16x16xf32>
    %c6_74 = arith.constant 6 : index
    %c0_75 = arith.constant 0 : index
    %c0_76 = arith.constant 0 : index
    %87 = vector.load %arg5[%c6_74, %c0_75, %c0_76] : memref<9x16x16xf32, #tpu.memory_space<vmem>>, vector<1x16x16xf32>
    %88 = vector.shape_cast %87 : vector<1x16x16xf32> to vector<16x16xf32>
    %89 = vector.shape_cast %86 : vector<16x16xf32> to vector<1x16x16xf32>
    tpu.vector_store %arg5[%c6_74, %c0_75, %c0_76], %89 {strides = array<i32>} : memref<9x16x16xf32, #tpu.memory_space<vmem>>, vector<1x16x16xf32>,
    %c0_i32_77 = arith.constant 0 : i32
    %90 = arith.addi %1, %c0_i32_77 : i32
    %c0_78 = arith.constant 0 : index
    %91 = arith.index_cast %90 : i32 to index
    %c7 = arith.constant 7 : index
    %c0_79 = arith.constant 0 : index
    %92 = vector.load %arg3[%c0_78, %91, %c7, %c0_79] : memref<1x24x24x4xf32, #tpu.memory_space<vmem>>, vector<1x16x16x4xf32>
    %93 = vector.shape_cast %92 : vector<1x16x16x4xf32> to vector<16x16x4xf32>
    %c7_80 = arith.constant 7 : index
    %c0_81 = arith.constant 0 : index
    %c0_82 = arith.constant 0 : index
    %94 = vector.load %arg5[%c7_80, %c0_81, %c0_82] : memref<9x16x16xf32, #tpu.memory_space<vmem>>, vector<1x16x16xf32>
    %95 = vector.shape_cast %94 : vector<1x16x16xf32> to vector<16x16xf32>
    %96 = arith.mulf %5, %93 : vector<16x16x4xf32>
    %cst_83 = arith.constant dense<0.000000e+00> : vector<16x16xf32>
    %97 = vector.multi_reduction <add>, %96, %cst_83 [2] : vector<16x16x4xf32> to vector<16x16xf32>
    %98 = arith.addf %95, %97 : vector<16x16xf32>
    %c7_84 = arith.constant 7 : index
    %c0_85 = arith.constant 0 : index
    %c0_86 = arith.constant 0 : index
    %99 = vector.load %arg5[%c7_84, %c0_85, %c0_86] : memref<9x16x16xf32, #tpu.memory_space<vmem>>, vector<1x16x16xf32>
    %100 = vector.shape_cast %99 : vector<1x16x16xf32> to vector<16x16xf32>
    %101 = vector.shape_cast %98 : vector<16x16xf32> to vector<1x16x16xf32>
    tpu.vector_store %arg5[%c7_84, %c0_85, %c0_86], %101 {strides = array<i32>} : memref<9x16x16xf32, #tpu.memory_space<vmem>>, vector<1x16x16xf32>,
    %c0_i32_87 = arith.constant 0 : i32
    %102 = arith.addi %1, %c0_i32_87 : i32
    %c0_88 = arith.constant 0 : index
    %103 = arith.index_cast %102 : i32 to index
    %c8 = arith.constant 8 : index
    %c0_89 = arith.constant 0 : index
    %104 = vector.load %arg3[%c0_88, %103, %c8, %c0_89] : memref<1x24x24x4xf32, #tpu.memory_space<vmem>>, vector<1x16x16x4xf32>
    %105 = vector.shape_cast %104 : vector<1x16x16x4xf32> to vector<16x16x4xf32>
    %c8_90 = arith.constant 8 : index
    %c0_91 = arith.constant 0 : index
    %c0_92 = arith.constant 0 : index
    %106 = vector.load %arg5[%c8_90, %c0_91, %c0_92] : memref<9x16x16xf32, #tpu.memory_space<vmem>>, vector<1x16x16xf32>
    %107 = vector.shape_cast %106 : vector<1x16x16xf32> to vector<16x16xf32>
    %108 = arith.mulf %5, %105 : vector<16x16x4xf32>
    %cst_93 = arith.constant dense<0.000000e+00> : vector<16x16xf32>
    %109 = vector.multi_reduction <add>, %108, %cst_93 [2] : vector<16x16x4xf32> to vector<16x16xf32>
    %110 = arith.addf %107, %109 : vector<16x16xf32>
    %c8_94 = arith.constant 8 : index
    %c0_95 = arith.constant 0 : index
    %c0_96 = arith.constant 0 : index
    %111 = vector.load %arg5[%c8_94, %c0_95, %c0_96] : memref<9x16x16xf32, #tpu.memory_space<vmem>>, vector<1x16x16xf32>
    %112 = vector.shape_cast %111 : vector<1x16x16xf32> to vector<16x16xf32>
    %113 = vector.shape_cast %110 : vector<16x16xf32> to vector<1x16x16xf32>
    tpu.vector_store %arg5[%c8_94, %c0_95, %c0_96], %113 {strides = array<i32>} : memref<9x16x16xf32, #tpu.memory_space<vmem>>, vector<1x16x16xf32>,
    %c0_97 = arith.constant 0 : index
    %c0_98 = arith.constant 0 : index
    %c0_99 = arith.constant 0 : index
    %114 = vector.load %arg5[%c0_97, %c0_98, %c0_99] : memref<9x16x16xf32, #tpu.memory_space<vmem>>, vector<9x16x16xf32>
    %cst_100 = arith.constant 2.500000e-01 : f32
    %115 = vector.broadcast %cst_100 : f32 to vector<9x16x16xf32>
    %116 = arith.mulf %114, %115 : vector<9x16x16xf32>
    %c0_101 = arith.constant 0 : index
    %c0_102 = arith.constant 0 : index
    %c0_103 = arith.constant 0 : index
    %c0_104 = arith.constant 0 : index
    %117 = vector.load %arg4[%c0_101, %c0_102, %c0_103, %c0_104] : memref<1x9x16x16xf32, #tpu.memory_space<vmem>>, vector<1x9x16x16xf32>
    %118 = vector.shape_cast %117 : vector<1x9x16x16xf32> to vector<9x16x16xf32>
    %119 = vector.shape_cast %116 : vector<9x16x16xf32> to vector<1x9x16x16xf32>
    tpu.vector_store %arg4[%c0_101, %c0_102, %c0_103, %c0_104], %119 {strides = array<i32>} : memref<1x9x16x16xf32, #tpu.memory_space<vmem>>, vector<1x9x16x16xf32>,
    return
  }
  func.func @transform_0(%arg0: i32, %arg1: i32) -> (i32, i32, i32, i32) {
    %c0_i32 = arith.constant 0 : i32
    %c0_i32_0 = arith.constant 0 : i32
    %c0_i32_1 = arith.constant 0 : i32
    %c0_i32_2 = arith.constant 0 : i32
    return %arg0, %c0_i32, %c0_i32_0, %c0_i32_1 : i32, i32, i32, i32
  }
  func.func @transform_1(%arg0: i32, %arg1: i32) -> (i32, i32, i32, i32) {
    %c0_i32 = arith.constant 0 : i32
    %c0_i32_0 = arith.constant 0 : i32
    %c0_i32_1 = arith.constant 0 : i32
    %c0_i32_2 = arith.constant 0 : i32
    return %arg0, %c0_i32, %c0_i32_0, %c0_i32_1 : i32, i32, i32, i32
  }
  func.func @transform_2(%arg0: i32, %arg1: i32) -> (i32, i32, i32, i32) {
    %c0_i32 = arith.constant 0 : i32
    %c0_i32_0 = arith.constant 0 : i32
    %c0_i32_1 = arith.constant 0 : i32
    return %arg0, %arg1, %c0_i32, %c0_i32_0 : i32, i32, i32, i32
  }
}

</mosaic_0001>

<llo_original>
// kernel: tpu_custom_call.1
$region0: #{tpu_custom_call.1}
  #allocation0 [shape = 'u32[]', space=smem, size = 0x4, offset = 0x4, fixed_abs, tag = 'smem constant byte address 0x4 - core index']
  #allocation1 [shape = 'u32[144,128]{1,0:T(1,128)}', space=vmem, size = 0x12000, scoped, tag = 'internal scratch']
  #allocation2 [shape = 'f32[9,16,16]{2,1,0:T(8,128)}', space=vmem, size = 0x12000, scoped, tag = 'scratch operand']
  %s0 = inlined_call_operand.vmem [shape: f32[2,24,24,4], index: 0, kind: input, shape index: {}]
  %s1 = inlined_call_operand.vmem [shape: f32[2,24,24,4], index: 1, kind: input, shape index: {}]
  %s2 = inlined_call_operand.vmem [shape: f32[2,81,16,16], index: 2, kind: output, shape index: {}]
  %s3 = sld [smem:[#allocation0]]
  $region41: #{tpu_custom_call.1} parent=0
    _
  %s5 = ssub.s32 1, %s3
  %s6 = scalar_select 0, %s5, %s3
  loop: start=0, step=1, limit=20
  $region2: #{tpu_custom_call.1} parent=0 // loop_pre_header
    _
  $region3: #{tpu_custom_call.1} parent=0 // loop_header
    %s8 = sphi 0, %s12
    %p9 = scmp.ge.s32.totalorder %s8, 20
    %s15 = sphi 0, %s27
    %s16 = sphi 0, %s23
    %s17 = sphi 0, %s15
    %s18 = sphi 0, %s16
    %s19 = sphi 0, %s17
    %s20 = sphi 0, %s18
    %s30 = sphi 0, %s32
    %s33 = sphi 0, %s30
    %s34 = sphi 0, %s33
    %s50 = sphi 0, %s34
    %s56 = sphi 0, %s58
    %s59 = sphi 0, %s56
    %s60 = sphi 0, %s59
    %s76 = sphi 0, %s60
    %s84 = sphi 0, %s86
    %s87 = sphi 0, %s84
    %s88 = sphi 0, %s87
    %s104 = sphi 0, %s88
  $region4: #{tpu_custom_call.1} parent=0 // loop_header_branch
    %11 = sbr.rel (%p9) target = $region8
  $region5: #{tpu_custom_call.1} parent=0 // loop_body
    %s13 = ssub.s32 %s8, 1
    %s14 = ssub.s32 %s8, 2
    %s21 = sadd.s32 1, %s16
    %p22 = scmp.ge.s32.totalorder %s21, 9
    %s23 = scalar_select %p22, 0, %s21
    %s24 = sadd.s32 1, %s15
    %s25 = scalar_select %p22, %s24, %s15
    %p26 = scmp.ge.s32.totalorder %s25, 2
    %s27 = scalar_select %p26, 0, %s25
    %s28 = ssub.s32 %s15, %s27
    %p29 = scmp.eq.s32.totalorder %s28, 0
    %s31 = sadd.s32 %s30, 1
    %s32 = scalar_select %p29, %s30, %s31
    %p35 = pneg %p29
    %p36 = scmp.eq.s32.totalorder %s8, 17
    %p37 = por %p35, %p36
    %p38 = scmp.ne.s32.totalorder %s30, %s33
    %p39 = scmp.eq.s32.totalorder %s8, 0
    %p40 = por %p38, %p39
    %p41 = scmp.ne.s32.totalorder %s30, %s33
    %p42 = scmp.eq.s32.totalorder %s13, 17
    %p43 = por %p41, %p42
    %p44 = scmp.ne.s32.totalorder %s33, %s34
    %p45 = scmp.eq.s32.totalorder %s13, 0
    %p46 = por %p44, %p45
    %p47 = scmp.ne.s32.totalorder %s33, %s34
    %p48 = scmp.eq.s32.totalorder %s14, 17
    %p49 = por %p47, %p48
    %p51 = scmp.ne.s32.totalorder %s34, %s50
    %p52 = scmp.eq.s32.totalorder %s14, 0
    %p53 = por %p51, %p52
    %s54 = ssub.s32 %s15, %s27
    %p55 = scmp.eq.s32.totalorder %s54, 0
    %s57 = sadd.s32 %s56, 1
    %s58 = scalar_select %p55, %s56, %s57
    %p61 = pneg %p55
    %p62 = scmp.eq.s32.totalorder %s8, 17
    %p63 = por %p61, %p62
    %p64 = scmp.ne.s32.totalorder %s56, %s59
    %p65 = scmp.eq.s32.totalorder %s8, 0
    %p66 = por %p64, %p65
    %p67 = scmp.ne.s32.totalorder %s56, %s59
    %p68 = scmp.eq.s32.totalorder %s13, 17
    %p69 = por %p67, %p68
    %p70 = scmp.ne.s32.totalorder %s59, %s60
    %p71 = scmp.eq.s32.totalorder %s13, 0
    %p72 = por %p70, %p71
    %p73 = scmp.ne.s32.totalorder %s59, %s60
    %p74 = scmp.eq.s32.totalorder %s14, 17
    %p75 = por %p73, %p74
    %p77 = scmp.ne.s32.totalorder %s60, %s76
    %p78 = scmp.eq.s32.totalorder %s14, 0
    %p79 = por %p77, %p78
    %s80 = ssub.s32 %s15, %s27
    %s81 = ssub.s32 %s16, %s23
    %s82 = sor.u32 %s80, %s81
    %p83 = scmp.eq.s32.totalorder %s82, 0
    %s85 = sadd.s32 %s84, 1
    %s86 = scalar_select %p83, %s84, %s85
    %p89 = pneg %p83
    %p90 = scmp.eq.s32.totalorder %s8, 17
    %p91 = por %p89, %p90
    %p92 = scmp.ne.s32.totalorder %s84, %s87
    %p93 = scmp.eq.s32.totalorder %s8, 0
    %p94 = por %p92, %p93
    %p95 = scmp.ne.s32.totalorder %s84, %s87
    %p96 = scmp.eq.s32.totalorder %s13, 17
    %p97 = por %p95, %p96
    %p98 = scmp.ne.s32.totalorder %s87, %s88
    %p99 = scmp.eq.s32.totalorder %s13, 0
    %p100 = por %p98, %p99
    %p101 = scmp.ne.s32.totalorder %s87, %s88
    %p102 = scmp.eq.s32.totalorder %s14, 17
    %p103 = por %p101, %p102
    %p105 = scmp.ne.s32.totalorder %s88, %s104
    %p106 = scmp.eq.s32.totalorder %s14, 0
    %p107 = por %p105, %p106
    %p108 = scmp.le.s32.totalorder 1, %s8
    %p109 = scmp.lt.s32.totalorder %s8, 19
    %p110 = pnand %p108, %p109
    %p111 = pneg %p110
    // Predicated region
    $region9: #{tpu_custom_call.1} parent=5 // pred_check
      _
    $region10: #{tpu_custom_call.1} parent=5 // pred_check_branch
      %113 = sbr.rel (%p110) target = $region12
    $region11: #{tpu_custom_call.1} parent=5 // pred_region
      %s114 = ssub.s32 %s8, 1
    $region12: #{tpu_custom_call.1} parent=5 // pred_fallthru
      _
    %p115 = scmp.lt.s32.totalorder %s8, 18
    // Predicated region
    $region13: #{tpu_custom_call.1} parent=5 // pred_check
      %p116 = pneg %p115
    $region14: #{tpu_custom_call.1} parent=5 // pred_check_branch
      %118 = sbr.rel (%p116) target = $region16
    $region15: #{tpu_custom_call.1} parent=5 // pred_region
      // Predicated region
      $region17: #{tpu_custom_call.1} parent=15 // pred_check
        %p119 = pneg %p40
      $region18: #{tpu_custom_call.1} parent=15 // pred_check_branch
        %121 = sbr.rel (%p119) target = $region20
      $region19: #{tpu_custom_call.1} parent=15 // pred_region
        %p122 = scmp.lt.s32.totalorder %s15, 1
        %s123 = scalar_select %p122, %s15, 1
        %s124 = smul.addr %s123, 72
        %s125 = smul.addr %s124, 8
        %s126 = scalar_lea.vmem %s0, %s125
      $region20: #{tpu_custom_call.1} parent=15 // pred_fallthru
        _
      // Predicated region
      $region21: #{tpu_custom_call.1} parent=15 // pred_check
        %p127 = pneg %p66
      $region22: #{tpu_custom_call.1} parent=15 // pred_check_branch
        %129 = sbr.rel (%p127) target = $region24
      $region23: #{tpu_custom_call.1} parent=15 // pred_region
        %p130 = scmp.lt.s32.totalorder %s15, 1
        %s131 = scalar_select %p130, %s15, 1
        %s132 = smul.addr %s131, 72
        %s133 = smul.addr %s132, 8
        %s134 = scalar_lea.vmem %s1, %s133
      $region24: #{tpu_custom_call.1} parent=15 // pred_fallthru
        _
    $region16: #{tpu_custom_call.1} parent=5 // pred_fallthru
      _
    %p135 = scmp.le.s32.totalorder 1, %s8
    %p136 = scmp.lt.s32.totalorder %s8, 19
    %p137 = pnand %p135, %p136
    %p138 = pneg %p137
    // Predicated region
    $region25: #{tpu_custom_call.1} parent=5 // pred_check
      _
    $region26: #{tpu_custom_call.1} parent=5 // pred_check_branch
      %140 = sbr.rel (%p137) target = $region28
    $region27: #{tpu_custom_call.1} parent=5 // pred_region
      %s141 = ssub.s32 %s8, 1
      %p142 = scmp.lt.s32.totalorder %s17, 1
      %s143 = scalar_select %p142, %s17, 1
      %s144 = smul.addr %s143, 72
      %s145 = smul.addr %s144, 8
      %s146 = scalar_lea.vmem %s0, %s145
      %p147 = pneg %p46
      %p148 = pneg %p43
      %p149 = scmp.lt.s32.totalorder %s17, 1
      %s150 = scalar_select %p149, %s17, 1
      %s151 = smul.addr %s150, 72
      %s152 = smul.addr %s151, 8
      %s153 = scalar_lea.vmem %s1, %s152
      %p154 = pneg %p72
      %p155 = pneg %p69
      %p156 = pneg %p100
      %p157 = pneg %p97
      %s158 = smul.u32 9, %s18
      %p159 = scmp.lt.s32.totalorder %s17, 1
      %s160 = scalar_select %p159, %s17, 1
      %p161 = scmp.lt.s32.totalorder %s158, 80
      %s162 = scalar_select %p161, %s158, 80
      %s163 = smul.addr %s162, 2
      %s164 = smul.addr %s160, 162
      %s165 = sadd.s32 %s163, %s164
      %s166 = smul.addr %s165, 8
      %s167 = scalar_lea.vmem %s2, %s166
      %p168 = scmp.lt.s32.totalorder %s17, 1
      %s169 = scalar_select %p168, %s17, 1
      %s170 = smul.addr %s169, 72
      %s171 = smul.addr %s170, 8
      %s172 = scalar_lea.vmem %s0, %s171
      %p173 = scmp.lt.s32.totalorder %s17, 1
      %s174 = scalar_select %p173, %s17, 1
      %s175 = smul.addr %s174, 72
      %s176 = smul.addr %s175, 8
      %s177 = scalar_lea.vmem %s1, %s176
      %s178 = smul.u32 9, %s18
      %p179 = scmp.lt.s32.totalorder %s17, 1
      %s180 = scalar_select %p179, %s17, 1
      %p181 = scmp.lt.s32.totalorder %s178, 80
      %s182 = scalar_select %p181, %s178, 80
      %s183 = smul.addr %s182, 2
      %s184 = smul.addr %s180, 162
      %s185 = sadd.s32 %s183, %s184
      %s186 = smul.addr %s185, 8
      %s187 = scalar_lea.vmem %s2, %s186
      %s188 = smul.u32 9, %s18
      %vm189 = vcmask 130048
      %190 = vst.msk [vmem:[#allocation2] sm:$0xff] %vm189, 0.0
      %191 = vst.msk [vmem:[#allocation2 + $0x8] sm:$0xff] %vm189, 0.0
      %192 = vst.msk [vmem:[#allocation2 + $0x10] sm:$0xff] %vm189, 0.0
      %193 = vst.msk [vmem:[#allocation2 + $0x18] sm:$0xff] %vm189, 0.0
      %194 = vst.msk [vmem:[#allocation2 + $0x20] sm:$0xff] %vm189, 0.0
      %195 = vst.msk [vmem:[#allocation2 + $0x28] sm:$0xff] %vm189, 0.0
      %196 = vst.msk [vmem:[#allocation2 + $0x30] sm:$0xff] %vm189, 0.0
      %197 = vst.msk [vmem:[#allocation2 + $0x38] sm:$0xff] %vm189, 0.0
      %198 = vst.msk [vmem:[#allocation2 + $0x40] sm:$0xff] %vm189, 0.0
      %199 = vst.msk [vmem:[#allocation2 + $0x48] sm:$0xff] %vm189, 0.0
      %200 = vst.msk [vmem:[#allocation2 + $0x50] sm:$0xff] %vm189, 0.0
      %201 = vst.msk [vmem:[#allocation2 + $0x58] sm:$0xff] %vm189, 0.0
      %202 = vst.msk [vmem:[#allocation2 + $0x60] sm:$0xff] %vm189, 0.0
      %203 = vst.msk [vmem:[#allocation2 + $0x68] sm:$0xff] %vm189, 0.0
      %204 = vst.msk [vmem:[#allocation2 + $0x70] sm:$0xff] %vm189, 0.0
      %205 = vst.msk [vmem:[#allocation2 + $0x78] sm:$0xff] %vm189, 0.0
      %206 = vst.msk [vmem:[#allocation2 + $0x80] sm:$0xff] %vm189, 0.0
      %207 = vst.msk [vmem:[#allocation2 + $0x88] sm:$0xff] %vm189, 0.0
      %s208 = scalar_lea.vmem %s172, 96
      %v209 = vld [vmem:[%s208 + $0x4] sm:$0xff]
      %v210 = vld [vmem:[%s208 + $0xc] sm:$0xff]
      %v211 = vld [vmem:[%s208 + $0x1c] sm:$0xff]
      %v212 = vld [vmem:[%s208 + $0x24] sm:$0xff]
      %v213 = vld [vmem:[%s208 + $0x34] sm:$0xff]
      %v214 = vld [vmem:[%s208 + $0x3c] sm:$0xff]
      %v215 = vld [vmem:[%s208 + $0x4c] sm:$0xff]
      %v216 = vld [vmem:[%s208 + $0x54] sm:$0xff]
      %v217 = vld [vmem:[%s208 + $0x64] sm:$0xff]
      %v218 = vld [vmem:[%s208 + $0x6c] sm:$0xff]
      %v219 = vld [vmem:[%s208 + $0x7c] sm:$0xff]
      %v220 = vld [vmem:[%s208 + $0x84] sm:$0xff]
      %v221 = vld [vmem:[%s208 + $0x94] sm:$0xff]
      %v222 = vld [vmem:[%s208 + $0x9c] sm:$0xff]
      %v223 = vld [vmem:[%s208 + $0xac] sm:$0xff]
      %v224 = vld [vmem:[%s208 + $0xb4] sm:$0xff]
      %v225 = vld [vmem:[%s208 + $0xc4] sm:$0xff]
      %v226 = vld [vmem:[%s208 + $0xcc] sm:$0xff]
      %v227 = vld [vmem:[%s208 + $0xdc] sm:$0xff]
      %v228 = vld [vmem:[%s208 + $0xe4] sm:$0xff]
      %v229 = vld [vmem:[%s208 + $0xf4] sm:$0xff]
      %v230 = vld [vmem:[%s208 + $0xfc] sm:$0xff]
      %v231 = vld [vmem:[%s208 + $0x10c] sm:$0xff]
      %v232 = vld [vmem:[%s208 + $0x114] sm:$0xff]
      %v233 = vld [vmem:[%s208 + $0x124] sm:$0xff]
      %v234 = vld [vmem:[%s208 + $0x12c] sm:$0xff]
      %v235 = vld [vmem:[%s208 + $0x13c] sm:$0xff]
      %v236 = vld [vmem:[%s208 + $0x144] sm:$0xff]
      %v237 = vld [vmem:[%s208 + $0x154] sm:$0xff]
      %v238 = vld [vmem:[%s208 + $0x15c] sm:$0xff]
      %v239 = vld [vmem:[%s208 + $0x16c] sm:$0xff]
      %v240 = vld [vmem:[%s208 + $0x174] sm:$0xff]
      %s241 = smul.u32 %s18, 24
      %s242 = scalar_lea.vmem %s177, %s241
      %v243 = vld [vmem:[%s242] sm:$0xff]
      %v244 = vld [vmem:[%s242 + $0x8] sm:$0xff]
      %v245 = vld [vmem:[%s242 + $0x18] sm:$0xff]
      %v246 = vld [vmem:[%s242 + $0x20] sm:$0xff]
      %v247 = vld [vmem:[%s242 + $0x30] sm:$0xff]
      %v248 = vld [vmem:[%s242 + $0x38] sm:$0xff]
      %v249 = vld [vmem:[%s242 + $0x48] sm:$0xff]
      %v250 = vld [vmem:[%s242 + $0x50] sm:$0xff]
      %v251 = vld [vmem:[%s242 + $0x60] sm:$0xff]
      %v252 = vld [vmem:[%s242 + $0x68] sm:$0xff]
      %v253 = vld [vmem:[%s242 + $0x78] sm:$0xff]
      %v254 = vld [vmem:[%s242 + $0x80] sm:$0xff]
      %v255 = vld [vmem:[%s242 + $0x90] sm:$0xff]
      %v256 = vld [vmem:[%s242 + $0x98] sm:$0xff]
      %v257 = vld [vmem:[%s242 + $0xa8] sm:$0xff]
      %v258 = vld [vmem:[%s242 + $0xb0] sm:$0xff]
      %v259 = vld [vmem:[%s242 + $0xc0] sm:$0xff]
      %v260 = vld [vmem:[%s242 + $0xc8] sm:$0xff]
      %v261 = vld [vmem:[%s242 + $0xd8] sm:$0xff]
      %v262 = vld [vmem:[%s242 + $0xe0] sm:$0xff]
      %v263 = vld [vmem:[%s242 + $0xf0] sm:$0xff]
      %v264 = vld [vmem:[%s242 + $0xf8] sm:$0xff]
      %v265 = vld [vmem:[%s242 + $0x108] sm:$0xff]
      %v266 = vld [vmem:[%s242 + $0x110] sm:$0xff]
      %v267 = vld [vmem:[%s242 + $0x120] sm:$0xff]
      %v268 = vld [vmem:[%s242 + $0x128] sm:$0xff]
      %v269 = vld [vmem:[%s242 + $0x138] sm:$0xff]
      %v270 = vld [vmem:[%s242 + $0x140] sm:$0xff]
      %v271 = vld [vmem:[%s242 + $0x150] sm:$0xff]
      %v272 = vld [vmem:[%s242 + $0x158] sm:$0xff]
      %v273 = vld [vmem:[%s242 + $0x168] sm:$0xff]
      %v274 = vld [vmem:[%s242 + $0x170] sm:$0xff]
      %v275 = vld [vmem:[#allocation2] sm:$0xff]
      %v276 = vld [vmem:[#allocation2 + $0x8] sm:$0xff]
      %v277 = vmul.f32 %v209, %v243
      %v278 = vmul.f32 %v210, %v244
      %v279 = vmul.f32 %v211, %v245
      %v280 = vmul.f32 %v212, %v246
      %v281 = vmul.f32 %v213, %v247
      %v282 = vmul.f32 %v214, %v248
      %v283 = vmul.f32 %v215, %v249
      %v284 = vmul.f32 %v216, %v250
      %v285 = vmul.f32 %v217, %v251
      %v286 = vmul.f32 %v218, %v252
      %v287 = vmul.f32 %v219, %v253
      %v288 = vmul.f32 %v220, %v254
      %v289 = vmul.f32 %v221, %v255
      %v290 = vmul.f32 %v222, %v256
      %v291 = vmul.f32 %v223, %v257
      %v292 = vmul.f32 %v224, %v258
      %v293 = vmul.f32 %v225, %v259
      %v294 = vmul.f32 %v226, %v260
      %v295 = vmul.f32 %v227, %v261
      %v296 = vmul.f32 %v228, %v262
      %v297 = vmul.f32 %v229, %v263
      %v298 = vmul.f32 %v230, %v264
      %v299 = vmul.f32 %v231, %v265
      %v300 = vmul.f32 %v232, %v266
      %v301 = vmul.f32 %v233, %v267
      %v302 = vmul.f32 %v234, %v268
      %v303 = vmul.f32 %v235, %v269
      %v304 = vmul.f32 %v236, %v270
      %v305 = vmul.f32 %v237, %v271
      %v306 = vmul.f32 %v238, %v272
      %v307 = vmul.f32 %v239, %v273
      %v308 = vmul.f32 %v240, %v274
      %vm309 = vcmask 31744
      %v310 = vsel %vm309, %v277, 0.0
      %311 = vadd.xlane.f32.xlu0 %v310
      %v312 = vpop.xlane.xlu0 %311
      %v313 = vsel %vm309, %v278, 0.0
      %314 = vadd.xlane.f32.xlu0 %v313
      %v315 = vpop.xlane.xlu0 %314
      %v316 = vsel %vm309, %v279, 0.0
      %317 = vadd.xlane.f32.xlu0 %v316
      %v318 = vpop.xlane.xlu0 %317
      %v319 = vsel %vm309, %v280, 0.0
      %320 = vadd.xlane.f32.xlu0 %v319
      %v321 = vpop.xlane.xlu0 %320
      %v322 = vsel %vm309, %v281, 0.0
      %323 = vadd.xlane.f32.xlu0 %v322
      %v324 = vpop.xlane.xlu0 %323
      %v325 = vsel %vm309, %v282, 0.0
      %326 = vadd.xlane.f32.xlu0 %v325
      %v327 = vpop.xlane.xlu0 %326
      %v328 = vsel %vm309, %v283, 0.0
      %329 = vadd.xlane.f32.xlu0 %v328
      %v330 = vpop.xlane.xlu0 %329
      %v331 = vsel %vm309, %v284, 0.0
      %332 = vadd.xlane.f32.xlu0 %v331
      %v333 = vpop.xlane.xlu0 %332
      %v334 = vsel %vm309, %v285, 0.0
      %335 = vadd.xlane.f32.xlu0 %v334
      %v336 = vpop.xlane.xlu0 %335
      %v337 = vsel %vm309, %v286, 0.0
      %338 = vadd.xlane.f32.xlu0 %v337
      %v339 = vpop.xlane.xlu0 %338
      %v340 = vsel %vm309, %v287, 0.0
      %341 = vadd.xlane.f32.xlu0 %v340
      %v342 = vpop.xlane.xlu0 %341
      %v343 = vsel %vm309, %v288, 0.0
      %344 = vadd.xlane.f32.xlu0 %v343
      %v345 = vpop.xlane.xlu0 %344
      %v346 = vsel %vm309, %v289, 0.0
      %347 = vadd.xlane.f32.xlu0 %v346
      %v348 = vpop.xlane.xlu0 %347
      %v349 = vsel %vm309, %v290, 0.0
      %350 = vadd.xlane.f32.xlu0 %v349
      %v351 = vpop.xlane.xlu0 %350
      %v352 = vsel %vm309, %v291, 0.0
      %353 = vadd.xlane.f32.xlu0 %v352
      %v354 = vpop.xlane.xlu0 %353
      %v355 = vsel %vm309, %v292, 0.0
      %356 = vadd.xlane.f32.xlu0 %v355
      %v357 = vpop.xlane.xlu0 %356
      %v358 = vsel %vm309, %v293, 0.0
      %359 = vadd.xlane.f32.xlu0 %v358
      %v360 = vpop.xlane.xlu0 %359
      %v361 = vsel %vm309, %v294, 0.0
      %362 = vadd.xlane.f32.xlu0 %v361
      %v363 = vpop.xlane.xlu0 %362
      %v364 = vsel %vm309, %v295, 0.0
      %365 = vadd.xlane.f32.xlu0 %v364
      %v366 = vpop.xlane.xlu0 %365
      %v367 = vsel %vm309, %v296, 0.0
      %368 = vadd.xlane.f32.xlu0 %v367
      %v369 = vpop.xlane.xlu0 %368
      %v370 = vsel %vm309, %v297, 0.0
      %371 = vadd.xlane.f32.xlu0 %v370
      %v372 = vpop.xlane.xlu0 %371
      %v373 = vsel %vm309, %v298, 0.0
      %374 = vadd.xlane.f32.xlu0 %v373
      %v375 = vpop.xlane.xlu0 %374
      %v376 = vsel %vm309, %v299, 0.0
      %377 = vadd.xlane.f32.xlu0 %v376
      %v378 = vpop.xlane.xlu0 %377
      %v379 = vsel %vm309, %v300, 0.0
      %380 = vadd.xlane.f32.xlu0 %v379
      %v381 = vpop.xlane.xlu0 %380
      %v382 = vsel %vm309, %v301, 0.0
      %383 = vadd.xlane.f32.xlu0 %v382
      %v384 = vpop.xlane.xlu0 %383
      %v385 = vsel %vm309, %v302, 0.0
      %386 = vadd.xlane.f32.xlu0 %v385
      %v387 = vpop.xlane.xlu0 %386
      %v388 = vsel %vm309, %v303, 0.0
      %389 = vadd.xlane.f32.xlu0 %v388
      %v390 = vpop.xlane.xlu0 %389
      %v391 = vsel %vm309, %v304, 0.0
      %392 = vadd.xlane.f32.xlu0 %v391
      %v393 = vpop.xlane.xlu0 %392
      %v394 = vsel %vm309, %v305, 0.0
      %395 = vadd.xlane.f32.xlu0 %v394
      %v396 = vpop.xlane.xlu0 %395
      %v397 = vsel %vm309, %v306, 0.0
      %398 = vadd.xlane.f32.xlu0 %v397
      %v399 = vpop.xlane.xlu0 %398
      %v400 = vsel %vm309, %v307, 0.0
      %401 = vadd.xlane.f32.xlu0 %v400
      %v402 = vpop.xlane.xlu0 %401
      %v403 = vsel %vm309, %v308, 0.0
      %404 = vadd.xlane.f32.xlu0 %v403
      %v405 = vpop.xlane.xlu0 %404
      %v438 = vlaneseq
      %v439 = vand.u32 %v438, 127
      %v440 = vlaneseq
      %v441 = vshrl.u32 %v440, 7
      %v442 = vsub.s32 %v439, %v441
      %v443 = vrot.slane %v312, %v442
      %v444 = vadd.s32 %v439, 4294967288
      %v445 = vlaneseq
      %v446 = vshrl.u32 %v445, 7
      %v447 = vsub.s32 %v444, %v446
      %v448 = vrot.slane %v315, %v447
      %vm449 = vcmask 130112
      %v450 = vsel %vm449, %v448, %v443
      %v451 = vlaneseq
      %v452 = vshrl.u32 %v451, 7
      %v453 = vsub.s32 %v439, %v452
      %v454 = vrot.slane %v318, %v453
      %v455 = vlaneseq
      %v456 = vshrl.u32 %v455, 7
      %v457 = vsub.s32 %v444, %v456
      %v458 = vrot.slane %v321, %v457
      %v459 = vsel %vm449, %v458, %v454
      %v460 = vlaneseq
      %v461 = vshrl.u32 %v460, 7
      %v462 = vsub.s32 %v439, %v461
      %v463 = vrot.slane %v324, %v462
      %v464 = vlaneseq
      %v465 = vshrl.u32 %v464, 7
      %v466 = vsub.s32 %v444, %v465
      %v467 = vrot.slane %v327, %v466
      %v468 = vsel %vm449, %v467, %v463
      %v469 = vlaneseq
      %v470 = vshrl.u32 %v469, 7
      %v471 = vsub.s32 %v439, %v470
      %v472 = vrot.slane %v330, %v471
      %v473 = vlaneseq
      %v474 = vshrl.u32 %v473, 7
      %v475 = vsub.s32 %v444, %v474
      %v476 = vrot.slane %v333, %v475
      %v477 = vsel %vm449, %v476, %v472
      %v478 = vlaneseq
      %v479 = vshrl.u32 %v478, 7
      %v480 = vsub.s32 %v439, %v479
      %v481 = vrot.slane %v336, %v480
      %v482 = vlaneseq
      %v483 = vshrl.u32 %v482, 7
      %v484 = vsub.s32 %v444, %v483
      %v485 = vrot.slane %v339, %v484
      %v486 = vsel %vm449, %v485, %v481
      %v487 = vlaneseq
      %v488 = vshrl.u32 %v487, 7
      %v489 = vsub.s32 %v439, %v488
      %v490 = vrot.slane %v342, %v489
      %v491 = vlaneseq
      %v492 = vshrl.u32 %v491, 7
      %v493 = vsub.s32 %v444, %v492
      %v494 = vrot.slane %v345, %v493
      %v495 = vsel %vm449, %v494, %v490
      %v496 = vlaneseq
      %v497 = vshrl.u32 %v496, 7
      %v498 = vsub.s32 %v439, %v497
      %v499 = vrot.slane %v348, %v498
      %v500 = vlaneseq
      %v501 = vshrl.u32 %v500, 7
      %v502 = vsub.s32 %v444, %v501
      %v503 = vrot.slane %v351, %v502
      %v504 = vsel %vm449, %v503, %v499
      %v505 = vlaneseq
      %v506 = vshrl.u32 %v505, 7
      %v507 = vsub.s32 %v439, %v506
      %v508 = vrot.slane %v354, %v507
      %v509 = vlaneseq
      %v510 = vshrl.u32 %v509, 7
      %v511 = vsub.s32 %v444, %v510
      %v512 = vrot.slane %v357, %v511
      %v513 = vsel %vm449, %v512, %v508
      %v514 = vlaneseq
      %v515 = vshrl.u32 %v514, 7
      %v516 = vsub.s32 %v439, %v515
      %v517 = vrot.slane %v360, %v516
      %v518 = vlaneseq
      %v519 = vshrl.u32 %v518, 7
      %v520 = vsub.s32 %v444, %v519
      %v521 = vrot.slane %v363, %v520
      %v522 = vsel %vm449, %v521, %v517
      %v523 = vlaneseq
      %v524 = vshrl.u32 %v523, 7
      %v525 = vsub.s32 %v439, %v524
      %v526 = vrot.slane %v366, %v525
      %v527 = vlaneseq
      %v528 = vshrl.u32 %v527, 7
      %v529 = vsub.s32 %v444, %v528
      %v530 = vrot.slane %v369, %v529
      %v531 = vsel %vm449, %v530, %v526
      %v532 = vlaneseq
      %v533 = vshrl.u32 %v532, 7
      %v534 = vsub.s32 %v439, %v533
      %v535 = vrot.slane %v372, %v534
      %v536 = vlaneseq
      %v537 = vshrl.u32 %v536, 7
      %v538 = vsub.s32 %v444, %v537
      %v539 = vrot.slane %v375, %v538
      %v540 = vsel %vm449, %v539, %v535
      %v541 = vlaneseq
      %v542 = vshrl.u32 %v541, 7
      %v543 = vsub.s32 %v439, %v542
      %v544 = vrot.slane %v378, %v543
      %v545 = vlaneseq
      %v546 = vshrl.u32 %v545, 7
      %v547 = vsub.s32 %v444, %v546
      %v548 = vrot.slane %v381, %v547
      %v549 = vsel %vm449, %v548, %v544
      %v550 = vlaneseq
      %v551 = vshrl.u32 %v550, 7
      %v552 = vsub.s32 %v439, %v551
      %v553 = vrot.slane %v384, %v552
      %v554 = vlaneseq
      %v555 = vshrl.u32 %v554, 7
      %v556 = vsub.s32 %v444, %v555
      %v557 = vrot.slane %v387, %v556
      %v558 = vsel %vm449, %v557, %v553
      %v559 = vlaneseq
      %v560 = vshrl.u32 %v559, 7
      %v561 = vsub.s32 %v439, %v560
      %v562 = vrot.slane %v390, %v561
      %v563 = vlaneseq
      %v564 = vshrl.u32 %v563, 7
      %v565 = vsub.s32 %v444, %v564
      %v566 = vrot.slane %v393, %v565
      %v567 = vsel %vm449, %v566, %v562
      %v568 = vlaneseq
      %v569 = vshrl.u32 %v568, 7
      %v570 = vsub.s32 %v439, %v569
      %v571 = vrot.slane %v396, %v570
      %v572 = vlaneseq
      %v573 = vshrl.u32 %v572, 7
      %v574 = vsub.s32 %v444, %v573
      %v575 = vrot.slane %v399, %v574
      %v576 = vsel %vm449, %v575, %v571
      %v577 = vlaneseq
      %v578 = vshrl.u32 %v577, 7
      %v579 = vsub.s32 %v439, %v578
      %v580 = vrot.slane %v402, %v579
      %v581 = vlaneseq
      %v582 = vshrl.u32 %v581, 7
      %v583 = vsub.s32 %v444, %v582
      %v584 = vrot.slane %v405, %v583
      %v585 = vsel %vm449, %v584, %v580
      %vm586 = vcmask 1041409
      %v587 = vsel %vm586, %v459, %v450
      %vm588 = vcmask 1042434
      %v589 = vsel %vm588, %v468, %v587
      %vm590 = vcmask 1043459
      %v591 = vsel %vm590, %v477, %v589
      %vm592 = vcmask 1044484
      %v593 = vsel %vm592, %v486, %v591
      %vm594 = vcmask 1045509
      %v595 = vsel %vm594, %v495, %v593
      %vm596 = vcmask 1046534
      %v597 = vsel %vm596, %v504, %v595
      %vm598 = vcmask 1047559
      %v599 = vsel %vm598, %v513, %v597
      %v600 = vsel %vm586, %v531, %v522
      %v601 = vsel %vm588, %v540, %v600
      %v602 = vsel %vm590, %v549, %v601
      %v603 = vsel %vm592, %v558, %v602
      %v604 = vsel %vm594, %v567, %v603
      %v605 = vsel %vm596, %v576, %v604
      %v606 = vsel %vm598, %v585, %v605
      %v609 = vadd.f32 %v275, %v599
      %v610 = vadd.f32 %v276, %v606
      %611 = vst.msk [vmem:[#allocation2] sm:$0xff] %vm189, %v609
      %612 = vst.msk [vmem:[#allocation2 + $0x8] sm:$0xff] %vm189, %v610
      %v613 = vld [vmem:[%s242 + $0x1] sm:$0xff]
      %v614 = vld [vmem:[%s242 + $0x9] sm:$0xff]
      %v615 = vld [vmem:[%s242 + $0x19] sm:$0xff]
      %v616 = vld [vmem:[%s242 + $0x21] sm:$0xff]
      %v617 = vld [vmem:[%s242 + $0x31] sm:$0xff]
      %v618 = vld [vmem:[%s242 + $0x39] sm:$0xff]
      %v619 = vld [vmem:[%s242 + $0x49] sm:$0xff]
      %v620 = vld [vmem:[%s242 + $0x51] sm:$0xff]
      %v621 = vld [vmem:[%s242 + $0x61] sm:$0xff]
      %v622 = vld [vmem:[%s242 + $0x69] sm:$0xff]
      %v623 = vld [vmem:[%s242 + $0x79] sm:$0xff]
      %v624 = vld [vmem:[%s242 + $0x81] sm:$0xff]
      %v625 = vld [vmem:[%s242 + $0x91] sm:$0xff]
      %v626 = vld [vmem:[%s242 + $0x99] sm:$0xff]
      %v627 = vld [vmem:[%s242 + $0xa9] sm:$0xff]
      %v628 = vld [vmem:[%s242 + $0xb1] sm:$0xff]
      %v629 = vld [vmem:[%s242 + $0xc1] sm:$0xff]
      %v630 = vld [vmem:[%s242 + $0xc9] sm:$0xff]
      %v631 = vld [vmem:[%s242 + $0xd9] sm:$0xff]
      %v632 = vld [vmem:[%s242 + $0xe1] sm:$0xff]
      %v633 = vld [vmem:[%s242 + $0xf1] sm:$0xff]
      %v634 = vld [vmem:[%s242 + $0xf9] sm:$0xff]
      %v635 = vld [vmem:[%s242 + $0x109] sm:$0xff]
      %v636 = vld [vmem:[%s242 + $0x111] sm:$0xff]
      %v637 = vld [vmem:[%s242 + $0x121] sm:$0xff]
      %v638 = vld [vmem:[%s242 + $0x129] sm:$0xff]
      %v639 = vld [vmem:[%s242 + $0x139] sm:$0xff]
      %v640 = vld [vmem:[%s242 + $0x141] sm:$0xff]
      %v641 = vld [vmem:[%s242 + $0x151] sm:$0xff]
      %v642 = vld [vmem:[%s242 + $0x159] sm:$0xff]
      %v643 = vld [vmem:[%s242 + $0x169] sm:$0xff]
      %v644 = vld [vmem:[%s242 + $0x171] sm:$0xff]
      %s645 = scalar_lea.vmem [#allocation2], 16
      %v646 = vld [vmem:[%s645] sm:$0xff]
      %v647 = vld [vmem:[%s645 + $0x8] sm:$0xff]
      %v648 = vmul.f32 %v209, %v613
      %v649 = vmul.f32 %v210, %v614
      %v650 = vmul.f32 %v211, %v615
      %v651 = vmul.f32 %v212, %v616
      %v652 = vmul.f32 %v213, %v617
      %v653 = vmul.f32 %v214, %v618
      %v654 = vmul.f32 %v215, %v619
      %v655 = vmul.f32 %v216, %v620
      %v656 = vmul.f32 %v217, %v621
      %v657 = vmul.f32 %v218, %v622
      %v658 = vmul.f32 %v219, %v623
      %v659 = vmul.f32 %v220, %v624
      %v660 = vmul.f32 %v221, %v625
      %v661 = vmul.f32 %v222, %v626
      %v662 = vmul.f32 %v223, %v627
      %v663 = vmul.f32 %v224, %v628
      %v664 = vmul.f32 %v225, %v629
      %v665 = vmul.f32 %v226, %v630
      %v666 = vmul.f32 %v227, %v631
      %v667 = vmul.f32 %v228, %v632
      %v668 = vmul.f32 %v229, %v633
      %v669 = vmul.f32 %v230, %v634
      %v670 = vmul.f32 %v231, %v635
      %v671 = vmul.f32 %v232, %v636
      %v672 = vmul.f32 %v233, %v637
      %v673 = vmul.f32 %v234, %v638
      %v674 = vmul.f32 %v235, %v639
      %v675 = vmul.f32 %v236, %v640
      %v676 = vmul.f32 %v237, %v641
      %v677 = vmul.f32 %v238, %v642
      %v678 = vmul.f32 %v239, %v643
      %v679 = vmul.f32 %v240, %v644
      %v680 = vsel %vm309, %v648, 0.0
      %681 = vadd.xlane.f32.xlu0 %v680
      %v682 = vpop.xlane.xlu0 %681
      %v683 = vsel %vm309, %v649, 0.0
      %684 = vadd.xlane.f32.xlu0 %v683
      %v685 = vpop.xlane.xlu0 %684
      %v686 = vsel %vm309, %v650, 0.0
      %687 = vadd.xlane.f32.xlu0 %v686
      %v688 = vpop.xlane.xlu0 %687
      %v689 = vsel %vm309, %v651, 0.0
      %690 = vadd.xlane.f32.xlu0 %v689
      %v691 = vpop.xlane.xlu0 %690
      %v692 = vsel %vm309, %v652, 0.0
      %693 = vadd.xlane.f32.xlu0 %v692
      %v694 = vpop.xlane.xlu0 %693
      %v695 = vsel %vm309, %v653, 0.0
      %696 = vadd.xlane.f32.xlu0 %v695
      %v697 = vpop.xlane.xlu0 %696
      %v698 = vsel %vm309, %v654, 0.0
      %699 = vadd.xlane.f32.xlu0 %v698
      %v700 = vpop.xlane.xlu0 %699
      %v701 = vsel %vm309, %v655, 0.0
      %702 = vadd.xlane.f32.xlu0 %v701
      %v703 = vpop.xlane.xlu0 %702
      %v704 = vsel %vm309, %v656, 0.0
      %705 = vadd.xlane.f32.xlu0 %v704
      %v706 = vpop.xlane.xlu0 %705
      %v707 = vsel %vm309, %v657, 0.0
      %708 = vadd.xlane.f32.xlu0 %v707
      %v709 = vpop.xlane.xlu0 %708
      %v710 = vsel %vm309, %v658, 0.0
      %711 = vadd.xlane.f32.xlu0 %v710
      %v712 = vpop.xlane.xlu0 %711
      %v713 = vsel %vm309, %v659, 0.0
      %714 = vadd.xlane.f32.xlu0 %v713
      %v715 = vpop.xlane.xlu0 %714
      %v716 = vsel %vm309, %v660, 0.0
      %717 = vadd.xlane.f32.xlu0 %v716
      %v718 = vpop.xlane.xlu0 %717
      %v719 = vsel %vm309, %v661, 0.0
      %720 = vadd.xlane.f32.xlu0 %v719
      %v721 = vpop.xlane.xlu0 %720
      %v722 = vsel %vm309, %v662, 0.0
      %723 = vadd.xlane.f32.xlu0 %v722
      %v724 = vpop.xlane.xlu0 %723
      %v725 = vsel %vm309, %v663, 0.0
      %726 = vadd.xlane.f32.xlu0 %v725
      %v727 = vpop.xlane.xlu0 %726
      %v728 = vsel %vm309, %v664, 0.0
      %729 = vadd.xlane.f32.xlu0 %v728
      %v730 = vpop.xlane.xlu0 %729
      %v731 = vsel %vm309, %v665, 0.0
      %732 = vadd.xlane.f32.xlu0 %v731
      %v733 = vpop.xlane.xlu0 %732
      %v734 = vsel %vm309, %v666, 0.0
      %735 = vadd.xlane.f32.xlu0 %v734
      %v736 = vpop.xlane.xlu0 %735
      %v737 = vsel %vm309, %v667, 0.0
      %738 = vadd.xlane.f32.xlu0 %v737
      %v739 = vpop.xlane.xlu0 %738
      %v740 = vsel %vm309, %v668, 0.0
      %741 = vadd.xlane.f32.xlu0 %v740
      %v742 = vpop.xlane.xlu0 %741
      %v743 = vsel %vm309, %v669, 0.0
      %744 = vadd.xlane.f32.xlu0 %v743
      %v745 = vpop.xlane.xlu0 %744
      %v746 = vsel %vm309, %v670, 0.0
      %747 = vadd.xlane.f32.xlu0 %v746
      %v748 = vpop.xlane.xlu0 %747
      %v749 = vsel %vm309, %v671, 0.0
      %750 = vadd.xlane.f32.xlu0 %v749
      %v751 = vpop.xlane.xlu0 %750
      %v752 = vsel %vm309, %v672, 0.0
      %753 = vadd.xlane.f32.xlu0 %v752
      %v754 = vpop.xlane.xlu0 %753
      %v755 = vsel %vm309, %v673, 0.0
      %756 = vadd.xlane.f32.xlu0 %v755
      %v757 = vpop.xlane.xlu0 %756
      %v758 = vsel %vm309, %v674, 0.0
      %759 = vadd.xlane.f32.xlu0 %v758
      %v760 = vpop.xlane.xlu0 %759
      %v761 = vsel %vm309, %v675, 0.0
      %762 = vadd.xlane.f32.xlu0 %v761
      %v763 = vpop.xlane.xlu0 %762
      %v764 = vsel %vm309, %v676, 0.0
      %765 = vadd.xlane.f32.xlu0 %v764
      %v766 = vpop.xlane.xlu0 %765
      %v767 = vsel %vm309, %v677, 0.0
      %768 = vadd.xlane.f32.xlu0 %v767
      %v769 = vpop.xlane.xlu0 %768
      %v770 = vsel %vm309, %v678, 0.0
      %771 = vadd.xlane.f32.xlu0 %v770
      %v772 = vpop.xlane.xlu0 %771
      %v773 = vsel %vm309, %v679, 0.0
      %774 = vadd.xlane.f32.xlu0 %v773
      %v775 = vpop.xlane.xlu0 %774
      %v808 = vlaneseq
      %v809 = vshrl.u32 %v808, 7
      %v810 = vsub.s32 %v439, %v809
      %v811 = vrot.slane %v682, %v810
      %v812 = vlaneseq
      %v813 = vshrl.u32 %v812, 7
      %v814 = vsub.s32 %v444, %v813
      %v815 = vrot.slane %v685, %v814
      %v816 = vsel %vm449, %v815, %v811
      %v817 = vlaneseq
      %v818 = vshrl.u32 %v817, 7
      %v819 = vsub.s32 %v439, %v818
      %v820 = vrot.slane %v688, %v819
      %v821 = vlaneseq
      %v822 = vshrl.u32 %v821, 7
      %v823 = vsub.s32 %v444, %v822
      %v824 = vrot.slane %v691, %v823
      %v825 = vsel %vm449, %v824, %v820
      %v826 = vlaneseq
      %v827 = vshrl.u32 %v826, 7
      %v828 = vsub.s32 %v439, %v827
      %v829 = vrot.slane %v694, %v828
      %v830 = vlaneseq
      %v831 = vshrl.u32 %v830, 7
      %v832 = vsub.s32 %v444, %v831
      %v833 = vrot.slane %v697, %v832
      %v834 = vsel %vm449, %v833, %v829
      %v835 = vlaneseq
      %v836 = vshrl.u32 %v835, 7
      %v837 = vsub.s32 %v439, %v836
      %v838 = vrot.slane %v700, %v837
      %v839 = vlaneseq
      %v840 = vshrl.u32 %v839, 7
      %v841 = vsub.s32 %v444, %v840
      %v842 = vrot.slane %v703, %v841
      %v843 = vsel %vm449, %v842, %v838
      %v844 = vlaneseq
      %v845 = vshrl.u32 %v844, 7
      %v846 = vsub.s32 %v439, %v845
      %v847 = vrot.slane %v706, %v846
      %v848 = vlaneseq
      %v849 = vshrl.u32 %v848, 7
      %v850 = vsub.s32 %v444, %v849
      %v851 = vrot.slane %v709, %v850
      %v852 = vsel %vm449, %v851, %v847
      %v853 = vlaneseq
      %v854 = vshrl.u32 %v853, 7
      %v855 = vsub.s32 %v439, %v854
      %v856 = vrot.slane %v712, %v855
      %v857 = vlaneseq
      %v858 = vshrl.u32 %v857, 7
      %v859 = vsub.s32 %v444, %v858
      %v860 = vrot.slane %v715, %v859
      %v861 = vsel %vm449, %v860, %v856
      %v862 = vlaneseq
      %v863 = vshrl.u32 %v862, 7
      %v864 = vsub.s32 %v439, %v863
      %v865 = vrot.slane %v718, %v864
      %v866 = vlaneseq
      %v867 = vshrl.u32 %v866, 7
      %v868 = vsub.s32 %v444, %v867
      %v869 = vrot.slane %v721, %v868
      %v870 = vsel %vm449, %v869, %v865
      %v871 = vlaneseq
      %v872 = vshrl.u32 %v871, 7
      %v873 = vsub.s32 %v439, %v872
      %v874 = vrot.slane %v724, %v873
      %v875 = vlaneseq
      %v876 = vshrl.u32 %v875, 7
      %v877 = vsub.s32 %v444, %v876
      %v878 = vrot.slane %v727, %v877
      %v879 = vsel %vm449, %v878, %v874
      %v880 = vlaneseq
      %v881 = vshrl.u32 %v880, 7
      %v882 = vsub.s32 %v439, %v881
      %v883 = vrot.slane %v730, %v882
      %v884 = vlaneseq
      %v885 = vshrl.u32 %v884, 7
      %v886 = vsub.s32 %v444, %v885
      %v887 = vrot.slane %v733, %v886
      %v888 = vsel %vm449, %v887, %v883
      %v889 = vlaneseq
      %v890 = vshrl.u32 %v889, 7
      %v891 = vsub.s32 %v439, %v890
      %v892 = vrot.slane %v736, %v891
      %v893 = vlaneseq
      %v894 = vshrl.u32 %v893, 7
      %v895 = vsub.s32 %v444, %v894
      %v896 = vrot.slane %v739, %v895
      %v897 = vsel %vm449, %v896, %v892
      %v898 = vlaneseq
      %v899 = vshrl.u32 %v898, 7
      %v900 = vsub.s32 %v439, %v899
      %v901 = vrot.slane %v742, %v900
      %v902 = vlaneseq
      %v903 = vshrl.u32 %v902, 7
      %v904 = vsub.s32 %v444, %v903
      %v905 = vrot.slane %v745, %v904
      %v906 = vsel %vm449, %v905, %v901
      %v907 = vlaneseq
      %v908 = vshrl.u32 %v907, 7
      %v909 = vsub.s32 %v439, %v908
      %v910 = vrot.slane %v748, %v909
      %v911 = vlaneseq
      %v912 = vshrl.u32 %v911, 7
      %v913 = vsub.s32 %v444, %v912
      %v914 = vrot.slane %v751, %v913
      %v915 = vsel %vm449, %v914, %v910
      %v916 = vlaneseq
      %v917 = vshrl.u32 %v916, 7
      %v918 = vsub.s32 %v439, %v917
      %v919 = vrot.slane %v754, %v918
      %v920 = vlaneseq
      %v921 = vshrl.u32 %v920, 7
      %v922 = vsub.s32 %v444, %v921
      %v923 = vrot.slane %v757, %v922
      %v924 = vsel %vm449, %v923, %v919
      %v925 = vlaneseq
      %v926 = vshrl.u32 %v925, 7
      %v927 = vsub.s32 %v439, %v926
      %v928 = vrot.slane %v760, %v927
      %v929 = vlaneseq
      %v930 = vshrl.u32 %v929, 7
      %v931 = vsub.s32 %v444, %v930
      %v932 = vrot.slane %v763, %v931
      %v933 = vsel %vm449, %v932, %v928
      %v934 = vlaneseq
      %v935 = vshrl.u32 %v934, 7
      %v936 = vsub.s32 %v439, %v935
      %v937 = vrot.slane %v766, %v936
      %v938 = vlaneseq
      %v939 = vshrl.u32 %v938, 7
      %v940 = vsub.s32 %v444, %v939
      %v941 = vrot.slane %v769, %v940
      %v942 = vsel %vm449, %v941, %v937
      %v943 = vlaneseq
      %v944 = vshrl.u32 %v943, 7
      %v945 = vsub.s32 %v439, %v944
      %v946 = vrot.slane %v772, %v945
      %v947 = vlaneseq
      %v948 = vshrl.u32 %v947, 7
      %v949 = vsub.s32 %v444, %v948
      %v950 = vrot.slane %v775, %v949
      %v951 = vsel %vm449, %v950, %v946
      %v952 = vsel %vm586, %v825, %v816
      %v953 = vsel %vm588, %v834, %v952
      %v954 = vsel %vm590, %v843, %v953
      %v955 = vsel %vm592, %v852, %v954
      %v956 = vsel %vm594, %v861, %v955
      %v957 = vsel %vm596, %v870, %v956
      %v958 = vsel %vm598, %v879, %v957
      %v959 = vsel %vm586, %v897, %v888
      %v960 = vsel %vm588, %v906, %v959
      %v961 = vsel %vm590, %v915, %v960
      %v962 = vsel %vm592, %v924, %v961
      %v963 = vsel %vm594, %v933, %v962
      %v964 = vsel %vm596, %v942, %v963
      %v965 = vsel %vm598, %v951, %v964
      %v968 = vadd.f32 %v646, %v958
      %v969 = vadd.f32 %v647, %v965
      %970 = vst.msk [vmem:[%s645] sm:$0xff] %vm189, %v968
      %971 = vst.msk [vmem:[%s645 + $0x8] sm:$0xff] %vm189, %v969
      %v972 = vld [vmem:[%s242 + $0x2] sm:$0xff]
      %v973 = vld [vmem:[%s242 + $0xa] sm:$0xff]
      %v974 = vld [vmem:[%s242 + $0x1a] sm:$0xff]
      %v975 = vld [vmem:[%s242 + $0x22] sm:$0xff]
      %v976 = vld [vmem:[%s242 + $0x32] sm:$0xff]
      %v977 = vld [vmem:[%s242 + $0x3a] sm:$0xff]
      %v978 = vld [vmem:[%s242 + $0x4a] sm:$0xff]
      %v979 = vld [vmem:[%s242 + $0x52] sm:$0xff]
      %v980 = vld [vmem:[%s242 + $0x62] sm:$0xff]
      %v981 = vld [vmem:[%s242 + $0x6a] sm:$0xff]
      %v982 = vld [vmem:[%s242 + $0x7a] sm:$0xff]
      %v983 = vld [vmem:[%s242 + $0x82] sm:$0xff]
      %v984 = vld [vmem:[%s242 + $0x92] sm:$0xff]
      %v985 = vld [vmem:[%s242 + $0x9a] sm:$0xff]
      %v986 = vld [vmem:[%s242 + $0xaa] sm:$0xff]
      %v987 = vld [vmem:[%s242 + $0xb2] sm:$0xff]
      %v988 = vld [vmem:[%s242 + $0xc2] sm:$0xff]
      %v989 = vld [vmem:[%s242 + $0xca] sm:$0xff]
      %v990 = vld [vmem:[%s242 + $0xda] sm:$0xff]
      %v991 = vld [vmem:[%s242 + $0xe2] sm:$0xff]
      %v992 = vld [vmem:[%s242 + $0xf2] sm:$0xff]
      %v993 = vld [vmem:[%s242 + $0xfa] sm:$0xff]
      %v994 = vld [vmem:[%s242 + $0x10a] sm:$0xff]
      %v995 = vld [vmem:[%s242 + $0x112] sm:$0xff]
      %v996 = vld [vmem:[%s242 + $0x122] sm:$0xff]
      %v997 = vld [vmem:[%s242 + $0x12a] sm:$0xff]
      %v998 = vld [vmem:[%s242 + $0x13a] sm:$0xff]
      %v999 = vld [vmem:[%s242 + $0x142] sm:$0xff]
      %v1000 = vld [vmem:[%s242 + $0x152] sm:$0xff]
      %v1001 = vld [vmem:[%s242 + $0x15a] sm:$0xff]
      %v1002 = vld [vmem:[%s242 + $0x16a] sm:$0xff]
      %v1003 = vld [vmem:[%s242 + $0x172] sm:$0xff]
      %s1004 = scalar_lea.vmem [#allocation2], 32
      %v1005 = vld [vmem:[%s1004] sm:$0xff]
      %v1006 = vld [vmem:[%s1004 + $0x8] sm:$0xff]
      %v1007 = vmul.f32 %v209, %v972
      %v1008 = vmul.f32 %v210, %v973
      %v1009 = vmul.f32 %v211, %v974
      %v1010 = vmul.f32 %v212, %v975
      %v1011 = vmul.f32 %v213, %v976
      %v1012 = vmul.f32 %v214, %v977
      %v1013 = vmul.f32 %v215, %v978
      %v1014 = vmul.f32 %v216, %v979
      %v1015 = vmul.f32 %v217, %v980
      %v1016 = vmul.f32 %v218, %v981
      %v1017 = vmul.f32 %v219, %v982
      %v1018 = vmul.f32 %v220, %v983
      %v1019 = vmul.f32 %v221, %v984
      %v1020 = vmul.f32 %v222, %v985
      %v1021 = vmul.f32 %v223, %v986
      %v1022 = vmul.f32 %v224, %v987
      %v1023 = vmul.f32 %v225, %v988
      %v1024 = vmul.f32 %v226, %v989
      %v1025 = vmul.f32 %v227, %v990
      %v1026 = vmul.f32 %v228, %v991
      %v1027 = vmul.f32 %v229, %v992
      %v1028 = vmul.f32 %v230, %v993
      %v1029 = vmul.f32 %v231, %v994
      %v1030 = vmul.f32 %v232, %v995
      %v1031 = vmul.f32 %v233, %v996
      %v1032 = vmul.f32 %v234, %v997
      %v1033 = vmul.f32 %v235, %v998
      %v1034 = vmul.f32 %v236, %v999
      %v1035 = vmul.f32 %v237, %v1000
      %v1036 = vmul.f32 %v238, %v1001
      %v1037 = vmul.f32 %v239, %v1002
      %v1038 = vmul.f32 %v240, %v1003
      %v1039 = vsel %vm309, %v1007, 0.0
      %1040 = vadd.xlane.f32.xlu0 %v1039
      %v1041 = vpop.xlane.xlu0 %1040
      %v1042 = vsel %vm309, %v1008, 0.0
      %1043 = vadd.xlane.f32.xlu0 %v1042
      %v1044 = vpop.xlane.xlu0 %1043
      %v1045 = vsel %vm309, %v1009, 0.0
      %1046 = vadd.xlane.f32.xlu0 %v1045
      %v1047 = vpop.xlane.xlu0 %1046
      %v1048 = vsel %vm309, %v1010, 0.0
      %1049 = vadd.xlane.f32.xlu0 %v1048
      %v1050 = vpop.xlane.xlu0 %1049
      %v1051 = vsel %vm309, %v1011, 0.0
      %1052 = vadd.xlane.f32.xlu0 %v1051
      %v1053 = vpop.xlane.xlu0 %1052
      %v1054 = vsel %vm309, %v1012, 0.0
      %1055 = vadd.xlane.f32.xlu0 %v1054
      %v1056 = vpop.xlane.xlu0 %1055
      %v1057 = vsel %vm309, %v1013, 0.0
      %1058 = vadd.xlane.f32.xlu0 %v1057
      %v1059 = vpop.xlane.xlu0 %1058
      %v1060 = vsel %vm309, %v1014, 0.0
      %1061 = vadd.xlane.f32.xlu0 %v1060
      %v1062 = vpop.xlane.xlu0 %1061
      %v1063 = vsel %vm309, %v1015, 0.0
      %1064 = vadd.xlane.f32.xlu0 %v1063
      %v1065 = vpop.xlane.xlu0 %1064
      %v1066 = vsel %vm309, %v1016, 0.0
      %1067 = vadd.xlane.f32.xlu0 %v1066
      %v1068 = vpop.xlane.xlu0 %1067
      %v1069 = vsel %vm309, %v1017, 0.0
      %1070 = vadd.xlane.f32.xlu0 %v1069
      %v1071 = vpop.xlane.xlu0 %1070
      %v1072 = vsel %vm309, %v1018, 0.0
      %1073 = vadd.xlane.f32.xlu0 %v1072
      %v1074 = vpop.xlane.xlu0 %1073
      %v1075 = vsel %vm309, %v1019, 0.0
      %1076 = vadd.xlane.f32.xlu0 %v1075
      %v1077 = vpop.xlane.xlu0 %1076
      %v1078 = vsel %vm309, %v1020, 0.0
      %1079 = vadd.xlane.f32.xlu0 %v1078
      %v1080 = vpop.xlane.xlu0 %1079
      %v1081 = vsel %vm309, %v1021, 0.0
      %1082 = vadd.xlane.f32.xlu0 %v1081
      %v1083 = vpop.xlane.xlu0 %1082
      %v1084 = vsel %vm309, %v1022, 0.0
      %1085 = vadd.xlane.f32.xlu0 %v1084
      %v1086 = vpop.xlane.xlu0 %1085
      %v1087 = vsel %vm309, %v1023, 0.0
      %1088 = vadd.xlane.f32.xlu0 %v1087
      %v1089 = vpop.xlane.xlu0 %1088
      %v1090 = vsel %vm309, %v1024, 0.0
      %1091 = vadd.xlane.f32.xlu0 %v1090
      %v1092 = vpop.xlane.xlu0 %1091
      %v1093 = vsel %vm309, %v1025, 0.0
      %1094 = vadd.xlane.f32.xlu0 %v1093
      %v1095 = vpop.xlane.xlu0 %1094
      %v1096 = vsel %vm309, %v1026, 0.0
      %1097 = vadd.xlane.f32.xlu0 %v1096
      %v1098 = vpop.xlane.xlu0 %1097
      %v1099 = vsel %vm309, %v1027, 0.0
      %1100 = vadd.xlane.f32.xlu0 %v1099
      %v1101 = vpop.xlane.xlu0 %1100
      %v1102 = vsel %vm309, %v1028, 0.0
      %1103 = vadd.xlane.f32.xlu0 %v1102
      %v1104 = vpop.xlane.xlu0 %1103
      %v1105 = vsel %vm309, %v1029, 0.0
      %1106 = vadd.xlane.f32.xlu0 %v1105
      %v1107 = vpop.xlane.xlu0 %1106
      %v1108 = vsel %vm309, %v1030, 0.0
      %1109 = vadd.xlane.f32.xlu0 %v1108
      %v1110 = vpop.xlane.xlu0 %1109
      %v1111 = vsel %vm309, %v1031, 0.0
      %1112 = vadd.xlane.f32.xlu0 %v1111
      %v1113 = vpop.xlane.xlu0 %1112
      %v1114 = vsel %vm309, %v1032, 0.0
      %1115 = vadd.xlane.f32.xlu0 %v1114
      %v1116 = vpop.xlane.xlu0 %1115
      %v1117 = vsel %vm309, %v1033, 0.0
      %1118 = vadd.xlane.f32.xlu0 %v1117
      %v1119 = vpop.xlane.xlu0 %1118
      %v1120 = vsel %vm309, %v1034, 0.0
      %1121 = vadd.xlane.f32.xlu0 %v1120
      %v1122 = vpop.xlane.xlu0 %1121
      %v1123 = vsel %vm309, %v1035, 0.0
      %1124 = vadd.xlane.f32.xlu0 %v1123
      %v1125 = vpop.xlane.xlu0 %1124
      %v1126 = vsel %vm309, %v1036, 0.0
      %1127 = vadd.xlane.f32.xlu0 %v1126
      %v1128 = vpop.xlane.xlu0 %1127
      %v1129 = vsel %vm309, %v1037, 0.0
      %1130 = vadd.xlane.f32.xlu0 %v1129
      %v1131 = vpop.xlane.xlu0 %1130
      %v1132 = vsel %vm309, %v1038, 0.0
      %1133 = vadd.xlane.f32.xlu0 %v1132
      %v1134 = vpop.xlane.xlu0 %1133
      %v1167 = vlaneseq
      %v1168 = vshrl.u32 %v1167, 7
      %v1169 = vsub.s32 %v439, %v1168
      %v1170 = vrot.slane %v1041, %v1169
      %v1171 = vlaneseq
      %v1172 = vshrl.u32 %v1171, 7
      %v1173 = vsub.s32 %v444, %v1172
      %v1174 = vrot.slane %v1044, %v1173
      %v1175 = vsel %vm449, %v1174, %v1170
      %v1176 = vlaneseq
      %v1177 = vshrl.u32 %v1176, 7
      %v1178 = vsub.s32 %v439, %v1177
      %v1179 = vrot.slane %v1047, %v1178
      %v1180 = vlaneseq
      %v1181 = vshrl.u32 %v1180, 7
      %v1182 = vsub.s32 %v444, %v1181
      %v1183 = vrot.slane %v1050, %v1182
      %v1184 = vsel %vm449, %v1183, %v1179
      %v1185 = vlaneseq
      %v1186 = vshrl.u32 %v1185, 7
      %v1187 = vsub.s32 %v439, %v1186
      %v1188 = vrot.slane %v1053, %v1187
      %v1189 = vlaneseq
      %v1190 = vshrl.u32 %v1189, 7
      %v1191 = vsub.s32 %v444, %v1190
      %v1192 = vrot.slane %v1056, %v1191
      %v1193 = vsel %vm449, %v1192, %v1188
      %v1194 = vlaneseq
      %v1195 = vshrl.u32 %v1194, 7
      %v1196 = vsub.s32 %v439, %v1195
      %v1197 = vrot.slane %v1059, %v1196
      %v1198 = vlaneseq
      %v1199 = vshrl.u32 %v1198, 7
      %v1200 = vsub.s32 %v444, %v1199
      %v1201 = vrot.slane %v1062, %v1200
      %v1202 = vsel %vm449, %v1201, %v1197
      %v1203 = vlaneseq
      %v1204 = vshrl.u32 %v1203, 7
      %v1205 = vsub.s32 %v439, %v1204
      %v1206 = vrot.slane %v1065, %v1205
      %v1207 = vlaneseq
      %v1208 = vshrl.u32 %v1207, 7
      %v1209 = vsub.s32 %v444, %v1208
      %v1210 = vrot.slane %v1068, %v1209
      %v1211 = vsel %vm449, %v1210, %v1206
      %v1212 = vlaneseq
      %v1213 = vshrl.u32 %v1212, 7
      %v1214 = vsub.s32 %v439, %v1213
      %v1215 = vrot.slane %v1071, %v1214
      %v1216 = vlaneseq
      %v1217 = vshrl.u32 %v1216, 7
      %v1218 = vsub.s32 %v444, %v1217
      %v1219 = vrot.slane %v1074, %v1218
      %v1220 = vsel %vm449, %v1219, %v1215
      %v1221 = vlaneseq
      %v1222 = vshrl.u32 %v1221, 7
      %v1223 = vsub.s32 %v439, %v1222
      %v1224 = vrot.slane %v1077, %v1223
      %v1225 = vlaneseq
      %v1226 = vshrl.u32 %v1225, 7
      %v1227 = vsub.s32 %v444, %v1226
      %v1228 = vrot.slane %v1080, %v1227
      %v1229 = vsel %vm449, %v1228, %v1224
      %v1230 = vlaneseq
      %v1231 = vshrl.u32 %v1230, 7
      %v1232 = vsub.s32 %v439, %v1231
      %v1233 = vrot.slane %v1083, %v1232
      %v1234 = vlaneseq
      %v1235 = vshrl.u32 %v1234, 7
      %v1236 = vsub.s32 %v444, %v1235
      %v1237 = vrot.slane %v1086, %v1236
      %v1238 = vsel %vm449, %v1237, %v1233
      %v1239 = vlaneseq
      %v1240 = vshrl.u32 %v1239, 7
      %v1241 = vsub.s32 %v439, %v1240
      %v1242 = vrot.slane %v1089, %v1241
      %v1243 = vlaneseq
      %v1244 = vshrl.u32 %v1243, 7
      %v1245 = vsub.s32 %v444, %v1244
      %v1246 = vrot.slane %v1092, %v1245
      %v1247 = vsel %vm449, %v1246, %v1242
      %v1248 = vlaneseq
      %v1249 = vshrl.u32 %v1248, 7
      %v1250 = vsub.s32 %v439, %v1249
      %v1251 = vrot.slane %v1095, %v1250
      %v1252 = vlaneseq
      %v1253 = vshrl.u32 %v1252, 7
      %v1254 = vsub.s32 %v444, %v1253
      %v1255 = vrot.slane %v1098, %v1254
      %v1256 = vsel %vm449, %v1255, %v1251
      %v1257 = vlaneseq
      %v1258 = vshrl.u32 %v1257, 7
      %v1259 = vsub.s32 %v439, %v1258
      %v1260 = vrot.slane %v1101, %v1259
      %v1261 = vlaneseq
      %v1262 = vshrl.u32 %v1261, 7
      %v1263 = vsub.s32 %v444, %v1262
      %v1264 = vrot.slane %v1104, %v1263
      %v1265 = vsel %vm449, %v1264, %v1260
      %v1266 = vlaneseq
      %v1267 = vshrl.u32 %v1266, 7
      %v1268 = vsub.s32 %v439, %v1267
      %v1269 = vrot.slane %v1107, %v1268
      %v1270 = vlaneseq
      %v1271 = vshrl.u32 %v1270, 7
      %v1272 = vsub.s32 %v444, %v1271
      %v1273 = vrot.slane %v1110, %v1272
      %v1274 = vsel %vm449, %v1273, %v1269
      %v1275 = vlaneseq
      %v1276 = vshrl.u32 %v1275, 7
      %v1277 = vsub.s32 %v439, %v1276
      %v1278 = vrot.slane %v1113, %v1277
      %v1279 = vlaneseq
      %v1280 = vshrl.u32 %v1279, 7
      %v1281 = vsub.s32 %v444, %v1280
      %v1282 = vrot.slane %v1116, %v1281
      %v1283 = vsel %vm449, %v1282, %v1278
      %v1284 = vlaneseq
      %v1285 = vshrl.u32 %v1284, 7
      %v1286 = vsub.s32 %v439, %v1285
      %v1287 = vrot.slane %v1119, %v1286
      %v1288 = vlaneseq
      %v1289 = vshrl.u32 %v1288, 7
      %v1290 = vsub.s32 %v444, %v1289
      %v1291 = vrot.slane %v1122, %v1290
      %v1292 = vsel %vm449, %v1291, %v1287
      %v1293 = vlaneseq
      %v1294 = vshrl.u32 %v1293, 7
      %v1295 = vsub.s32 %v439, %v1294
      %v1296 = vrot.slane %v1125, %v1295
      %v1297 = vlaneseq
      %v1298 = vshrl.u32 %v1297, 7
      %v1299 = vsub.s32 %v444, %v1298
      %v1300 = vrot.slane %v1128, %v1299
      %v1301 = vsel %vm449, %v1300, %v1296
      %v1302 = vlaneseq
      %v1303 = vshrl.u32 %v1302, 7
      %v1304 = vsub.s32 %v439, %v1303
      %v1305 = vrot.slane %v1131, %v1304
      %v1306 = vlaneseq
      %v1307 = vshrl.u32 %v1306, 7
      %v1308 = vsub.s32 %v444, %v1307
      %v1309 = vrot.slane %v1134, %v1308
      %v1310 = vsel %vm449, %v1309, %v1305
      %v1311 = vsel %vm586, %v1184, %v1175
      %v1312 = vsel %vm588, %v1193, %v1311
      %v1313 = vsel %vm590, %v1202, %v1312
      %v1314 = vsel %vm592, %v1211, %v1313
      %v1315 = vsel %vm594, %v1220, %v1314
      %v1316 = vsel %vm596, %v1229, %v1315
      %v1317 = vsel %vm598, %v1238, %v1316
      %v1318 = vsel %vm586, %v1256, %v1247
      %v1319 = vsel %vm588, %v1265, %v1318
      %v1320 = vsel %vm590, %v1274, %v1319
      %v1321 = vsel %vm592, %v1283, %v1320
      %v1322 = vsel %vm594, %v1292, %v1321
      %v1323 = vsel %vm596, %v1301, %v1322
      %v1324 = vsel %vm598, %v1310, %v1323
      %v1327 = vadd.f32 %v1005, %v1317
      %v1328 = vadd.f32 %v1006, %v1324
      %1329 = vst.msk [vmem:[%s1004] sm:$0xff] %vm189, %v1327
      %1330 = vst.msk [vmem:[%s1004 + $0x8] sm:$0xff] %vm189, %v1328
      %v1331 = vld [vmem:[%s242 + $0x3] sm:$0xff]
      %v1332 = vld [vmem:[%s242 + $0xb] sm:$0xff]
      %v1333 = vld [vmem:[%s242 + $0x1b] sm:$0xff]
      %v1334 = vld [vmem:[%s242 + $0x23] sm:$0xff]
      %v1335 = vld [vmem:[%s242 + $0x33] sm:$0xff]
      %v1336 = vld [vmem:[%s242 + $0x3b] sm:$0xff]
      %v1337 = vld [vmem:[%s242 + $0x4b] sm:$0xff]
      %v1338 = vld [vmem:[%s242 + $0x53] sm:$0xff]
      %v1339 = vld [vmem:[%s242 + $0x63] sm:$0xff]
      %v1340 = vld [vmem:[%s242 + $0x6b] sm:$0xff]
      %v1341 = vld [vmem:[%s242 + $0x7b] sm:$0xff]
      %v1342 = vld [vmem:[%s242 + $0x83] sm:$0xff]
      %v1343 = vld [vmem:[%s242 + $0x93] sm:$0xff]
      %v1344 = vld [vmem:[%s242 + $0x9b] sm:$0xff]
      %v1345 = vld [vmem:[%s242 + $0xab] sm:$0xff]
      %v1346 = vld [vmem:[%s242 + $0xb3] sm:$0xff]
      %v1347 = vld [vmem:[%s242 + $0xc3] sm:$0xff]
      %v1348 = vld [vmem:[%s242 + $0xcb] sm:$0xff]
      %v1349 = vld [vmem:[%s242 + $0xdb] sm:$0xff]
      %v1350 = vld [vmem:[%s242 + $0xe3] sm:$0xff]
      %v1351 = vld [vmem:[%s242 + $0xf3] sm:$0xff]
      %v1352 = vld [vmem:[%s242 + $0xfb] sm:$0xff]
      %v1353 = vld [vmem:[%s242 + $0x10b] sm:$0xff]
      %v1354 = vld [vmem:[%s242 + $0x113] sm:$0xff]
      %v1355 = vld [vmem:[%s242 + $0x123] sm:$0xff]
      %v1356 = vld [vmem:[%s242 + $0x12b] sm:$0xff]
      %v1357 = vld [vmem:[%s242 + $0x13b] sm:$0xff]
      %v1358 = vld [vmem:[%s242 + $0x143] sm:$0xff]
      %v1359 = vld [vmem:[%s242 + $0x153] sm:$0xff]
      %v1360 = vld [vmem:[%s242 + $0x15b] sm:$0xff]
      %v1361 = vld [vmem:[%s242 + $0x16b] sm:$0xff]
      %v1362 = vld [vmem:[%s242 + $0x173] sm:$0xff]
      %s1363 = scalar_lea.vmem [#allocation2], 48
      %v1364 = vld [vmem:[%s1363] sm:$0xff]
      %v1365 = vld [vmem:[%s1363 + $0x8] sm:$0xff]
      %v1366 = vmul.f32 %v209, %v1331
      %v1367 = vmul.f32 %v210, %v1332
      %v1368 = vmul.f32 %v211, %v1333
      %v1369 = vmul.f32 %v212, %v1334
      %v1370 = vmul.f32 %v213, %v1335
      %v1371 = vmul.f32 %v214, %v1336
      %v1372 = vmul.f32 %v215, %v1337
      %v1373 = vmul.f32 %v216, %v1338
      %v1374 = vmul.f32 %v217, %v1339
      %v1375 = vmul.f32 %v218, %v1340
      %v1376 = vmul.f32 %v219, %v1341
      %v1377 = vmul.f32 %v220, %v1342
      %v1378 = vmul.f32 %v221, %v1343
      %v1379 = vmul.f32 %v222, %v1344
      %v1380 = vmul.f32 %v223, %v1345
      %v1381 = vmul.f32 %v224, %v1346
      %v1382 = vmul.f32 %v225, %v1347
      %v1383 = vmul.f32 %v226, %v1348
      %v1384 = vmul.f32 %v227, %v1349
      %v1385 = vmul.f32 %v228, %v1350
      %v1386 = vmul.f32 %v229, %v1351
      %v1387 = vmul.f32 %v230, %v1352
      %v1388 = vmul.f32 %v231, %v1353
      %v1389 = vmul.f32 %v232, %v1354
      %v1390 = vmul.f32 %v233, %v1355
      %v1391 = vmul.f32 %v234, %v1356
      %v1392 = vmul.f32 %v235, %v1357
      %v1393 = vmul.f32 %v236, %v1358
      %v1394 = vmul.f32 %v237, %v1359
      %v1395 = vmul.f32 %v238, %v1360
      %v1396 = vmul.f32 %v239, %v1361
      %v1397 = vmul.f32 %v240, %v1362
      %v1398 = vsel %vm309, %v1366, 0.0
      %1399 = vadd.xlane.f32.xlu0 %v1398
      %v1400 = vpop.xlane.xlu0 %1399
      %v1401 = vsel %vm309, %v1367, 0.0
      %1402 = vadd.xlane.f32.xlu0 %v1401
      %v1403 = vpop.xlane.xlu0 %1402
      %v1404 = vsel %vm309, %v1368, 0.0
      %1405 = vadd.xlane.f32.xlu0 %v1404
      %v1406 = vpop.xlane.xlu0 %1405
      %v1407 = vsel %vm309, %v1369, 0.0
      %1408 = vadd.xlane.f32.xlu0 %v1407
      %v1409 = vpop.xlane.xlu0 %1408
      %v1410 = vsel %vm309, %v1370, 0.0
      %1411 = vadd.xlane.f32.xlu0 %v1410
      %v1412 = vpop.xlane.xlu0 %1411
      %v1413 = vsel %vm309, %v1371, 0.0
      %1414 = vadd.xlane.f32.xlu0 %v1413
      %v1415 = vpop.xlane.xlu0 %1414
      %v1416 = vsel %vm309, %v1372, 0.0
      %1417 = vadd.xlane.f32.xlu0 %v1416
      %v1418 = vpop.xlane.xlu0 %1417
      %v1419 = vsel %vm309, %v1373, 0.0
      %1420 = vadd.xlane.f32.xlu0 %v1419
      %v1421 = vpop.xlane.xlu0 %1420
      %v1422 = vsel %vm309, %v1374, 0.0
      %1423 = vadd.xlane.f32.xlu0 %v1422
      %v1424 = vpop.xlane.xlu0 %1423
      %v1425 = vsel %vm309, %v1375, 0.0
      %1426 = vadd.xlane.f32.xlu0 %v1425
      %v1427 = vpop.xlane.xlu0 %1426
      %v1428 = vsel %vm309, %v1376, 0.0
      %1429 = vadd.xlane.f32.xlu0 %v1428
      %v1430 = vpop.xlane.xlu0 %1429
      %v1431 = vsel %vm309, %v1377, 0.0
      %1432 = vadd.xlane.f32.xlu0 %v1431
      %v1433 = vpop.xlane.xlu0 %1432
      %v1434 = vsel %vm309, %v1378, 0.0
      %1435 = vadd.xlane.f32.xlu0 %v1434
      %v1436 = vpop.xlane.xlu0 %1435
      %v1437 = vsel %vm309, %v1379, 0.0
      %1438 = vadd.xlane.f32.xlu0 %v1437
      %v1439 = vpop.xlane.xlu0 %1438
      %v1440 = vsel %vm309, %v1380, 0.0
      %1441 = vadd.xlane.f32.xlu0 %v1440
      %v1442 = vpop.xlane.xlu0 %1441
      %v1443 = vsel %vm309, %v1381, 0.0
      %1444 = vadd.xlane.f32.xlu0 %v1443
      %v1445 = vpop.xlane.xlu0 %1444
      %v1446 = vsel %vm309, %v1382, 0.0
      %1447 = vadd.xlane.f32.xlu0 %v1446
      %v1448 = vpop.xlane.xlu0 %1447
      %v1449 = vsel %vm309, %v1383, 0.0
      %1450 = vadd.xlane.f32.xlu0 %v1449
      %v1451 = vpop.xlane.xlu0 %1450
      %v1452 = vsel %vm309, %v1384, 0.0
      %1453 = vadd.xlane.f32.xlu0 %v1452
      %v1454 = vpop.xlane.xlu0 %1453
      %v1455 = vsel %vm309, %v1385, 0.0
      %1456 = vadd.xlane.f32.xlu0 %v1455
      %v1457 = vpop.xlane.xlu0 %1456
      %v1458 = vsel %vm309, %v1386, 0.0
      %1459 = vadd.xlane.f32.xlu0 %v1458
      %v1460 = vpop.xlane.xlu0 %1459
      %v1461 = vsel %vm309, %v1387, 0.0
      %1462 = vadd.xlane.f32.xlu0 %v1461
      %v1463 = vpop.xlane.xlu0 %1462
      %v1464 = vsel %vm309, %v1388, 0.0
      %1465 = vadd.xlane.f32.xlu0 %v1464
      %v1466 = vpop.xlane.xlu0 %1465
      %v1467 = vsel %vm309, %v1389, 0.0
      %1468 = vadd.xlane.f32.xlu0 %v1467
      %v1469 = vpop.xlane.xlu0 %1468
      %v1470 = vsel %vm309, %v1390, 0.0
      %1471 = vadd.xlane.f32.xlu0 %v1470
      %v1472 = vpop.xlane.xlu0 %1471
      %v1473 = vsel %vm309, %v1391, 0.0
      %1474 = vadd.xlane.f32.xlu0 %v1473
      %v1475 = vpop.xlane.xlu0 %1474
      %v1476 = vsel %vm309, %v1392, 0.0
      %1477 = vadd.xlane.f32.xlu0 %v1476
      %v1478 = vpop.xlane.xlu0 %1477
      %v1479 = vsel %vm309, %v1393, 0.0
      %1480 = vadd.xlane.f32.xlu0 %v1479
      %v1481 = vpop.xlane.xlu0 %1480
      %v1482 = vsel %vm309, %v1394, 0.0
      %1483 = vadd.xlane.f32.xlu0 %v1482
      %v1484 = vpop.xlane.xlu0 %1483
      %v1485 = vsel %vm309, %v1395, 0.0
      %1486 = vadd.xlane.f32.xlu0 %v1485
      %v1487 = vpop.xlane.xlu0 %1486
      %v1488 = vsel %vm309, %v1396, 0.0
      %1489 = vadd.xlane.f32.xlu0 %v1488
      %v1490 = vpop.xlane.xlu0 %1489
      %v1491 = vsel %vm309, %v1397, 0.0
      %1492 = vadd.xlane.f32.xlu0 %v1491
      %v1493 = vpop.xlane.xlu0 %1492
      %v1526 = vlaneseq
      %v1527 = vshrl.u32 %v1526, 7
      %v1528 = vsub.s32 %v439, %v1527
      %v1529 = vrot.slane %v1400, %v1528
      %v1530 = vlaneseq
      %v1531 = vshrl.u32 %v1530, 7
      %v1532 = vsub.s32 %v444, %v1531
      %v1533 = vrot.slane %v1403, %v1532
      %v1534 = vsel %vm449, %v1533, %v1529
      %v1535 = vlaneseq
      %v1536 = vshrl.u32 %v1535, 7
      %v1537 = vsub.s32 %v439, %v1536
      %v1538 = vrot.slane %v1406, %v1537
      %v1539 = vlaneseq
      %v1540 = vshrl.u32 %v1539, 7
      %v1541 = vsub.s32 %v444, %v1540
      %v1542 = vrot.slane %v1409, %v1541
      %v1543 = vsel %vm449, %v1542, %v1538
      %v1544 = vlaneseq
      %v1545 = vshrl.u32 %v1544, 7
      %v1546 = vsub.s32 %v439, %v1545
      %v1547 = vrot.slane %v1412, %v1546
      %v1548 = vlaneseq
      %v1549 = vshrl.u32 %v1548, 7
      %v1550 = vsub.s32 %v444, %v1549
      %v1551 = vrot.slane %v1415, %v1550
      %v1552 = vsel %vm449, %v1551, %v1547
      %v1553 = vlaneseq
      %v1554 = vshrl.u32 %v1553, 7
      %v1555 = vsub.s32 %v439, %v1554
      %v1556 = vrot.slane %v1418, %v1555
      %v1557 = vlaneseq
      %v1558 = vshrl.u32 %v1557, 7
      %v1559 = vsub.s32 %v444, %v1558
      %v1560 = vrot.slane %v1421, %v1559
      %v1561 = vsel %vm449, %v1560, %v1556
      %v1562 = vlaneseq
      %v1563 = vshrl.u32 %v1562, 7
      %v1564 = vsub.s32 %v439, %v1563
      %v1565 = vrot.slane %v1424, %v1564
      %v1566 = vlaneseq
      %v1567 = vshrl.u32 %v1566, 7
      %v1568 = vsub.s32 %v444, %v1567
      %v1569 = vrot.slane %v1427, %v1568
      %v1570 = vsel %vm449, %v1569, %v1565
      %v1571 = vlaneseq
      %v1572 = vshrl.u32 %v1571, 7
      %v1573 = vsub.s32 %v439, %v1572
      %v1574 = vrot.slane %v1430, %v1573
      %v1575 = vlaneseq
      %v1576 = vshrl.u32 %v1575, 7
      %v1577 = vsub.s32 %v444, %v1576
      %v1578 = vrot.slane %v1433, %v1577
      %v1579 = vsel %vm449, %v1578, %v1574
      %v1580 = vlaneseq
      %v1581 = vshrl.u32 %v1580, 7
      %v1582 = vsub.s32 %v439, %v1581
      %v1583 = vrot.slane %v1436, %v1582
      %v1584 = vlaneseq
      %v1585 = vshrl.u32 %v1584, 7
      %v1586 = vsub.s32 %v444, %v1585
      %v1587 = vrot.slane %v1439, %v1586
      %v1588 = vsel %vm449, %v1587, %v1583
      %v1589 = vlaneseq
      %v1590 = vshrl.u32 %v1589, 7
      %v1591 = vsub.s32 %v439, %v1590
      %v1592 = vrot.slane %v1442, %v1591
      %v1593 = vlaneseq
      %v1594 = vshrl.u32 %v1593, 7
      %v1595 = vsub.s32 %v444, %v1594
      %v1596 = vrot.slane %v1445, %v1595
      %v1597 = vsel %vm449, %v1596, %v1592
      %v1598 = vlaneseq
      %v1599 = vshrl.u32 %v1598, 7
      %v1600 = vsub.s32 %v439, %v1599
      %v1601 = vrot.slane %v1448, %v1600
      %v1602 = vlaneseq
      %v1603 = vshrl.u32 %v1602, 7
      %v1604 = vsub.s32 %v444, %v1603
      %v1605 = vrot.slane %v1451, %v1604
      %v1606 = vsel %vm449, %v1605, %v1601
      %v1607 = vlaneseq
      %v1608 = vshrl.u32 %v1607, 7
      %v1609 = vsub.s32 %v439, %v1608
      %v1610 = vrot.slane %v1454, %v1609
      %v1611 = vlaneseq
      %v1612 = vshrl.u32 %v1611, 7
      %v1613 = vsub.s32 %v444, %v1612
      %v1614 = vrot.slane %v1457, %v1613
      %v1615 = vsel %vm449, %v1614, %v1610
      %v1616 = vlaneseq
      %v1617 = vshrl.u32 %v1616, 7
      %v1618 = vsub.s32 %v439, %v1617
      %v1619 = vrot.slane %v1460, %v1618
      %v1620 = vlaneseq
      %v1621 = vshrl.u32 %v1620, 7
      %v1622 = vsub.s32 %v444, %v1621
      %v1623 = vrot.slane %v1463, %v1622
      %v1624 = vsel %vm449, %v1623, %v1619
      %v1625 = vlaneseq
      %v1626 = vshrl.u32 %v1625, 7
      %v1627 = vsub.s32 %v439, %v1626
      %v1628 = vrot.slane %v1466, %v1627
      %v1629 = vlaneseq
      %v1630 = vshrl.u32 %v1629, 7
      %v1631 = vsub.s32 %v444, %v1630
      %v1632 = vrot.slane %v1469, %v1631
      %v1633 = vsel %vm449, %v1632, %v1628
      %v1634 = vlaneseq
      %v1635 = vshrl.u32 %v1634, 7
      %v1636 = vsub.s32 %v439, %v1635
      %v1637 = vrot.slane %v1472, %v1636
      %v1638 = vlaneseq
      %v1639 = vshrl.u32 %v1638, 7
      %v1640 = vsub.s32 %v444, %v1639
      %v1641 = vrot.slane %v1475, %v1640
      %v1642 = vsel %vm449, %v1641, %v1637
      %v1643 = vlaneseq
      %v1644 = vshrl.u32 %v1643, 7
      %v1645 = vsub.s32 %v439, %v1644
      %v1646 = vrot.slane %v1478, %v1645
      %v1647 = vlaneseq
      %v1648 = vshrl.u32 %v1647, 7
      %v1649 = vsub.s32 %v444, %v1648
      %v1650 = vrot.slane %v1481, %v1649
      %v1651 = vsel %vm449, %v1650, %v1646
      %v1652 = vlaneseq
      %v1653 = vshrl.u32 %v1652, 7
      %v1654 = vsub.s32 %v439, %v1653
      %v1655 = vrot.slane %v1484, %v1654
      %v1656 = vlaneseq
      %v1657 = vshrl.u32 %v1656, 7
      %v1658 = vsub.s32 %v444, %v1657
      %v1659 = vrot.slane %v1487, %v1658
      %v1660 = vsel %vm449, %v1659, %v1655
      %v1661 = vlaneseq
      %v1662 = vshrl.u32 %v1661, 7
      %v1663 = vsub.s32 %v439, %v1662
      %v1664 = vrot.slane %v1490, %v1663
      %v1665 = vlaneseq
      %v1666 = vshrl.u32 %v1665, 7
      %v1667 = vsub.s32 %v444, %v1666
      %v1668 = vrot.slane %v1493, %v1667
      %v1669 = vsel %vm449, %v1668, %v1664
      %v1670 = vsel %vm586, %v1543, %v1534
      %v1671 = vsel %vm588, %v1552, %v1670
      %v1672 = vsel %vm590, %v1561, %v1671
      %v1673 = vsel %vm592, %v1570, %v1672
      %v1674 = vsel %vm594, %v1579, %v1673
      %v1675 = vsel %vm596, %v1588, %v1674
      %v1676 = vsel %vm598, %v1597, %v1675
      %v1677 = vsel %vm586, %v1615, %v1606
      %v1678 = vsel %vm588, %v1624, %v1677
      %v1679 = vsel %vm590, %v1633, %v1678
      %v1680 = vsel %vm592, %v1642, %v1679
      %v1681 = vsel %vm594, %v1651, %v1680
      %v1682 = vsel %vm596, %v1660, %v1681
      %v1683 = vsel %vm598, %v1669, %v1682
      %v1686 = vadd.f32 %v1364, %v1676
      %v1687 = vadd.f32 %v1365, %v1683
      %1688 = vst.msk [vmem:[%s1363] sm:$0xff] %vm189, %v1686
      %1689 = vst.msk [vmem:[%s1363 + $0x8] sm:$0xff] %vm189, %v1687
      %v1690 = vld [vmem:[%s242 + $0x4] sm:$0xff]
      %v1691 = vld [vmem:[%s242 + $0xc] sm:$0xff]
      %v1692 = vld [vmem:[%s242 + $0x1c] sm:$0xff]
      %v1693 = vld [vmem:[%s242 + $0x24] sm:$0xff]
      %v1694 = vld [vmem:[%s242 + $0x34] sm:$0xff]
      %v1695 = vld [vmem:[%s242 + $0x3c] sm:$0xff]
      %v1696 = vld [vmem:[%s242 + $0x4c] sm:$0xff]
      %v1697 = vld [vmem:[%s242 + $0x54] sm:$0xff]
      %v1698 = vld [vmem:[%s242 + $0x64] sm:$0xff]
      %v1699 = vld [vmem:[%s242 + $0x6c] sm:$0xff]
      %v1700 = vld [vmem:[%s242 + $0x7c] sm:$0xff]
      %v1701 = vld [vmem:[%s242 + $0x84] sm:$0xff]
      %v1702 = vld [vmem:[%s242 + $0x94] sm:$0xff]
      %v1703 = vld [vmem:[%s242 + $0x9c] sm:$0xff]
      %v1704 = vld [vmem:[%s242 + $0xac] sm:$0xff]
      %v1705 = vld [vmem:[%s242 + $0xb4] sm:$0xff]
      %v1706 = vld [vmem:[%s242 + $0xc4] sm:$0xff]
      %v1707 = vld [vmem:[%s242 + $0xcc] sm:$0xff]
      %v1708 = vld [vmem:[%s242 + $0xdc] sm:$0xff]
      %v1709 = vld [vmem:[%s242 + $0xe4] sm:$0xff]
      %v1710 = vld [vmem:[%s242 + $0xf4] sm:$0xff]
      %v1711 = vld [vmem:[%s242 + $0xfc] sm:$0xff]
      %v1712 = vld [vmem:[%s242 + $0x10c] sm:$0xff]
      %v1713 = vld [vmem:[%s242 + $0x114] sm:$0xff]
      %v1714 = vld [vmem:[%s242 + $0x124] sm:$0xff]
      %v1715 = vld [vmem:[%s242 + $0x12c] sm:$0xff]
      %v1716 = vld [vmem:[%s242 + $0x13c] sm:$0xff]
      %v1717 = vld [vmem:[%s242 + $0x144] sm:$0xff]
      %v1718 = vld [vmem:[%s242 + $0x154] sm:$0xff]
      %v1719 = vld [vmem:[%s242 + $0x15c] sm:$0xff]
      %v1720 = vld [vmem:[%s242 + $0x16c] sm:$0xff]
      %v1721 = vld [vmem:[%s242 + $0x174] sm:$0xff]
      %s1722 = scalar_lea.vmem [#allocation2], 64
      %v1723 = vld [vmem:[%s1722] sm:$0xff]
      %v1724 = vld [vmem:[%s1722 + $0x8] sm:$0xff]
      %v1725 = vmul.f32 %v209, %v1690
      %v1726 = vmul.f32 %v210, %v1691
      %v1727 = vmul.f32 %v211, %v1692
      %v1728 = vmul.f32 %v212, %v1693
      %v1729 = vmul.f32 %v213, %v1694
      %v1730 = vmul.f32 %v214, %v1695
      %v1731 = vmul.f32 %v215, %v1696
      %v1732 = vmul.f32 %v216, %v1697
      %v1733 = vmul.f32 %v217, %v1698
      %v1734 = vmul.f32 %v218, %v1699
      %v1735 = vmul.f32 %v219, %v1700
      %v1736 = vmul.f32 %v220, %v1701
      %v1737 = vmul.f32 %v221, %v1702
      %v1738 = vmul.f32 %v222, %v1703
      %v1739 = vmul.f32 %v223, %v1704
      %v1740 = vmul.f32 %v224, %v1705
      %v1741 = vmul.f32 %v225, %v1706
      %v1742 = vmul.f32 %v226, %v1707
      %v1743 = vmul.f32 %v227, %v1708
      %v1744 = vmul.f32 %v228, %v1709
      %v1745 = vmul.f32 %v229, %v1710
      %v1746 = vmul.f32 %v230, %v1711
      %v1747 = vmul.f32 %v231, %v1712
      %v1748 = vmul.f32 %v232, %v1713
      %v1749 = vmul.f32 %v233, %v1714
      %v1750 = vmul.f32 %v234, %v1715
      %v1751 = vmul.f32 %v235, %v1716
      %v1752 = vmul.f32 %v236, %v1717
      %v1753 = vmul.f32 %v237, %v1718
      %v1754 = vmul.f32 %v238, %v1719
      %v1755 = vmul.f32 %v239, %v1720
      %v1756 = vmul.f32 %v240, %v1721
      %v1757 = vsel %vm309, %v1725, 0.0
      %1758 = vadd.xlane.f32.xlu0 %v1757
      %v1759 = vpop.xlane.xlu0 %1758
      %v1760 = vsel %vm309, %v1726, 0.0
      %1761 = vadd.xlane.f32.xlu0 %v1760
      %v1762 = vpop.xlane.xlu0 %1761
      %v1763 = vsel %vm309, %v1727, 0.0
      %1764 = vadd.xlane.f32.xlu0 %v1763
      %v1765 = vpop.xlane.xlu0 %1764
      %v1766 = vsel %vm309, %v1728, 0.0
      %1767 = vadd.xlane.f32.xlu0 %v1766
      %v1768 = vpop.xlane.xlu0 %1767
      %v1769 = vsel %vm309, %v1729, 0.0
      %1770 = vadd.xlane.f32.xlu0 %v1769
      %v1771 = vpop.xlane.xlu0 %1770
      %v1772 = vsel %vm309, %v1730, 0.0
      %1773 = vadd.xlane.f32.xlu0 %v1772
      %v1774 = vpop.xlane.xlu0 %1773
      %v1775 = vsel %vm309, %v1731, 0.0
      %1776 = vadd.xlane.f32.xlu0 %v1775
      %v1777 = vpop.xlane.xlu0 %1776
      %v1778 = vsel %vm309, %v1732, 0.0
      %1779 = vadd.xlane.f32.xlu0 %v1778
      %v1780 = vpop.xlane.xlu0 %1779
      %v1781 = vsel %vm309, %v1733, 0.0
      %1782 = vadd.xlane.f32.xlu0 %v1781
      %v1783 = vpop.xlane.xlu0 %1782
      %v1784 = vsel %vm309, %v1734, 0.0
      %1785 = vadd.xlane.f32.xlu0 %v1784
      %v1786 = vpop.xlane.xlu0 %1785
      %v1787 = vsel %vm309, %v1735, 0.0
      %1788 = vadd.xlane.f32.xlu0 %v1787
      %v1789 = vpop.xlane.xlu0 %1788
      %v1790 = vsel %vm309, %v1736, 0.0
      %1791 = vadd.xlane.f32.xlu0 %v1790
      %v1792 = vpop.xlane.xlu0 %1791
      %v1793 = vsel %vm309, %v1737, 0.0
      %1794 = vadd.xlane.f32.xlu0 %v1793
      %v1795 = vpop.xlane.xlu0 %1794
      %v1796 = vsel %vm309, %v1738, 0.0
      %1797 = vadd.xlane.f32.xlu0 %v1796
      %v1798 = vpop.xlane.xlu0 %1797
      %v1799 = vsel %vm309, %v1739, 0.0
      %1800 = vadd.xlane.f32.xlu0 %v1799
      %v1801 = vpop.xlane.xlu0 %1800
      %v1802 = vsel %vm309, %v1740, 0.0
      %1803 = vadd.xlane.f32.xlu0 %v1802
      %v1804 = vpop.xlane.xlu0 %1803
      %v1805 = vsel %vm309, %v1741, 0.0
      %1806 = vadd.xlane.f32.xlu0 %v1805
      %v1807 = vpop.xlane.xlu0 %1806
      %v1808 = vsel %vm309, %v1742, 0.0
      %1809 = vadd.xlane.f32.xlu0 %v1808
      %v1810 = vpop.xlane.xlu0 %1809
      %v1811 = vsel %vm309, %v1743, 0.0
      %1812 = vadd.xlane.f32.xlu0 %v1811
      %v1813 = vpop.xlane.xlu0 %1812
      %v1814 = vsel %vm309, %v1744, 0.0
      %1815 = vadd.xlane.f32.xlu0 %v1814
      %v1816 = vpop.xlane.xlu0 %1815
      %v1817 = vsel %vm309, %v1745, 0.0
      %1818 = vadd.xlane.f32.xlu0 %v1817
      %v1819 = vpop.xlane.xlu0 %1818
      %v1820 = vsel %vm309, %v1746, 0.0
      %1821 = vadd.xlane.f32.xlu0 %v1820
      %v1822 = vpop.xlane.xlu0 %1821
      %v1823 = vsel %vm309, %v1747, 0.0
      %1824 = vadd.xlane.f32.xlu0 %v1823
      %v1825 = vpop.xlane.xlu0 %1824
      %v1826 = vsel %vm309, %v1748, 0.0
      %1827 = vadd.xlane.f32.xlu0 %v1826
      %v1828 = vpop.xlane.xlu0 %1827
      %v1829 = vsel %vm309, %v1749, 0.0
      %1830 = vadd.xlane.f32.xlu0 %v1829
      %v1831 = vpop.xlane.xlu0 %1830
      %v1832 = vsel %vm309, %v1750, 0.0
      %1833 = vadd.xlane.f32.xlu0 %v1832
      %v1834 = vpop.xlane.xlu0 %1833
      %v1835 = vsel %vm309, %v1751, 0.0
      %1836 = vadd.xlane.f32.xlu0 %v1835
      %v1837 = vpop.xlane.xlu0 %1836
      %v1838 = vsel %vm309, %v1752, 0.0
      %1839 = vadd.xlane.f32.xlu0 %v1838
      %v1840 = vpop.xlane.xlu0 %1839
      %v1841 = vsel %vm309, %v1753, 0.0
      %1842 = vadd.xlane.f32.xlu0 %v1841
      %v1843 = vpop.xlane.xlu0 %1842
      %v1844 = vsel %vm309, %v1754, 0.0
      %1845 = vadd.xlane.f32.xlu0 %v1844
      %v1846 = vpop.xlane.xlu0 %1845
      %v1847 = vsel %vm309, %v1755, 0.0
      %1848 = vadd.xlane.f32.xlu0 %v1847
      %v1849 = vpop.xlane.xlu0 %1848
      %v1850 = vsel %vm309, %v1756, 0.0
      %1851 = vadd.xlane.f32.xlu0 %v1850
      %v1852 = vpop.xlane.xlu0 %1851
      %v1885 = vlaneseq
      %v1886 = vshrl.u32 %v1885, 7
      %v1887 = vsub.s32 %v439, %v1886
      %v1888 = vrot.slane %v1759, %v1887
      %v1889 = vlaneseq
      %v1890 = vshrl.u32 %v1889, 7
      %v1891 = vsub.s32 %v444, %v1890
      %v1892 = vrot.slane %v1762, %v1891
      %v1893 = vsel %vm449, %v1892, %v1888
      %v1894 = vlaneseq
      %v1895 = vshrl.u32 %v1894, 7
      %v1896 = vsub.s32 %v439, %v1895
      %v1897 = vrot.slane %v1765, %v1896
      %v1898 = vlaneseq
      %v1899 = vshrl.u32 %v1898, 7
      %v1900 = vsub.s32 %v444, %v1899
      %v1901 = vrot.slane %v1768, %v1900
      %v1902 = vsel %vm449, %v1901, %v1897
      %v1903 = vlaneseq
      %v1904 = vshrl.u32 %v1903, 7
      %v1905 = vsub.s32 %v439, %v1904
      %v1906 = vrot.slane %v1771, %v1905
      %v1907 = vlaneseq
      %v1908 = vshrl.u32 %v1907, 7
      %v1909 = vsub.s32 %v444, %v1908
      %v1910 = vrot.slane %v1774, %v1909
      %v1911 = vsel %vm449, %v1910, %v1906
      %v1912 = vlaneseq
      %v1913 = vshrl.u32 %v1912, 7
      %v1914 = vsub.s32 %v439, %v1913
      %v1915 = vrot.slane %v1777, %v1914
      %v1916 = vlaneseq
      %v1917 = vshrl.u32 %v1916, 7
      %v1918 = vsub.s32 %v444, %v1917
      %v1919 = vrot.slane %v1780, %v1918
      %v1920 = vsel %vm449, %v1919, %v1915
      %v1921 = vlaneseq
      %v1922 = vshrl.u32 %v1921, 7
      %v1923 = vsub.s32 %v439, %v1922
      %v1924 = vrot.slane %v1783, %v1923
      %v1925 = vlaneseq
      %v1926 = vshrl.u32 %v1925, 7
      %v1927 = vsub.s32 %v444, %v1926
      %v1928 = vrot.slane %v1786, %v1927
      %v1929 = vsel %vm449, %v1928, %v1924
      %v1930 = vlaneseq
      %v1931 = vshrl.u32 %v1930, 7
      %v1932 = vsub.s32 %v439, %v1931
      %v1933 = vrot.slane %v1789, %v1932
      %v1934 = vlaneseq
      %v1935 = vshrl.u32 %v1934, 7
      %v1936 = vsub.s32 %v444, %v1935
      %v1937 = vrot.slane %v1792, %v1936
      %v1938 = vsel %vm449, %v1937, %v1933
      %v1939 = vlaneseq
      %v1940 = vshrl.u32 %v1939, 7
      %v1941 = vsub.s32 %v439, %v1940
      %v1942 = vrot.slane %v1795, %v1941
      %v1943 = vlaneseq
      %v1944 = vshrl.u32 %v1943, 7
      %v1945 = vsub.s32 %v444, %v1944
      %v1946 = vrot.slane %v1798, %v1945
      %v1947 = vsel %vm449, %v1946, %v1942
      %v1948 = vlaneseq
      %v1949 = vshrl.u32 %v1948, 7
      %v1950 = vsub.s32 %v439, %v1949
      %v1951 = vrot.slane %v1801, %v1950
      %v1952 = vlaneseq
      %v1953 = vshrl.u32 %v1952, 7
      %v1954 = vsub.s32 %v444, %v1953
      %v1955 = vrot.slane %v1804, %v1954
      %v1956 = vsel %vm449, %v1955, %v1951
      %v1957 = vlaneseq
      %v1958 = vshrl.u32 %v1957, 7
      %v1959 = vsub.s32 %v439, %v1958
      %v1960 = vrot.slane %v1807, %v1959
      %v1961 = vlaneseq
      %v1962 = vshrl.u32 %v1961, 7
      %v1963 = vsub.s32 %v444, %v1962
      %v1964 = vrot.slane %v1810, %v1963
      %v1965 = vsel %vm449, %v1964, %v1960
      %v1966 = vlaneseq
      %v1967 = vshrl.u32 %v1966, 7
      %v1968 = vsub.s32 %v439, %v1967
      %v1969 = vrot.slane %v1813, %v1968
      %v1970 = vlaneseq
      %v1971 = vshrl.u32 %v1970, 7
      %v1972 = vsub.s32 %v444, %v1971
      %v1973 = vrot.slane %v1816, %v1972
      %v1974 = vsel %vm449, %v1973, %v1969
      %v1975 = vlaneseq
      %v1976 = vshrl.u32 %v1975, 7
      %v1977 = vsub.s32 %v439, %v1976
      %v1978 = vrot.slane %v1819, %v1977
      %v1979 = vlaneseq
      %v1980 = vshrl.u32 %v1979, 7
      %v1981 = vsub.s32 %v444, %v1980
      %v1982 = vrot.slane %v1822, %v1981
      %v1983 = vsel %vm449, %v1982, %v1978
      %v1984 = vlaneseq
      %v1985 = vshrl.u32 %v1984, 7
      %v1986 = vsub.s32 %v439, %v1985
      %v1987 = vrot.slane %v1825, %v1986
      %v1988 = vlaneseq
      %v1989 = vshrl.u32 %v1988, 7
      %v1990 = vsub.s32 %v444, %v1989
      %v1991 = vrot.slane %v1828, %v1990
      %v1992 = vsel %vm449, %v1991, %v1987
      %v1993 = vlaneseq
      %v1994 = vshrl.u32 %v1993, 7
      %v1995 = vsub.s32 %v439, %v1994
      %v1996 = vrot.slane %v1831, %v1995
      %v1997 = vlaneseq
      %v1998 = vshrl.u32 %v1997, 7
      %v1999 = vsub.s32 %v444, %v1998
      %v2000 = vrot.slane %v1834, %v1999
      %v2001 = vsel %vm449, %v2000, %v1996
      %v2002 = vlaneseq
      %v2003 = vshrl.u32 %v2002, 7
      %v2004 = vsub.s32 %v439, %v2003
      %v2005 = vrot.slane %v1837, %v2004
      %v2006 = vlaneseq
      %v2007 = vshrl.u32 %v2006, 7
      %v2008 = vsub.s32 %v444, %v2007
      %v2009 = vrot.slane %v1840, %v2008
      %v2010 = vsel %vm449, %v2009, %v2005
      %v2011 = vlaneseq
      %v2012 = vshrl.u32 %v2011, 7
      %v2013 = vsub.s32 %v439, %v2012
      %v2014 = vrot.slane %v1843, %v2013
      %v2015 = vlaneseq
      %v2016 = vshrl.u32 %v2015, 7
      %v2017 = vsub.s32 %v444, %v2016
      %v2018 = vrot.slane %v1846, %v2017
      %v2019 = vsel %vm449, %v2018, %v2014
      %v2020 = vlaneseq
      %v2021 = vshrl.u32 %v2020, 7
      %v2022 = vsub.s32 %v439, %v2021
      %v2023 = vrot.slane %v1849, %v2022
      %v2024 = vlaneseq
      %v2025 = vshrl.u32 %v2024, 7
      %v2026 = vsub.s32 %v444, %v2025
      %v2027 = vrot.slane %v1852, %v2026
      %v2028 = vsel %vm449, %v2027, %v2023
      %v2029 = vsel %vm586, %v1902, %v1893
      %v2030 = vsel %vm588, %v1911, %v2029
      %v2031 = vsel %vm590, %v1920, %v2030
      %v2032 = vsel %vm592, %v1929, %v2031
      %v2033 = vsel %vm594, %v1938, %v2032
      %v2034 = vsel %vm596, %v1947, %v2033
      %v2035 = vsel %vm598, %v1956, %v2034
      %v2036 = vsel %vm586, %v1974, %v1965
      %v2037 = vsel %vm588, %v1983, %v2036
      %v2038 = vsel %vm590, %v1992, %v2037
      %v2039 = vsel %vm592, %v2001, %v2038
      %v2040 = vsel %vm594, %v2010, %v2039
      %v2041 = vsel %vm596, %v2019, %v2040
      %v2042 = vsel %vm598, %v2028, %v2041
      %v2045 = vadd.f32 %v1723, %v2035
      %v2046 = vadd.f32 %v1724, %v2042
      %2047 = vst.msk [vmem:[%s1722] sm:$0xff] %vm189, %v2045
      %2048 = vst.msk [vmem:[%s1722 + $0x8] sm:$0xff] %vm189, %v2046
      %v2049 = vld [vmem:[%s242 + $0x5] sm:$0xff]
      %v2050 = vld [vmem:[%s242 + $0xd] sm:$0xff]
      %v2051 = vld [vmem:[%s242 + $0x1d] sm:$0xff]
      %v2052 = vld [vmem:[%s242 + $0x25] sm:$0xff]
      %v2053 = vld [vmem:[%s242 + $0x35] sm:$0xff]
      %v2054 = vld [vmem:[%s242 + $0x3d] sm:$0xff]
      %v2055 = vld [vmem:[%s242 + $0x4d] sm:$0xff]
      %v2056 = vld [vmem:[%s242 + $0x55] sm:$0xff]
      %v2057 = vld [vmem:[%s242 + $0x65] sm:$0xff]
      %v2058 = vld [vmem:[%s242 + $0x6d] sm:$0xff]
      %v2059 = vld [vmem:[%s242 + $0x7d] sm:$0xff]
      %v2060 = vld [vmem:[%s242 + $0x85] sm:$0xff]
      %v2061 = vld [vmem:[%s242 + $0x95] sm:$0xff]
      %v2062 = vld [vmem:[%s242 + $0x9d] sm:$0xff]
      %v2063 = vld [vmem:[%s242 + $0xad] sm:$0xff]
      %v2064 = vld [vmem:[%s242 + $0xb5] sm:$0xff]
      %v2065 = vld [vmem:[%s242 + $0xc5] sm:$0xff]
      %v2066 = vld [vmem:[%s242 + $0xcd] sm:$0xff]
      %v2067 = vld [vmem:[%s242 + $0xdd] sm:$0xff]
      %v2068 = vld [vmem:[%s242 + $0xe5] sm:$0xff]
      %v2069 = vld [vmem:[%s242 + $0xf5] sm:$0xff]
      %v2070 = vld [vmem:[%s242 + $0xfd] sm:$0xff]
      %v2071 = vld [vmem:[%s242 + $0x10d] sm:$0xff]
      %v2072 = vld [vmem:[%s242 + $0x115] sm:$0xff]
      %v2073 = vld [vmem:[%s242 + $0x125] sm:$0xff]
      %v2074 = vld [vmem:[%s242 + $0x12d] sm:$0xff]
      %v2075 = vld [vmem:[%s242 + $0x13d] sm:$0xff]
      %v2076 = vld [vmem:[%s242 + $0x145] sm:$0xff]
      %v2077 = vld [vmem:[%s242 + $0x155] sm:$0xff]
      %v2078 = vld [vmem:[%s242 + $0x15d] sm:$0xff]
      %v2079 = vld [vmem:[%s242 + $0x16d] sm:$0xff]
      %v2080 = vld [vmem:[%s242 + $0x175] sm:$0xff]
      %s2081 = scalar_lea.vmem [#allocation2], 80
      %v2082 = vld [vmem:[%s2081] sm:$0xff]
      %v2083 = vld [vmem:[%s2081 + $0x8] sm:$0xff]
      %v2084 = vmul.f32 %v209, %v2049
      %v2085 = vmul.f32 %v210, %v2050
      %v2086 = vmul.f32 %v211, %v2051
      %v2087 = vmul.f32 %v212, %v2052
      %v2088 = vmul.f32 %v213, %v2053
      %v2089 = vmul.f32 %v214, %v2054
      %v2090 = vmul.f32 %v215, %v2055
      %v2091 = vmul.f32 %v216, %v2056
      %v2092 = vmul.f32 %v217, %v2057
      %v2093 = vmul.f32 %v218, %v2058
      %v2094 = vmul.f32 %v219, %v2059
      %v2095 = vmul.f32 %v220, %v2060
      %v2096 = vmul.f32 %v221, %v2061
      %v2097 = vmul.f32 %v222, %v2062
      %v2098 = vmul.f32 %v223, %v2063
      %v2099 = vmul.f32 %v224, %v2064
      %v2100 = vmul.f32 %v225, %v2065
      %v2101 = vmul.f32 %v226, %v2066
      %v2102 = vmul.f32 %v227, %v2067
      %v2103 = vmul.f32 %v228, %v2068
      %v2104 = vmul.f32 %v229, %v2069
      %v2105 = vmul.f32 %v230, %v2070
      %v2106 = vmul.f32 %v231, %v2071
      %v2107 = vmul.f32 %v232, %v2072
      %v2108 = vmul.f32 %v233, %v2073
      %v2109 = vmul.f32 %v234, %v2074
      %v2110 = vmul.f32 %v235, %v2075
      %v2111 = vmul.f32 %v236, %v2076
      %v2112 = vmul.f32 %v237, %v2077
      %v2113 = vmul.f32 %v238, %v2078
      %v2114 = vmul.f32 %v239, %v2079
      %v2115 = vmul.f32 %v240, %v2080
      %v2116 = vsel %vm309, %v2084, 0.0
      %2117 = vadd.xlane.f32.xlu0 %v2116
      %v2118 = vpop.xlane.xlu0 %2117
      %v2119 = vsel %vm309, %v2085, 0.0
      %2120 = vadd.xlane.f32.xlu0 %v2119
      %v2121 = vpop.xlane.xlu0 %2120
      %v2122 = vsel %vm309, %v2086, 0.0
      %2123 = vadd.xlane.f32.xlu0 %v2122
      %v2124 = vpop.xlane.xlu0 %2123
      %v2125 = vsel %vm309, %v2087, 0.0
      %2126 = vadd.xlane.f32.xlu0 %v2125
      %v2127 = vpop.xlane.xlu0 %2126
      %v2128 = vsel %vm309, %v2088, 0.0
      %2129 = vadd.xlane.f32.xlu0 %v2128
      %v2130 = vpop.xlane.xlu0 %2129
      %v2131 = vsel %vm309, %v2089, 0.0
      %2132 = vadd.xlane.f32.xlu0 %v2131
      %v2133 = vpop.xlane.xlu0 %2132
      %v2134 = vsel %vm309, %v2090, 0.0
      %2135 = vadd.xlane.f32.xlu0 %v2134
      %v2136 = vpop.xlane.xlu0 %2135
      %v2137 = vsel %vm309, %v2091, 0.0
      %2138 = vadd.xlane.f32.xlu0 %v2137
      %v2139 = vpop.xlane.xlu0 %2138
      %v2140 = vsel %vm309, %v2092, 0.0
      %2141 = vadd.xlane.f32.xlu0 %v2140
      %v2142 = vpop.xlane.xlu0 %2141
      %v2143 = vsel %vm309, %v2093, 0.0
      %2144 = vadd.xlane.f32.xlu0 %v2143
      %v2145 = vpop.xlane.xlu0 %2144
      %v2146 = vsel %vm309, %v2094, 0.0
      %2147 = vadd.xlane.f32.xlu0 %v2146
      %v2148 = vpop.xlane.xlu0 %2147
      %v2149 = vsel %vm309, %v2095, 0.0
      %2150 = vadd.xlane.f32.xlu0 %v2149
      %v2151 = vpop.xlane.xlu0 %2150
      %v2152 = vsel %vm309, %v2096, 0.0
      %2153 = vadd.xlane.f32.xlu0 %v2152
      %v2154 = vpop.xlane.xlu0 %2153
      %v2155 = vsel %vm309, %v2097, 0.0
      %2156 = vadd.xlane.f32.xlu0 %v2155
      %v2157 = vpop.xlane.xlu0 %2156
      %v2158 = vsel %vm309, %v2098, 0.0
      %2159 = vadd.xlane.f32.xlu0 %v2158
      %v2160 = vpop.xlane.xlu0 %2159
      %v2161 = vsel %vm309, %v2099, 0.0
      %2162 = vadd.xlane.f32.xlu0 %v2161
      %v2163 = vpop.xlane.xlu0 %2162
      %v2164 = vsel %vm309, %v2100, 0.0
      %2165 = vadd.xlane.f32.xlu0 %v2164
      %v2166 = vpop.xlane.xlu0 %2165
      %v2167 = vsel %vm309, %v2101, 0.0
      %2168 = vadd.xlane.f32.xlu0 %v2167
      %v2169 = vpop.xlane.xlu0 %2168
      %v2170 = vsel %vm309, %v2102, 0.0
      %2171 = vadd.xlane.f32.xlu0 %v2170
      %v2172 = vpop.xlane.xlu0 %2171
      %v2173 = vsel %vm309, %v2103, 0.0
      %2174 = vadd.xlane.f32.xlu0 %v2173
      %v2175 = vpop.xlane.xlu0 %2174
      %v2176 = vsel %vm309, %v2104, 0.0
      %2177 = vadd.xlane.f32.xlu0 %v2176
      %v2178 = vpop.xlane.xlu0 %2177
      %v2179 = vsel %vm309, %v2105, 0.0
      %2180 = vadd.xlane.f32.xlu0 %v2179
      %v2181 = vpop.xlane.xlu0 %2180
      %v2182 = vsel %vm309, %v2106, 0.0
      %2183 = vadd.xlane.f32.xlu0 %v2182
      %v2184 = vpop.xlane.xlu0 %2183
      %v2185 = vsel %vm309, %v2107, 0.0
      %2186 = vadd.xlane.f32.xlu0 %v2185
      %v2187 = vpop.xlane.xlu0 %2186
      %v2188 = vsel %vm309, %v2108, 0.0
      %2189 = vadd.xlane.f32.xlu0 %v2188
      %v2190 = vpop.xlane.xlu0 %2189
      %v2191 = vsel %vm309, %v2109, 0.0
      %2192 = vadd.xlane.f32.xlu0 %v2191
      %v2193 = vpop.xlane.xlu0 %2192
      %v2194 = vsel %vm309, %v2110, 0.0
      %2195 = vadd.xlane.f32.xlu0 %v2194
      %v2196 = vpop.xlane.xlu0 %2195
      %v2197 = vsel %vm309, %v2111, 0.0
      %2198 = vadd.xlane.f32.xlu0 %v2197
      %v2199 = vpop.xlane.xlu0 %2198
      %v2200 = vsel %vm309, %v2112, 0.0
      %2201 = vadd.xlane.f32.xlu0 %v2200
      %v2202 = vpop.xlane.xlu0 %2201
      %v2203 = vsel %vm309, %v2113, 0.0
      %2204 = vadd.xlane.f32.xlu0 %v2203
      %v2205 = vpop.xlane.xlu0 %2204
      %v2206 = vsel %vm309, %v2114, 0.0
      %2207 = vadd.xlane.f32.xlu0 %v2206
      %v2208 = vpop.xlane.xlu0 %2207
      %v2209 = vsel %vm309, %v2115, 0.0
      %2210 = vadd.xlane.f32.xlu0 %v2209
      %v2211 = vpop.xlane.xlu0 %2210
      %v2244 = vlaneseq
      %v2245 = vshrl.u32 %v2244, 7
      %v2246 = vsub.s32 %v439, %v2245
      %v2247 = vrot.slane %v2118, %v2246
      %v2248 = vlaneseq
      %v2249 = vshrl.u32 %v2248, 7
      %v2250 = vsub.s32 %v444, %v2249
      %v2251 = vrot.slane %v2121, %v2250
      %v2252 = vsel %vm449, %v2251, %v2247
      %v2253 = vlaneseq
      %v2254 = vshrl.u32 %v2253, 7
      %v2255 = vsub.s32 %v439, %v2254
      %v2256 = vrot.slane %v2124, %v2255
      %v2257 = vlaneseq
      %v2258 = vshrl.u32 %v2257, 7
      %v2259 = vsub.s32 %v444, %v2258
      %v2260 = vrot.slane %v2127, %v2259
      %v2261 = vsel %vm449, %v2260, %v2256
      %v2262 = vlaneseq
      %v2263 = vshrl.u32 %v2262, 7
      %v2264 = vsub.s32 %v439, %v2263
      %v2265 = vrot.slane %v2130, %v2264
      %v2266 = vlaneseq
      %v2267 = vshrl.u32 %v2266, 7
      %v2268 = vsub.s32 %v444, %v2267
      %v2269 = vrot.slane %v2133, %v2268
      %v2270 = vsel %vm449, %v2269, %v2265
      %v2271 = vlaneseq
      %v2272 = vshrl.u32 %v2271, 7
      %v2273 = vsub.s32 %v439, %v2272
      %v2274 = vrot.slane %v2136, %v2273
      %v2275 = vlaneseq
      %v2276 = vshrl.u32 %v2275, 7
      %v2277 = vsub.s32 %v444, %v2276
      %v2278 = vrot.slane %v2139, %v2277
      %v2279 = vsel %vm449, %v2278, %v2274
      %v2280 = vlaneseq
      %v2281 = vshrl.u32 %v2280, 7
      %v2282 = vsub.s32 %v439, %v2281
      %v2283 = vrot.slane %v2142, %v2282
      %v2284 = vlaneseq
      %v2285 = vshrl.u32 %v2284, 7
      %v2286 = vsub.s32 %v444, %v2285
      %v2287 = vrot.slane %v2145, %v2286
      %v2288 = vsel %vm449, %v2287, %v2283
      %v2289 = vlaneseq
      %v2290 = vshrl.u32 %v2289, 7
      %v2291 = vsub.s32 %v439, %v2290
      %v2292 = vrot.slane %v2148, %v2291
      %v2293 = vlaneseq
      %v2294 = vshrl.u32 %v2293, 7
      %v2295 = vsub.s32 %v444, %v2294
      %v2296 = vrot.slane %v2151, %v2295
      %v2297 = vsel %vm449, %v2296, %v2292
      %v2298 = vlaneseq
      %v2299 = vshrl.u32 %v2298, 7
      %v2300 = vsub.s32 %v439, %v2299
      %v2301 = vrot.slane %v2154, %v2300
      %v2302 = vlaneseq
      %v2303 = vshrl.u32 %v2302, 7
      %v2304 = vsub.s32 %v444, %v2303
      %v2305 = vrot.slane %v2157, %v2304
      %v2306 = vsel %vm449, %v2305, %v2301
      %v2307 = vlaneseq
      %v2308 = vshrl.u32 %v2307, 7
      %v2309 = vsub.s32 %v439, %v2308
      %v2310 = vrot.slane %v2160, %v2309
      %v2311 = vlaneseq
      %v2312 = vshrl.u32 %v2311, 7
      %v2313 = vsub.s32 %v444, %v2312
      %v2314 = vrot.slane %v2163, %v2313
      %v2315 = vsel %vm449, %v2314, %v2310
      %v2316 = vlaneseq
      %v2317 = vshrl.u32 %v2316, 7
      %v2318 = vsub.s32 %v439, %v2317
      %v2319 = vrot.slane %v2166, %v2318
      %v2320 = vlaneseq
      %v2321 = vshrl.u32 %v2320, 7
      %v2322 = vsub.s32 %v444, %v2321
      %v2323 = vrot.slane %v2169, %v2322
      %v2324 = vsel %vm449, %v2323, %v2319
      %v2325 = vlaneseq
      %v2326 = vshrl.u32 %v2325, 7
      %v2327 = vsub.s32 %v439, %v2326
      %v2328 = vrot.slane %v2172, %v2327
      %v2329 = vlaneseq
      %v2330 = vshrl.u32 %v2329, 7
      %v2331 = vsub.s32 %v444, %v2330
      %v2332 = vrot.slane %v2175, %v2331
      %v2333 = vsel %vm449, %v2332, %v2328
      %v2334 = vlaneseq
      %v2335 = vshrl.u32 %v2334, 7
      %v2336 = vsub.s32 %v439, %v2335
      %v2337 = vrot.slane %v2178, %v2336
      %v2338 = vlaneseq
      %v2339 = vshrl.u32 %v2338, 7
      %v2340 = vsub.s32 %v444, %v2339
      %v2341 = vrot.slane %v2181, %v2340
      %v2342 = vsel %vm449, %v2341, %v2337
      %v2343 = vlaneseq
      %v2344 = vshrl.u32 %v2343, 7
      %v2345 = vsub.s32 %v439, %v2344
      %v2346 = vrot.slane %v2184, %v2345
      %v2347 = vlaneseq
      %v2348 = vshrl.u32 %v2347, 7
      %v2349 = vsub.s32 %v444, %v2348
      %v2350 = vrot.slane %v2187, %v2349
      %v2351 = vsel %vm449, %v2350, %v2346
      %v2352 = vlaneseq
      %v2353 = vshrl.u32 %v2352, 7
      %v2354 = vsub.s32 %v439, %v2353
      %v2355 = vrot.slane %v2190, %v2354
      %v2356 = vlaneseq
      %v2357 = vshrl.u32 %v2356, 7
      %v2358 = vsub.s32 %v444, %v2357
      %v2359 = vrot.slane %v2193, %v2358
      %v2360 = vsel %vm449, %v2359, %v2355
      %v2361 = vlaneseq
      %v2362 = vshrl.u32 %v2361, 7
      %v2363 = vsub.s32 %v439, %v2362
      %v2364 = vrot.slane %v2196, %v2363
      %v2365 = vlaneseq
      %v2366 = vshrl.u32 %v2365, 7
      %v2367 = vsub.s32 %v444, %v2366
      %v2368 = vrot.slane %v2199, %v2367
      %v2369 = vsel %vm449, %v2368, %v2364
      %v2370 = vlaneseq
      %v2371 = vshrl.u32 %v2370, 7
      %v2372 = vsub.s32 %v439, %v2371
      %v2373 = vrot.slane %v2202, %v2372
      %v2374 = vlaneseq
      %v2375 = vshrl.u32 %v2374, 7
      %v2376 = vsub.s32 %v444, %v2375
      %v2377 = vrot.slane %v2205, %v2376
      %v2378 = vsel %vm449, %v2377, %v2373
      %v2379 = vlaneseq
      %v2380 = vshrl.u32 %v2379, 7
      %v2381 = vsub.s32 %v439, %v2380
      %v2382 = vrot.slane %v2208, %v2381
      %v2383 = vlaneseq
      %v2384 = vshrl.u32 %v2383, 7
      %v2385 = vsub.s32 %v444, %v2384
      %v2386 = vrot.slane %v2211, %v2385
      %v2387 = vsel %vm449, %v2386, %v2382
      %v2388 = vsel %vm586, %v2261, %v2252
      %v2389 = vsel %vm588, %v2270, %v2388
      %v2390 = vsel %vm590, %v2279, %v2389
      %v2391 = vsel %vm592, %v2288, %v2390
      %v2392 = vsel %vm594, %v2297, %v2391
      %v2393 = vsel %vm596, %v2306, %v2392
      %v2394 = vsel %vm598, %v2315, %v2393
      %v2395 = vsel %vm586, %v2333, %v2324
      %v2396 = vsel %vm588, %v2342, %v2395
      %v2397 = vsel %vm590, %v2351, %v2396
      %v2398 = vsel %vm592, %v2360, %v2397
      %v2399 = vsel %vm594, %v2369, %v2398
      %v2400 = vsel %vm596, %v2378, %v2399
      %v2401 = vsel %vm598, %v2387, %v2400
      %v2404 = vadd.f32 %v2082, %v2394
      %v2405 = vadd.f32 %v2083, %v2401
      %2406 = vst.msk [vmem:[%s2081] sm:$0xff] %vm189, %v2404
      %2407 = vst.msk [vmem:[%s2081 + $0x8] sm:$0xff] %vm189, %v2405
      %v2408 = vld [vmem:[%s242 + $0x6] sm:$0xff]
      %v2409 = vld [vmem:[%s242 + $0xe] sm:$0xff]
      %v2410 = vld [vmem:[%s242 + $0x1e] sm:$0xff]
      %v2411 = vld [vmem:[%s242 + $0x26] sm:$0xff]
      %v2412 = vld [vmem:[%s242 + $0x36] sm:$0xff]
      %v2413 = vld [vmem:[%s242 + $0x3e] sm:$0xff]
      %v2414 = vld [vmem:[%s242 + $0x4e] sm:$0xff]
      %v2415 = vld [vmem:[%s242 + $0x56] sm:$0xff]
      %v2416 = vld [vmem:[%s242 + $0x66] sm:$0xff]
      %v2417 = vld [vmem:[%s242 + $0x6e] sm:$0xff]
      %v2418 = vld [vmem:[%s242 + $0x7e] sm:$0xff]
      %v2419 = vld [vmem:[%s242 + $0x86] sm:$0xff]
      %v2420 = vld [vmem:[%s242 + $0x96] sm:$0xff]
      %v2421 = vld [vmem:[%s242 + $0x9e] sm:$0xff]
      %v2422 = vld [vmem:[%s242 + $0xae] sm:$0xff]
      %v2423 = vld [vmem:[%s242 + $0xb6] sm:$0xff]
      %v2424 = vld [vmem:[%s242 + $0xc6] sm:$0xff]
      %v2425 = vld [vmem:[%s242 + $0xce] sm:$0xff]
      %v2426 = vld [vmem:[%s242 + $0xde] sm:$0xff]
      %v2427 = vld [vmem:[%s242 + $0xe6] sm:$0xff]
      %v2428 = vld [vmem:[%s242 + $0xf6] sm:$0xff]
      %v2429 = vld [vmem:[%s242 + $0xfe] sm:$0xff]
      %v2430 = vld [vmem:[%s242 + $0x10e] sm:$0xff]
      %v2431 = vld [vmem:[%s242 + $0x116] sm:$0xff]
      %v2432 = vld [vmem:[%s242 + $0x126] sm:$0xff]
      %v2433 = vld [vmem:[%s242 + $0x12e] sm:$0xff]
      %v2434 = vld [vmem:[%s242 + $0x13e] sm:$0xff]
      %v2435 = vld [vmem:[%s242 + $0x146] sm:$0xff]
      %v2436 = vld [vmem:[%s242 + $0x156] sm:$0xff]
      %v2437 = vld [vmem:[%s242 + $0x15e] sm:$0xff]
      %v2438 = vld [vmem:[%s242 + $0x16e] sm:$0xff]
      %v2439 = vld [vmem:[%s242 + $0x176] sm:$0xff]
      %s2440 = scalar_lea.vmem [#allocation2], 96
      %v2441 = vld [vmem:[%s2440] sm:$0xff]
      %v2442 = vld [vmem:[%s2440 + $0x8] sm:$0xff]
      %v2443 = vmul.f32 %v209, %v2408
      %v2444 = vmul.f32 %v210, %v2409
      %v2445 = vmul.f32 %v211, %v2410
      %v2446 = vmul.f32 %v212, %v2411
      %v2447 = vmul.f32 %v213, %v2412
      %v2448 = vmul.f32 %v214, %v2413
      %v2449 = vmul.f32 %v215, %v2414
      %v2450 = vmul.f32 %v216, %v2415
      %v2451 = vmul.f32 %v217, %v2416
      %v2452 = vmul.f32 %v218, %v2417
      %v2453 = vmul.f32 %v219, %v2418
      %v2454 = vmul.f32 %v220, %v2419
      %v2455 = vmul.f32 %v221, %v2420
      %v2456 = vmul.f32 %v222, %v2421
      %v2457 = vmul.f32 %v223, %v2422
      %v2458 = vmul.f32 %v224, %v2423
      %v2459 = vmul.f32 %v225, %v2424
      %v2460 = vmul.f32 %v226, %v2425
      %v2461 = vmul.f32 %v227, %v2426
      %v2462 = vmul.f32 %v228, %v2427
      %v2463 = vmul.f32 %v229, %v2428
      %v2464 = vmul.f32 %v230, %v2429
      %v2465 = vmul.f32 %v231, %v2430
      %v2466 = vmul.f32 %v232, %v2431
      %v2467 = vmul.f32 %v233, %v2432
      %v2468 = vmul.f32 %v234, %v2433
      %v2469 = vmul.f32 %v235, %v2434
      %v2470 = vmul.f32 %v236, %v2435
      %v2471 = vmul.f32 %v237, %v2436
      %v2472 = vmul.f32 %v238, %v2437
      %v2473 = vmul.f32 %v239, %v2438
      %v2474 = vmul.f32 %v240, %v2439
      %v2475 = vsel %vm309, %v2443, 0.0
      %2476 = vadd.xlane.f32.xlu0 %v2475
      %v2477 = vpop.xlane.xlu0 %2476
      %v2478 = vsel %vm309, %v2444, 0.0
      %2479 = vadd.xlane.f32.xlu0 %v2478
      %v2480 = vpop.xlane.xlu0 %2479
      %v2481 = vsel %vm309, %v2445, 0.0
      %2482 = vadd.xlane.f32.xlu0 %v2481
      %v2483 = vpop.xlane.xlu0 %2482
      %v2484 = vsel %vm309, %v2446, 0.0
      %2485 = vadd.xlane.f32.xlu0 %v2484
      %v2486 = vpop.xlane.xlu0 %2485
      %v2487 = vsel %vm309, %v2447, 0.0
      %2488 = vadd.xlane.f32.xlu0 %v2487
      %v2489 = vpop.xlane.xlu0 %2488
      %v2490 = vsel %vm309, %v2448, 0.0
      %2491 = vadd.xlane.f32.xlu0 %v2490
      %v2492 = vpop.xlane.xlu0 %2491
      %v2493 = vsel %vm309, %v2449, 0.0
      %2494 = vadd.xlane.f32.xlu0 %v2493
      %v2495 = vpop.xlane.xlu0 %2494
      %v2496 = vsel %vm309, %v2450, 0.0
      %2497 = vadd.xlane.f32.xlu0 %v2496
      %v2498 = vpop.xlane.xlu0 %2497
      %v2499 = vsel %vm309, %v2451, 0.0
      %2500 = vadd.xlane.f32.xlu0 %v2499
      %v2501 = vpop.xlane.xlu0 %2500
      %v2502 = vsel %vm309, %v2452, 0.0
      %2503 = vadd.xlane.f32.xlu0 %v2502
      %v2504 = vpop.xlane.xlu0 %2503
      %v2505 = vsel %vm309, %v2453, 0.0
      %2506 = vadd.xlane.f32.xlu0 %v2505
      %v2507 = vpop.xlane.xlu0 %2506
      %v2508 = vsel %vm309, %v2454, 0.0
      %2509 = vadd.xlane.f32.xlu0 %v2508
      %v2510 = vpop.xlane.xlu0 %2509
      %v2511 = vsel %vm309, %v2455, 0.0
      %2512 = vadd.xlane.f32.xlu0 %v2511
      %v2513 = vpop.xlane.xlu0 %2512
      %v2514 = vsel %vm309, %v2456, 0.0
      %2515 = vadd.xlane.f32.xlu0 %v2514
      %v2516 = vpop.xlane.xlu0 %2515
      %v2517 = vsel %vm309, %v2457, 0.0
      %2518 = vadd.xlane.f32.xlu0 %v2517
      %v2519 = vpop.xlane.xlu0 %2518
      %v2520 = vsel %vm309, %v2458, 0.0
      %2521 = vadd.xlane.f32.xlu0 %v2520
      %v2522 = vpop.xlane.xlu0 %2521
      %v2523 = vsel %vm309, %v2459, 0.0
      %2524 = vadd.xlane.f32.xlu0 %v2523
      %v2525 = vpop.xlane.xlu0 %2524
      %v2526 = vsel %vm309, %v2460, 0.0
      %2527 = vadd.xlane.f32.xlu0 %v2526
      %v2528 = vpop.xlane.xlu0 %2527
      %v2529 = vsel %vm309, %v2461, 0.0
      %2530 = vadd.xlane.f32.xlu0 %v2529
      %v2531 = vpop.xlane.xlu0 %2530
      %v2532 = vsel %vm309, %v2462, 0.0
      %2533 = vadd.xlane.f32.xlu0 %v2532
      %v2534 = vpop.xlane.xlu0 %2533
      %v2535 = vsel %vm309, %v2463, 0.0
      %2536 = vadd.xlane.f32.xlu0 %v2535
      %v2537 = vpop.xlane.xlu0 %2536
      %v2538 = vsel %vm309, %v2464, 0.0
      %2539 = vadd.xlane.f32.xlu0 %v2538
      %v2540 = vpop.xlane.xlu0 %2539
      %v2541 = vsel %vm309, %v2465, 0.0
      %2542 = vadd.xlane.f32.xlu0 %v2541
      %v2543 = vpop.xlane.xlu0 %2542
      %v2544 = vsel %vm309, %v2466, 0.0
      %2545 = vadd.xlane.f32.xlu0 %v2544
      %v2546 = vpop.xlane.xlu0 %2545
      %v2547 = vsel %vm309, %v2467, 0.0
      %2548 = vadd.xlane.f32.xlu0 %v2547
      %v2549 = vpop.xlane.xlu0 %2548
      %v2550 = vsel %vm309, %v2468, 0.0
      %2551 = vadd.xlane.f32.xlu0 %v2550
      %v2552 = vpop.xlane.xlu0 %2551
      %v2553 = vsel %vm309, %v2469, 0.0
      %2554 = vadd.xlane.f32.xlu0 %v2553
      %v2555 = vpop.xlane.xlu0 %2554
      %v2556 = vsel %vm309, %v2470, 0.0
      %2557 = vadd.xlane.f32.xlu0 %v2556
      %v2558 = vpop.xlane.xlu0 %2557
      %v2559 = vsel %vm309, %v2471, 0.0
      %2560 = vadd.xlane.f32.xlu0 %v2559
      %v2561 = vpop.xlane.xlu0 %2560
      %v2562 = vsel %vm309, %v2472, 0.0
      %2563 = vadd.xlane.f32.xlu0 %v2562
      %v2564 = vpop.xlane.xlu0 %2563
      %v2565 = vsel %vm309, %v2473, 0.0
      %2566 = vadd.xlane.f32.xlu0 %v2565
      %v2567 = vpop.xlane.xlu0 %2566
      %v2568 = vsel %vm309, %v2474, 0.0
      %2569 = vadd.xlane.f32.xlu0 %v2568
      %v2570 = vpop.xlane.xlu0 %2569
      %v2603 = vlaneseq
      %v2604 = vshrl.u32 %v2603, 7
      %v2605 = vsub.s32 %v439, %v2604
      %v2606 = vrot.slane %v2477, %v2605
      %v2607 = vlaneseq
      %v2608 = vshrl.u32 %v2607, 7
      %v2609 = vsub.s32 %v444, %v2608
      %v2610 = vrot.slane %v2480, %v2609
      %v2611 = vsel %vm449, %v2610, %v2606
      %v2612 = vlaneseq
      %v2613 = vshrl.u32 %v2612, 7
      %v2614 = vsub.s32 %v439, %v2613
      %v2615 = vrot.slane %v2483, %v2614
      %v2616 = vlaneseq
      %v2617 = vshrl.u32 %v2616, 7
      %v2618 = vsub.s32 %v444, %v2617
      %v2619 = vrot.slane %v2486, %v2618
      %v2620 = vsel %vm449, %v2619, %v2615
      %v2621 = vlaneseq
      %v2622 = vshrl.u32 %v2621, 7
      %v2623 = vsub.s32 %v439, %v2622
      %v2624 = vrot.slane %v2489, %v2623
      %v2625 = vlaneseq
      %v2626 = vshrl.u32 %v2625, 7
      %v2627 = vsub.s32 %v444, %v2626
      %v2628 = vrot.slane %v2492, %v2627
      %v2629 = vsel %vm449, %v2628, %v2624
      %v2630 = vlaneseq
      %v2631 = vshrl.u32 %v2630, 7
      %v2632 = vsub.s32 %v439, %v2631
      %v2633 = vrot.slane %v2495, %v2632
      %v2634 = vlaneseq
      %v2635 = vshrl.u32 %v2634, 7
      %v2636 = vsub.s32 %v444, %v2635
      %v2637 = vrot.slane %v2498, %v2636
      %v2638 = vsel %vm449, %v2637, %v2633
      %v2639 = vlaneseq
      %v2640 = vshrl.u32 %v2639, 7
      %v2641 = vsub.s32 %v439, %v2640
      %v2642 = vrot.slane %v2501, %v2641
      %v2643 = vlaneseq
      %v2644 = vshrl.u32 %v2643, 7
      %v2645 = vsub.s32 %v444, %v2644
      %v2646 = vrot.slane %v2504, %v2645
      %v2647 = vsel %vm449, %v2646, %v2642
      %v2648 = vlaneseq
      %v2649 = vshrl.u32 %v2648, 7
      %v2650 = vsub.s32 %v439, %v2649
      %v2651 = vrot.slane %v2507, %v2650
      %v2652 = vlaneseq
      %v2653 = vshrl.u32 %v2652, 7
      %v2654 = vsub.s32 %v444, %v2653
      %v2655 = vrot.slane %v2510, %v2654
      %v2656 = vsel %vm449, %v2655, %v2651
      %v2657 = vlaneseq
      %v2658 = vshrl.u32 %v2657, 7
      %v2659 = vsub.s32 %v439, %v2658
      %v2660 = vrot.slane %v2513, %v2659
      %v2661 = vlaneseq
      %v2662 = vshrl.u32 %v2661, 7
      %v2663 = vsub.s32 %v444, %v2662
      %v2664 = vrot.slane %v2516, %v2663
      %v2665 = vsel %vm449, %v2664, %v2660
      %v2666 = vlaneseq
      %v2667 = vshrl.u32 %v2666, 7
      %v2668 = vsub.s32 %v439, %v2667
      %v2669 = vrot.slane %v2519, %v2668
      %v2670 = vlaneseq
      %v2671 = vshrl.u32 %v2670, 7
      %v2672 = vsub.s32 %v444, %v2671
      %v2673 = vrot.slane %v2522, %v2672
      %v2674 = vsel %vm449, %v2673, %v2669
      %v2675 = vlaneseq
      %v2676 = vshrl.u32 %v2675, 7
      %v2677 = vsub.s32 %v439, %v2676
      %v2678 = vrot.slane %v2525, %v2677
      %v2679 = vlaneseq
      %v2680 = vshrl.u32 %v2679, 7
      %v2681 = vsub.s32 %v444, %v2680
      %v2682 = vrot.slane %v2528, %v2681
      %v2683 = vsel %vm449, %v2682, %v2678
      %v2684 = vlaneseq
      %v2685 = vshrl.u32 %v2684, 7
      %v2686 = vsub.s32 %v439, %v2685
      %v2687 = vrot.slane %v2531, %v2686
      %v2688 = vlaneseq
      %v2689 = vshrl.u32 %v2688, 7
      %v2690 = vsub.s32 %v444, %v2689
      %v2691 = vrot.slane %v2534, %v2690
      %v2692 = vsel %vm449, %v2691, %v2687
      %v2693 = vlaneseq
      %v2694 = vshrl.u32 %v2693, 7
      %v2695 = vsub.s32 %v439, %v2694
      %v2696 = vrot.slane %v2537, %v2695
      %v2697 = vlaneseq
      %v2698 = vshrl.u32 %v2697, 7
      %v2699 = vsub.s32 %v444, %v2698
      %v2700 = vrot.slane %v2540, %v2699
      %v2701 = vsel %vm449, %v2700, %v2696
      %v2702 = vlaneseq
      %v2703 = vshrl.u32 %v2702, 7
      %v2704 = vsub.s32 %v439, %v2703
      %v2705 = vrot.slane %v2543, %v2704
      %v2706 = vlaneseq
      %v2707 = vshrl.u32 %v2706, 7
      %v2708 = vsub.s32 %v444, %v2707
      %v2709 = vrot.slane %v2546, %v2708
      %v2710 = vsel %vm449, %v2709, %v2705
      %v2711 = vlaneseq
      %v2712 = vshrl.u32 %v2711, 7
      %v2713 = vsub.s32 %v439, %v2712
      %v2714 = vrot.slane %v2549, %v2713
      %v2715 = vlaneseq
      %v2716 = vshrl.u32 %v2715, 7
      %v2717 = vsub.s32 %v444, %v2716
      %v2718 = vrot.slane %v2552, %v2717
      %v2719 = vsel %vm449, %v2718, %v2714
      %v2720 = vlaneseq
      %v2721 = vshrl.u32 %v2720, 7
      %v2722 = vsub.s32 %v439, %v2721
      %v2723 = vrot.slane %v2555, %v2722
      %v2724 = vlaneseq
      %v2725 = vshrl.u32 %v2724, 7
      %v2726 = vsub.s32 %v444, %v2725
      %v2727 = vrot.slane %v2558, %v2726
      %v2728 = vsel %vm449, %v2727, %v2723
      %v2729 = vlaneseq
      %v2730 = vshrl.u32 %v2729, 7
      %v2731 = vsub.s32 %v439, %v2730
      %v2732 = vrot.slane %v2561, %v2731
      %v2733 = vlaneseq
      %v2734 = vshrl.u32 %v2733, 7
      %v2735 = vsub.s32 %v444, %v2734
      %v2736 = vrot.slane %v2564, %v2735
      %v2737 = vsel %vm449, %v2736, %v2732
      %v2738 = vlaneseq
      %v2739 = vshrl.u32 %v2738, 7
      %v2740 = vsub.s32 %v439, %v2739
      %v2741 = vrot.slane %v2567, %v2740
      %v2742 = vlaneseq
      %v2743 = vshrl.u32 %v2742, 7
      %v2744 = vsub.s32 %v444, %v2743
      %v2745 = vrot.slane %v2570, %v2744
      %v2746 = vsel %vm449, %v2745, %v2741
      %v2747 = vsel %vm586, %v2620, %v2611
      %v2748 = vsel %vm588, %v2629, %v2747
      %v2749 = vsel %vm590, %v2638, %v2748
      %v2750 = vsel %vm592, %v2647, %v2749
      %v2751 = vsel %vm594, %v2656, %v2750
      %v2752 = vsel %vm596, %v2665, %v2751
      %v2753 = vsel %vm598, %v2674, %v2752
      %v2754 = vsel %vm586, %v2692, %v2683
      %v2755 = vsel %vm588, %v2701, %v2754
      %v2756 = vsel %vm590, %v2710, %v2755
      %v2757 = vsel %vm592, %v2719, %v2756
      %v2758 = vsel %vm594, %v2728, %v2757
      %v2759 = vsel %vm596, %v2737, %v2758
      %v2760 = vsel %vm598, %v2746, %v2759
      %v2763 = vadd.f32 %v2441, %v2753
      %v2764 = vadd.f32 %v2442, %v2760
      %2765 = vst.msk [vmem:[%s2440] sm:$0xff] %vm189, %v2763
      %2766 = vst.msk [vmem:[%s2440 + $0x8] sm:$0xff] %vm189, %v2764
      %v2767 = vld [vmem:[%s242 + $0x7] sm:$0xff]
      %v2768 = vld [vmem:[%s242 + $0xf] sm:$0xff]
      %v2769 = vld [vmem:[%s242 + $0x1f] sm:$0xff]
      %v2770 = vld [vmem:[%s242 + $0x27] sm:$0xff]
      %v2771 = vld [vmem:[%s242 + $0x37] sm:$0xff]
      %v2772 = vld [vmem:[%s242 + $0x3f] sm:$0xff]
      %v2773 = vld [vmem:[%s242 + $0x4f] sm:$0xff]
      %v2774 = vld [vmem:[%s242 + $0x57] sm:$0xff]
      %v2775 = vld [vmem:[%s242 + $0x67] sm:$0xff]
      %v2776 = vld [vmem:[%s242 + $0x6f] sm:$0xff]
      %v2777 = vld [vmem:[%s242 + $0x7f] sm:$0xff]
      %v2778 = vld [vmem:[%s242 + $0x87] sm:$0xff]
      %v2779 = vld [vmem:[%s242 + $0x97] sm:$0xff]
      %v2780 = vld [vmem:[%s242 + $0x9f] sm:$0xff]
      %v2781 = vld [vmem:[%s242 + $0xaf] sm:$0xff]
      %v2782 = vld [vmem:[%s242 + $0xb7] sm:$0xff]
      %v2783 = vld [vmem:[%s242 + $0xc7] sm:$0xff]
      %v2784 = vld [vmem:[%s242 + $0xcf] sm:$0xff]
      %v2785 = vld [vmem:[%s242 + $0xdf] sm:$0xff]
      %v2786 = vld [vmem:[%s242 + $0xe7] sm:$0xff]
      %v2787 = vld [vmem:[%s242 + $0xf7] sm:$0xff]
      %v2788 = vld [vmem:[%s242 + $0xff] sm:$0xff]
      %v2789 = vld [vmem:[%s242 + $0x10f] sm:$0xff]
      %v2790 = vld [vmem:[%s242 + $0x117] sm:$0xff]
      %v2791 = vld [vmem:[%s242 + $0x127] sm:$0xff]
      %v2792 = vld [vmem:[%s242 + $0x12f] sm:$0xff]
      %v2793 = vld [vmem:[%s242 + $0x13f] sm:$0xff]
      %v2794 = vld [vmem:[%s242 + $0x147] sm:$0xff]
      %v2795 = vld [vmem:[%s242 + $0x157] sm:$0xff]
      %v2796 = vld [vmem:[%s242 + $0x15f] sm:$0xff]
      %v2797 = vld [vmem:[%s242 + $0x16f] sm:$0xff]
      %v2798 = vld [vmem:[%s242 + $0x177] sm:$0xff]
      %s2799 = scalar_lea.vmem [#allocation2], 112
      %v2800 = vld [vmem:[%s2799] sm:$0xff]
      %v2801 = vld [vmem:[%s2799 + $0x8] sm:$0xff]
      %v2802 = vmul.f32 %v209, %v2767
      %v2803 = vmul.f32 %v210, %v2768
      %v2804 = vmul.f32 %v211, %v2769
      %v2805 = vmul.f32 %v212, %v2770
      %v2806 = vmul.f32 %v213, %v2771
      %v2807 = vmul.f32 %v214, %v2772
      %v2808 = vmul.f32 %v215, %v2773
      %v2809 = vmul.f32 %v216, %v2774
      %v2810 = vmul.f32 %v217, %v2775
      %v2811 = vmul.f32 %v218, %v2776
      %v2812 = vmul.f32 %v219, %v2777
      %v2813 = vmul.f32 %v220, %v2778
      %v2814 = vmul.f32 %v221, %v2779
      %v2815 = vmul.f32 %v222, %v2780
      %v2816 = vmul.f32 %v223, %v2781
      %v2817 = vmul.f32 %v224, %v2782
      %v2818 = vmul.f32 %v225, %v2783
      %v2819 = vmul.f32 %v226, %v2784
      %v2820 = vmul.f32 %v227, %v2785
      %v2821 = vmul.f32 %v228, %v2786
      %v2822 = vmul.f32 %v229, %v2787
      %v2823 = vmul.f32 %v230, %v2788
      %v2824 = vmul.f32 %v231, %v2789
      %v2825 = vmul.f32 %v232, %v2790
      %v2826 = vmul.f32 %v233, %v2791
      %v2827 = vmul.f32 %v234, %v2792
      %v2828 = vmul.f32 %v235, %v2793
      %v2829 = vmul.f32 %v236, %v2794
      %v2830 = vmul.f32 %v237, %v2795
      %v2831 = vmul.f32 %v238, %v2796
      %v2832 = vmul.f32 %v239, %v2797
      %v2833 = vmul.f32 %v240, %v2798
      %v2834 = vsel %vm309, %v2802, 0.0
      %2835 = vadd.xlane.f32.xlu0 %v2834
      %v2836 = vpop.xlane.xlu0 %2835
      %v2837 = vsel %vm309, %v2803, 0.0
      %2838 = vadd.xlane.f32.xlu0 %v2837
      %v2839 = vpop.xlane.xlu0 %2838
      %v2840 = vsel %vm309, %v2804, 0.0
      %2841 = vadd.xlane.f32.xlu0 %v2840
      %v2842 = vpop.xlane.xlu0 %2841
      %v2843 = vsel %vm309, %v2805, 0.0
      %2844 = vadd.xlane.f32.xlu0 %v2843
      %v2845 = vpop.xlane.xlu0 %2844
      %v2846 = vsel %vm309, %v2806, 0.0
      %2847 = vadd.xlane.f32.xlu0 %v2846
      %v2848 = vpop.xlane.xlu0 %2847
      %v2849 = vsel %vm309, %v2807, 0.0
      %2850 = vadd.xlane.f32.xlu0 %v2849
      %v2851 = vpop.xlane.xlu0 %2850
      %v2852 = vsel %vm309, %v2808, 0.0
      %2853 = vadd.xlane.f32.xlu0 %v2852
      %v2854 = vpop.xlane.xlu0 %2853
      %v2855 = vsel %vm309, %v2809, 0.0
      %2856 = vadd.xlane.f32.xlu0 %v2855
      %v2857 = vpop.xlane.xlu0 %2856
      %v2858 = vsel %vm309, %v2810, 0.0
      %2859 = vadd.xlane.f32.xlu0 %v2858
      %v2860 = vpop.xlane.xlu0 %2859
      %v2861 = vsel %vm309, %v2811, 0.0
      %2862 = vadd.xlane.f32.xlu0 %v2861
      %v2863 = vpop.xlane.xlu0 %2862
      %v2864 = vsel %vm309, %v2812, 0.0
      %2865 = vadd.xlane.f32.xlu0 %v2864
      %v2866 = vpop.xlane.xlu0 %2865
      %v2867 = vsel %vm309, %v2813, 0.0
      %2868 = vadd.xlane.f32.xlu0 %v2867
      %v2869 = vpop.xlane.xlu0 %2868
      %v2870 = vsel %vm309, %v2814, 0.0
      %2871 = vadd.xlane.f32.xlu0 %v2870
      %v2872 = vpop.xlane.xlu0 %2871
      %v2873 = vsel %vm309, %v2815, 0.0
      %2874 = vadd.xlane.f32.xlu0 %v2873
      %v2875 = vpop.xlane.xlu0 %2874
      %v2876 = vsel %vm309, %v2816, 0.0
      %2877 = vadd.xlane.f32.xlu0 %v2876
      %v2878 = vpop.xlane.xlu0 %2877
      %v2879 = vsel %vm309, %v2817, 0.0
      %2880 = vadd.xlane.f32.xlu0 %v2879
      %v2881 = vpop.xlane.xlu0 %2880
      %v2882 = vsel %vm309, %v2818, 0.0
      %2883 = vadd.xlane.f32.xlu0 %v2882
      %v2884 = vpop.xlane.xlu0 %2883
      %v2885 = vsel %vm309, %v2819, 0.0
      %2886 = vadd.xlane.f32.xlu0 %v2885
      %v2887 = vpop.xlane.xlu0 %2886
      %v2888 = vsel %vm309, %v2820, 0.0
      %2889 = vadd.xlane.f32.xlu0 %v2888
      %v2890 = vpop.xlane.xlu0 %2889
      %v2891 = vsel %vm309, %v2821, 0.0
      %2892 = vadd.xlane.f32.xlu0 %v2891
      %v2893 = vpop.xlane.xlu0 %2892
      %v2894 = vsel %vm309, %v2822, 0.0
      %2895 = vadd.xlane.f32.xlu0 %v2894
      %v2896 = vpop.xlane.xlu0 %2895
      %v2897 = vsel %vm309, %v2823, 0.0
      %2898 = vadd.xlane.f32.xlu0 %v2897
      %v2899 = vpop.xlane.xlu0 %2898
      %v2900 = vsel %vm309, %v2824, 0.0
      %2901 = vadd.xlane.f32.xlu0 %v2900
      %v2902 = vpop.xlane.xlu0 %2901
      %v2903 = vsel %vm309, %v2825, 0.0
      %2904 = vadd.xlane.f32.xlu0 %v2903
      %v2905 = vpop.xlane.xlu0 %2904
      %v2906 = vsel %vm309, %v2826, 0.0
      %2907 = vadd.xlane.f32.xlu0 %v2906
      %v2908 = vpop.xlane.xlu0 %2907
      %v2909 = vsel %vm309, %v2827, 0.0
      %2910 = vadd.xlane.f32.xlu0 %v2909
      %v2911 = vpop.xlane.xlu0 %2910
      %v2912 = vsel %vm309, %v2828, 0.0
      %2913 = vadd.xlane.f32.xlu0 %v2912
      %v2914 = vpop.xlane.xlu0 %2913
      %v2915 = vsel %vm309, %v2829, 0.0
      %2916 = vadd.xlane.f32.xlu0 %v2915
      %v2917 = vpop.xlane.xlu0 %2916
      %v2918 = vsel %vm309, %v2830, 0.0
      %2919 = vadd.xlane.f32.xlu0 %v2918
      %v2920 = vpop.xlane.xlu0 %2919
      %v2921 = vsel %vm309, %v2831, 0.0
      %2922 = vadd.xlane.f32.xlu0 %v2921
      %v2923 = vpop.xlane.xlu0 %2922
      %v2924 = vsel %vm309, %v2832, 0.0
      %2925 = vadd.xlane.f32.xlu0 %v2924
      %v2926 = vpop.xlane.xlu0 %2925
      %v2927 = vsel %vm309, %v2833, 0.0
      %2928 = vadd.xlane.f32.xlu0 %v2927
      %v2929 = vpop.xlane.xlu0 %2928
      %v2962 = vlaneseq
      %v2963 = vshrl.u32 %v2962, 7
      %v2964 = vsub.s32 %v439, %v2963
      %v2965 = vrot.slane %v2836, %v2964
      %v2966 = vlaneseq
      %v2967 = vshrl.u32 %v2966, 7
      %v2968 = vsub.s32 %v444, %v2967
      %v2969 = vrot.slane %v2839, %v2968
      %v2970 = vsel %vm449, %v2969, %v2965
      %v2971 = vlaneseq
      %v2972 = vshrl.u32 %v2971, 7
      %v2973 = vsub.s32 %v439, %v2972
      %v2974 = vrot.slane %v2842, %v2973
      %v2975 = vlaneseq
      %v2976 = vshrl.u32 %v2975, 7
      %v2977 = vsub.s32 %v444, %v2976
      %v2978 = vrot.slane %v2845, %v2977
      %v2979 = vsel %vm449, %v2978, %v2974
      %v2980 = vlaneseq
      %v2981 = vshrl.u32 %v2980, 7
      %v2982 = vsub.s32 %v439, %v2981
      %v2983 = vrot.slane %v2848, %v2982
      %v2984 = vlaneseq
      %v2985 = vshrl.u32 %v2984, 7
      %v2986 = vsub.s32 %v444, %v2985
      %v2987 = vrot.slane %v2851, %v2986
      %v2988 = vsel %vm449, %v2987, %v2983
      %v2989 = vlaneseq
      %v2990 = vshrl.u32 %v2989, 7
      %v2991 = vsub.s32 %v439, %v2990
      %v2992 = vrot.slane %v2854, %v2991
      %v2993 = vlaneseq
      %v2994 = vshrl.u32 %v2993, 7
      %v2995 = vsub.s32 %v444, %v2994
      %v2996 = vrot.slane %v2857, %v2995
      %v2997 = vsel %vm449, %v2996, %v2992
      %v2998 = vlaneseq
      %v2999 = vshrl.u32 %v2998, 7
      %v3000 = vsub.s32 %v439, %v2999
      %v3001 = vrot.slane %v2860, %v3000
      %v3002 = vlaneseq
      %v3003 = vshrl.u32 %v3002, 7
      %v3004 = vsub.s32 %v444, %v3003
      %v3005 = vrot.slane %v2863, %v3004
      %v3006 = vsel %vm449, %v3005, %v3001
      %v3007 = vlaneseq
      %v3008 = vshrl.u32 %v3007, 7
      %v3009 = vsub.s32 %v439, %v3008
      %v3010 = vrot.slane %v2866, %v3009
      %v3011 = vlaneseq
      %v3012 = vshrl.u32 %v3011, 7
      %v3013 = vsub.s32 %v444, %v3012
      %v3014 = vrot.slane %v2869, %v3013
      %v3015 = vsel %vm449, %v3014, %v3010
      %v3016 = vlaneseq
      %v3017 = vshrl.u32 %v3016, 7
      %v3018 = vsub.s32 %v439, %v3017
      %v3019 = vrot.slane %v2872, %v3018
      %v3020 = vlaneseq
      %v3021 = vshrl.u32 %v3020, 7
      %v3022 = vsub.s32 %v444, %v3021
      %v3023 = vrot.slane %v2875, %v3022
      %v3024 = vsel %vm449, %v3023, %v3019
      %v3025 = vlaneseq
      %v3026 = vshrl.u32 %v3025, 7
      %v3027 = vsub.s32 %v439, %v3026
      %v3028 = vrot.slane %v2878, %v3027
      %v3029 = vlaneseq
      %v3030 = vshrl.u32 %v3029, 7
      %v3031 = vsub.s32 %v444, %v3030
      %v3032 = vrot.slane %v2881, %v3031
      %v3033 = vsel %vm449, %v3032, %v3028
      %v3034 = vlaneseq
      %v3035 = vshrl.u32 %v3034, 7
      %v3036 = vsub.s32 %v439, %v3035
      %v3037 = vrot.slane %v2884, %v3036
      %v3038 = vlaneseq
      %v3039 = vshrl.u32 %v3038, 7
      %v3040 = vsub.s32 %v444, %v3039
      %v3041 = vrot.slane %v2887, %v3040
      %v3042 = vsel %vm449, %v3041, %v3037
      %v3043 = vlaneseq
      %v3044 = vshrl.u32 %v3043, 7
      %v3045 = vsub.s32 %v439, %v3044
      %v3046 = vrot.slane %v2890, %v3045
      %v3047 = vlaneseq
      %v3048 = vshrl.u32 %v3047, 7
      %v3049 = vsub.s32 %v444, %v3048
      %v3050 = vrot.slane %v2893, %v3049
      %v3051 = vsel %vm449, %v3050, %v3046
      %v3052 = vlaneseq
      %v3053 = vshrl.u32 %v3052, 7
      %v3054 = vsub.s32 %v439, %v3053
      %v3055 = vrot.slane %v2896, %v3054
      %v3056 = vlaneseq
      %v3057 = vshrl.u32 %v3056, 7
      %v3058 = vsub.s32 %v444, %v3057
      %v3059 = vrot.slane %v2899, %v3058
      %v3060 = vsel %vm449, %v3059, %v3055
      %v3061 = vlaneseq
      %v3062 = vshrl.u32 %v3061, 7
      %v3063 = vsub.s32 %v439, %v3062
      %v3064 = vrot.slane %v2902, %v3063
      %v3065 = vlaneseq
      %v3066 = vshrl.u32 %v3065, 7
      %v3067 = vsub.s32 %v444, %v3066
      %v3068 = vrot.slane %v2905, %v3067
      %v3069 = vsel %vm449, %v3068, %v3064
      %v3070 = vlaneseq
      %v3071 = vshrl.u32 %v3070, 7
      %v3072 = vsub.s32 %v439, %v3071
      %v3073 = vrot.slane %v2908, %v3072
      %v3074 = vlaneseq
      %v3075 = vshrl.u32 %v3074, 7
      %v3076 = vsub.s32 %v444, %v3075
      %v3077 = vrot.slane %v2911, %v3076
      %v3078 = vsel %vm449, %v3077, %v3073
      %v3079 = vlaneseq
      %v3080 = vshrl.u32 %v3079, 7
      %v3081 = vsub.s32 %v439, %v3080
      %v3082 = vrot.slane %v2914, %v3081
      %v3083 = vlaneseq
      %v3084 = vshrl.u32 %v3083, 7
      %v3085 = vsub.s32 %v444, %v3084
      %v3086 = vrot.slane %v2917, %v3085
      %v3087 = vsel %vm449, %v3086, %v3082
      %v3088 = vlaneseq
      %v3089 = vshrl.u32 %v3088, 7
      %v3090 = vsub.s32 %v439, %v3089
      %v3091 = vrot.slane %v2920, %v3090
      %v3092 = vlaneseq
      %v3093 = vshrl.u32 %v3092, 7
      %v3094 = vsub.s32 %v444, %v3093
      %v3095 = vrot.slane %v2923, %v3094
      %v3096 = vsel %vm449, %v3095, %v3091
      %v3097 = vlaneseq
      %v3098 = vshrl.u32 %v3097, 7
      %v3099 = vsub.s32 %v439, %v3098
      %v3100 = vrot.slane %v2926, %v3099
      %v3101 = vlaneseq
      %v3102 = vshrl.u32 %v3101, 7
      %v3103 = vsub.s32 %v444, %v3102
      %v3104 = vrot.slane %v2929, %v3103
      %v3105 = vsel %vm449, %v3104, %v3100
      %v3106 = vsel %vm586, %v2979, %v2970
      %v3107 = vsel %vm588, %v2988, %v3106
      %v3108 = vsel %vm590, %v2997, %v3107
      %v3109 = vsel %vm592, %v3006, %v3108
      %v3110 = vsel %vm594, %v3015, %v3109
      %v3111 = vsel %vm596, %v3024, %v3110
      %v3112 = vsel %vm598, %v3033, %v3111
      %v3113 = vsel %vm586, %v3051, %v3042
      %v3114 = vsel %vm588, %v3060, %v3113
      %v3115 = vsel %vm590, %v3069, %v3114
      %v3116 = vsel %vm592, %v3078, %v3115
      %v3117 = vsel %vm594, %v3087, %v3116
      %v3118 = vsel %vm596, %v3096, %v3117
      %v3119 = vsel %vm598, %v3105, %v3118
      %v3122 = vadd.f32 %v2800, %v3112
      %v3123 = vadd.f32 %v2801, %v3119
      %3124 = vst.msk [vmem:[%s2799] sm:$0xff] %vm189, %v3122
      %3125 = vst.msk [vmem:[%s2799 + $0x8] sm:$0xff] %vm189, %v3123
      %v3126 = vld [vmem:[%s242 + $0x8] sm:$0xff]
      %v3127 = vld [vmem:[%s242 + $0x10] sm:$0xff]
      %v3128 = vld [vmem:[%s242 + $0x20] sm:$0xff]
      %v3129 = vld [vmem:[%s242 + $0x28] sm:$0xff]
      %v3130 = vld [vmem:[%s242 + $0x38] sm:$0xff]
      %v3131 = vld [vmem:[%s242 + $0x40] sm:$0xff]
      %v3132 = vld [vmem:[%s242 + $0x50] sm:$0xff]
      %v3133 = vld [vmem:[%s242 + $0x58] sm:$0xff]
      %v3134 = vld [vmem:[%s242 + $0x68] sm:$0xff]
      %v3135 = vld [vmem:[%s242 + $0x70] sm:$0xff]
      %v3136 = vld [vmem:[%s242 + $0x80] sm:$0xff]
      %v3137 = vld [vmem:[%s242 + $0x88] sm:$0xff]
      %v3138 = vld [vmem:[%s242 + $0x98] sm:$0xff]
      %v3139 = vld [vmem:[%s242 + $0xa0] sm:$0xff]
      %v3140 = vld [vmem:[%s242 + $0xb0] sm:$0xff]
      %v3141 = vld [vmem:[%s242 + $0xb8] sm:$0xff]
      %v3142 = vld [vmem:[%s242 + $0xc8] sm:$0xff]
      %v3143 = vld [vmem:[%s242 + $0xd0] sm:$0xff]
      %v3144 = vld [vmem:[%s242 + $0xe0] sm:$0xff]
      %v3145 = vld [vmem:[%s242 + $0xe8] sm:$0xff]
      %v3146 = vld [vmem:[%s242 + $0xf8] sm:$0xff]
      %v3147 = vld [vmem:[%s242 + $0x100] sm:$0xff]
      %v3148 = vld [vmem:[%s242 + $0x110] sm:$0xff]
      %v3149 = vld [vmem:[%s242 + $0x118] sm:$0xff]
      %v3150 = vld [vmem:[%s242 + $0x128] sm:$0xff]
      %v3151 = vld [vmem:[%s242 + $0x130] sm:$0xff]
      %v3152 = vld [vmem:[%s242 + $0x140] sm:$0xff]
      %v3153 = vld [vmem:[%s242 + $0x148] sm:$0xff]
      %v3154 = vld [vmem:[%s242 + $0x158] sm:$0xff]
      %v3155 = vld [vmem:[%s242 + $0x160] sm:$0xff]
      %v3156 = vld [vmem:[%s242 + $0x170] sm:$0xff]
      %v3157 = vld [vmem:[%s242 + $0x178] sm:$0xff]
      %s3158 = scalar_lea.vmem [#allocation2], 128
      %v3159 = vld [vmem:[%s3158] sm:$0xff]
      %v3160 = vld [vmem:[%s3158 + $0x8] sm:$0xff]
      %v3161 = vmul.f32 %v209, %v3126
      %v3162 = vmul.f32 %v210, %v3127
      %v3163 = vmul.f32 %v211, %v3128
      %v3164 = vmul.f32 %v212, %v3129
      %v3165 = vmul.f32 %v213, %v3130
      %v3166 = vmul.f32 %v214, %v3131
      %v3167 = vmul.f32 %v215, %v3132
      %v3168 = vmul.f32 %v216, %v3133
      %v3169 = vmul.f32 %v217, %v3134
      %v3170 = vmul.f32 %v218, %v3135
      %v3171 = vmul.f32 %v219, %v3136
      %v3172 = vmul.f32 %v220, %v3137
      %v3173 = vmul.f32 %v221, %v3138
      %v3174 = vmul.f32 %v222, %v3139
      %v3175 = vmul.f32 %v223, %v3140
      %v3176 = vmul.f32 %v224, %v3141
      %v3177 = vmul.f32 %v225, %v3142
      %v3178 = vmul.f32 %v226, %v3143
      %v3179 = vmul.f32 %v227, %v3144
      %v3180 = vmul.f32 %v228, %v3145
      %v3181 = vmul.f32 %v229, %v3146
      %v3182 = vmul.f32 %v230, %v3147
      %v3183 = vmul.f32 %v231, %v3148
      %v3184 = vmul.f32 %v232, %v3149
      %v3185 = vmul.f32 %v233, %v3150
      %v3186 = vmul.f32 %v234, %v3151
      %v3187 = vmul.f32 %v235, %v3152
      %v3188 = vmul.f32 %v236, %v3153
      %v3189 = vmul.f32 %v237, %v3154
      %v3190 = vmul.f32 %v238, %v3155
      %v3191 = vmul.f32 %v239, %v3156
      %v3192 = vmul.f32 %v240, %v3157
      %v3193 = vsel %vm309, %v3161, 0.0
      %3194 = vadd.xlane.f32.xlu0 %v3193
      %v3195 = vpop.xlane.xlu0 %3194
      %v3196 = vsel %vm309, %v3162, 0.0
      %3197 = vadd.xlane.f32.xlu0 %v3196
      %v3198 = vpop.xlane.xlu0 %3197
      %v3199 = vsel %vm309, %v3163, 0.0
      %3200 = vadd.xlane.f32.xlu0 %v3199
      %v3201 = vpop.xlane.xlu0 %3200
      %v3202 = vsel %vm309, %v3164, 0.0
      %3203 = vadd.xlane.f32.xlu0 %v3202
      %v3204 = vpop.xlane.xlu0 %3203
      %v3205 = vsel %vm309, %v3165, 0.0
      %3206 = vadd.xlane.f32.xlu0 %v3205
      %v3207 = vpop.xlane.xlu0 %3206
      %v3208 = vsel %vm309, %v3166, 0.0
      %3209 = vadd.xlane.f32.xlu0 %v3208
      %v3210 = vpop.xlane.xlu0 %3209
      %v3211 = vsel %vm309, %v3167, 0.0
      %3212 = vadd.xlane.f32.xlu0 %v3211
      %v3213 = vpop.xlane.xlu0 %3212
      %v3214 = vsel %vm309, %v3168, 0.0
      %3215 = vadd.xlane.f32.xlu0 %v3214
      %v3216 = vpop.xlane.xlu0 %3215
      %v3217 = vsel %vm309, %v3169, 0.0
      %3218 = vadd.xlane.f32.xlu0 %v3217
      %v3219 = vpop.xlane.xlu0 %3218
      %v3220 = vsel %vm309, %v3170, 0.0
      %3221 = vadd.xlane.f32.xlu0 %v3220
      %v3222 = vpop.xlane.xlu0 %3221
      %v3223 = vsel %vm309, %v3171, 0.0
      %3224 = vadd.xlane.f32.xlu0 %v3223
      %v3225 = vpop.xlane.xlu0 %3224
      %v3226 = vsel %vm309, %v3172, 0.0
      %3227 = vadd.xlane.f32.xlu0 %v3226
      %v3228 = vpop.xlane.xlu0 %3227
      %v3229 = vsel %vm309, %v3173, 0.0
      %3230 = vadd.xlane.f32.xlu0 %v3229
      %v3231 = vpop.xlane.xlu0 %3230
      %v3232 = vsel %vm309, %v3174, 0.0
      %3233 = vadd.xlane.f32.xlu0 %v3232
      %v3234 = vpop.xlane.xlu0 %3233
      %v3235 = vsel %vm309, %v3175, 0.0
      %3236 = vadd.xlane.f32.xlu0 %v3235
      %v3237 = vpop.xlane.xlu0 %3236
      %v3238 = vsel %vm309, %v3176, 0.0
      %3239 = vadd.xlane.f32.xlu0 %v3238
      %v3240 = vpop.xlane.xlu0 %3239
      %v3241 = vsel %vm309, %v3177, 0.0
      %3242 = vadd.xlane.f32.xlu0 %v3241
      %v3243 = vpop.xlane.xlu0 %3242
      %v3244 = vsel %vm309, %v3178, 0.0
      %3245 = vadd.xlane.f32.xlu0 %v3244
      %v3246 = vpop.xlane.xlu0 %3245
      %v3247 = vsel %vm309, %v3179, 0.0
      %3248 = vadd.xlane.f32.xlu0 %v3247
      %v3249 = vpop.xlane.xlu0 %3248
      %v3250 = vsel %vm309, %v3180, 0.0
      %3251 = vadd.xlane.f32.xlu0 %v3250
      %v3252 = vpop.xlane.xlu0 %3251
      %v3253 = vsel %vm309, %v3181, 0.0
      %3254 = vadd.xlane.f32.xlu0 %v3253
      %v3255 = vpop.xlane.xlu0 %3254
      %v3256 = vsel %vm309, %v3182, 0.0
      %3257 = vadd.xlane.f32.xlu0 %v3256
      %v3258 = vpop.xlane.xlu0 %3257
      %v3259 = vsel %vm309, %v3183, 0.0
      %3260 = vadd.xlane.f32.xlu0 %v3259
      %v3261 = vpop.xlane.xlu0 %3260
      %v3262 = vsel %vm309, %v3184, 0.0
      %3263 = vadd.xlane.f32.xlu0 %v3262
      %v3264 = vpop.xlane.xlu0 %3263
      %v3265 = vsel %vm309, %v3185, 0.0
      %3266 = vadd.xlane.f32.xlu0 %v3265
      %v3267 = vpop.xlane.xlu0 %3266
      %v3268 = vsel %vm309, %v3186, 0.0
      %3269 = vadd.xlane.f32.xlu0 %v3268
      %v3270 = vpop.xlane.xlu0 %3269
      %v3271 = vsel %vm309, %v3187, 0.0
      %3272 = vadd.xlane.f32.xlu0 %v3271
      %v3273 = vpop.xlane.xlu0 %3272
      %v3274 = vsel %vm309, %v3188, 0.0
      %3275 = vadd.xlane.f32.xlu0 %v3274
      %v3276 = vpop.xlane.xlu0 %3275
      %v3277 = vsel %vm309, %v3189, 0.0
      %3278 = vadd.xlane.f32.xlu0 %v3277
      %v3279 = vpop.xlane.xlu0 %3278
      %v3280 = vsel %vm309, %v3190, 0.0
      %3281 = vadd.xlane.f32.xlu0 %v3280
      %v3282 = vpop.xlane.xlu0 %3281
      %v3283 = vsel %vm309, %v3191, 0.0
      %3284 = vadd.xlane.f32.xlu0 %v3283
      %v3285 = vpop.xlane.xlu0 %3284
      %v3286 = vsel %vm309, %v3192, 0.0
      %3287 = vadd.xlane.f32.xlu0 %v3286
      %v3288 = vpop.xlane.xlu0 %3287
      %v3321 = vlaneseq
      %v3322 = vshrl.u32 %v3321, 7
      %v3323 = vsub.s32 %v439, %v3322
      %v3324 = vrot.slane %v3195, %v3323
      %v3325 = vlaneseq
      %v3326 = vshrl.u32 %v3325, 7
      %v3327 = vsub.s32 %v444, %v3326
      %v3328 = vrot.slane %v3198, %v3327
      %v3329 = vsel %vm449, %v3328, %v3324
      %v3330 = vlaneseq
      %v3331 = vshrl.u32 %v3330, 7
      %v3332 = vsub.s32 %v439, %v3331
      %v3333 = vrot.slane %v3201, %v3332
      %v3334 = vlaneseq
      %v3335 = vshrl.u32 %v3334, 7
      %v3336 = vsub.s32 %v444, %v3335
      %v3337 = vrot.slane %v3204, %v3336
      %v3338 = vsel %vm449, %v3337, %v3333
      %v3339 = vlaneseq
      %v3340 = vshrl.u32 %v3339, 7
      %v3341 = vsub.s32 %v439, %v3340
      %v3342 = vrot.slane %v3207, %v3341
      %v3343 = vlaneseq
      %v3344 = vshrl.u32 %v3343, 7
      %v3345 = vsub.s32 %v444, %v3344
      %v3346 = vrot.slane %v3210, %v3345
      %v3347 = vsel %vm449, %v3346, %v3342
      %v3348 = vlaneseq
      %v3349 = vshrl.u32 %v3348, 7
      %v3350 = vsub.s32 %v439, %v3349
      %v3351 = vrot.slane %v3213, %v3350
      %v3352 = vlaneseq
      %v3353 = vshrl.u32 %v3352, 7
      %v3354 = vsub.s32 %v444, %v3353
      %v3355 = vrot.slane %v3216, %v3354
      %v3356 = vsel %vm449, %v3355, %v3351
      %v3357 = vlaneseq
      %v3358 = vshrl.u32 %v3357, 7
      %v3359 = vsub.s32 %v439, %v3358
      %v3360 = vrot.slane %v3219, %v3359
      %v3361 = vlaneseq
      %v3362 = vshrl.u32 %v3361, 7
      %v3363 = vsub.s32 %v444, %v3362
      %v3364 = vrot.slane %v3222, %v3363
      %v3365 = vsel %vm449, %v3364, %v3360
      %v3366 = vlaneseq
      %v3367 = vshrl.u32 %v3366, 7
      %v3368 = vsub.s32 %v439, %v3367
      %v3369 = vrot.slane %v3225, %v3368
      %v3370 = vlaneseq
      %v3371 = vshrl.u32 %v3370, 7
      %v3372 = vsub.s32 %v444, %v3371
      %v3373 = vrot.slane %v3228, %v3372
      %v3374 = vsel %vm449, %v3373, %v3369
      %v3375 = vlaneseq
      %v3376 = vshrl.u32 %v3375, 7
      %v3377 = vsub.s32 %v439, %v3376
      %v3378 = vrot.slane %v3231, %v3377
      %v3379 = vlaneseq
      %v3380 = vshrl.u32 %v3379, 7
      %v3381 = vsub.s32 %v444, %v3380
      %v3382 = vrot.slane %v3234, %v3381
      %v3383 = vsel %vm449, %v3382, %v3378
      %v3384 = vlaneseq
      %v3385 = vshrl.u32 %v3384, 7
      %v3386 = vsub.s32 %v439, %v3385
      %v3387 = vrot.slane %v3237, %v3386
      %v3388 = vlaneseq
      %v3389 = vshrl.u32 %v3388, 7
      %v3390 = vsub.s32 %v444, %v3389
      %v3391 = vrot.slane %v3240, %v3390
      %v3392 = vsel %vm449, %v3391, %v3387
      %v3393 = vlaneseq
      %v3394 = vshrl.u32 %v3393, 7
      %v3395 = vsub.s32 %v439, %v3394
      %v3396 = vrot.slane %v3243, %v3395
      %v3397 = vlaneseq
      %v3398 = vshrl.u32 %v3397, 7
      %v3399 = vsub.s32 %v444, %v3398
      %v3400 = vrot.slane %v3246, %v3399
      %v3401 = vsel %vm449, %v3400, %v3396
      %v3402 = vlaneseq
      %v3403 = vshrl.u32 %v3402, 7
      %v3404 = vsub.s32 %v439, %v3403
      %v3405 = vrot.slane %v3249, %v3404
      %v3406 = vlaneseq
      %v3407 = vshrl.u32 %v3406, 7
      %v3408 = vsub.s32 %v444, %v3407
      %v3409 = vrot.slane %v3252, %v3408
      %v3410 = vsel %vm449, %v3409, %v3405
      %v3411 = vlaneseq
      %v3412 = vshrl.u32 %v3411, 7
      %v3413 = vsub.s32 %v439, %v3412
      %v3414 = vrot.slane %v3255, %v3413
      %v3415 = vlaneseq
      %v3416 = vshrl.u32 %v3415, 7
      %v3417 = vsub.s32 %v444, %v3416
      %v3418 = vrot.slane %v3258, %v3417
      %v3419 = vsel %vm449, %v3418, %v3414
      %v3420 = vlaneseq
      %v3421 = vshrl.u32 %v3420, 7
      %v3422 = vsub.s32 %v439, %v3421
      %v3423 = vrot.slane %v3261, %v3422
      %v3424 = vlaneseq
      %v3425 = vshrl.u32 %v3424, 7
      %v3426 = vsub.s32 %v444, %v3425
      %v3427 = vrot.slane %v3264, %v3426
      %v3428 = vsel %vm449, %v3427, %v3423
      %v3429 = vlaneseq
      %v3430 = vshrl.u32 %v3429, 7
      %v3431 = vsub.s32 %v439, %v3430
      %v3432 = vrot.slane %v3267, %v3431
      %v3433 = vlaneseq
      %v3434 = vshrl.u32 %v3433, 7
      %v3435 = vsub.s32 %v444, %v3434
      %v3436 = vrot.slane %v3270, %v3435
      %v3437 = vsel %vm449, %v3436, %v3432
      %v3438 = vlaneseq
      %v3439 = vshrl.u32 %v3438, 7
      %v3440 = vsub.s32 %v439, %v3439
      %v3441 = vrot.slane %v3273, %v3440
      %v3442 = vlaneseq
      %v3443 = vshrl.u32 %v3442, 7
      %v3444 = vsub.s32 %v444, %v3443
      %v3445 = vrot.slane %v3276, %v3444
      %v3446 = vsel %vm449, %v3445, %v3441
      %v3447 = vlaneseq
      %v3448 = vshrl.u32 %v3447, 7
      %v3449 = vsub.s32 %v439, %v3448
      %v3450 = vrot.slane %v3279, %v3449
      %v3451 = vlaneseq
      %v3452 = vshrl.u32 %v3451, 7
      %v3453 = vsub.s32 %v444, %v3452
      %v3454 = vrot.slane %v3282, %v3453
      %v3455 = vsel %vm449, %v3454, %v3450
      %v3456 = vlaneseq
      %v3457 = vshrl.u32 %v3456, 7
      %v3458 = vsub.s32 %v439, %v3457
      %v3459 = vrot.slane %v3285, %v3458
      %v3460 = vlaneseq
      %v3461 = vshrl.u32 %v3460, 7
      %v3462 = vsub.s32 %v444, %v3461
      %v3463 = vrot.slane %v3288, %v3462
      %v3464 = vsel %vm449, %v3463, %v3459
      %v3465 = vsel %vm586, %v3338, %v3329
      %v3466 = vsel %vm588, %v3347, %v3465
      %v3467 = vsel %vm590, %v3356, %v3466
      %v3468 = vsel %vm592, %v3365, %v3467
      %v3469 = vsel %vm594, %v3374, %v3468
      %v3470 = vsel %vm596, %v3383, %v3469
      %v3471 = vsel %vm598, %v3392, %v3470
      %v3472 = vsel %vm586, %v3410, %v3401
      %v3473 = vsel %vm588, %v3419, %v3472
      %v3474 = vsel %vm590, %v3428, %v3473
      %v3475 = vsel %vm592, %v3437, %v3474
      %v3476 = vsel %vm594, %v3446, %v3475
      %v3477 = vsel %vm596, %v3455, %v3476
      %v3478 = vsel %vm598, %v3464, %v3477
      %v3481 = vadd.f32 %v3159, %v3471
      %v3482 = vadd.f32 %v3160, %v3478
      %3483 = vst.msk [vmem:[%s3158] sm:$0xff] %vm189, %v3481
      %3484 = vst.msk [vmem:[%s3158 + $0x8] sm:$0xff] %vm189, %v3482
      %v3485 = vld [vmem:[#allocation2] sm:$0xff]
      %v3486 = vld [vmem:[#allocation2 + $0x8] sm:$0xff]
      %v3487 = vld [vmem:[#allocation2 + $0x10] sm:$0xff]
      %v3488 = vld [vmem:[#allocation2 + $0x18] sm:$0xff]
      %v3489 = vld [vmem:[#allocation2 + $0x20] sm:$0xff]
      %v3490 = vld [vmem:[#allocation2 + $0x28] sm:$0xff]
      %v3491 = vld [vmem:[#allocation2 + $0x30] sm:$0xff]
      %v3492 = vld [vmem:[#allocation2 + $0x38] sm:$0xff]
      %v3493 = vld [vmem:[#allocation2 + $0x40] sm:$0xff]
      %v3494 = vld [vmem:[#allocation2 + $0x48] sm:$0xff]
      %v3495 = vld [vmem:[#allocation2 + $0x50] sm:$0xff]
      %v3496 = vld [vmem:[#allocation2 + $0x58] sm:$0xff]
      %v3497 = vld [vmem:[#allocation2 + $0x60] sm:$0xff]
      %v3498 = vld [vmem:[#allocation2 + $0x68] sm:$0xff]
      %v3499 = vld [vmem:[#allocation2 + $0x70] sm:$0xff]
      %v3500 = vld [vmem:[#allocation2 + $0x78] sm:$0xff]
      %v3501 = vld [vmem:[#allocation2 + $0x80] sm:$0xff]
      %v3502 = vld [vmem:[#allocation2 + $0x88] sm:$0xff]
      %v3503 = vmul.f32 %v3485, 0.25
      %v3504 = vmul.f32 %v3486, 0.25
      %v3505 = vmul.f32 %v3487, 0.25
      %v3506 = vmul.f32 %v3488, 0.25
      %v3507 = vmul.f32 %v3489, 0.25
      %v3508 = vmul.f32 %v3490, 0.25
      %v3509 = vmul.f32 %v3491, 0.25
      %v3510 = vmul.f32 %v3492, 0.25
      %v3511 = vmul.f32 %v3493, 0.25
      %v3512 = vmul.f32 %v3494, 0.25
      %v3513 = vmul.f32 %v3495, 0.25
      %v3514 = vmul.f32 %v3496, 0.25
      %v3515 = vmul.f32 %v3497, 0.25
      %v3516 = vmul.f32 %v3498, 0.25
      %v3517 = vmul.f32 %v3499, 0.25
      %v3518 = vmul.f32 %v3500, 0.25
      %v3519 = vmul.f32 %v3501, 0.25
      %v3520 = vmul.f32 %v3502, 0.25
      %3521 = vst.msk [vmem:[%s187] sm:$0xff] %vm189, %v3503
      %3522 = vst.msk [vmem:[%s187 + $0x8] sm:$0xff] %vm189, %v3504
      %3523 = vst.msk [vmem:[%s187 + $0x10] sm:$0xff] %vm189, %v3505
      %3524 = vst.msk [vmem:[%s187 + $0x18] sm:$0xff] %vm189, %v3506
      %3525 = vst.msk [vmem:[%s187 + $0x20] sm:$0xff] %vm189, %v3507
      %3526 = vst.msk [vmem:[%s187 + $0x28] sm:$0xff] %vm189, %v3508
      %3527 = vst.msk [vmem:[%s187 + $0x30] sm:$0xff] %vm189, %v3509
      %3528 = vst.msk [vmem:[%s187 + $0x38] sm:$0xff] %vm189, %v3510
      %3529 = vst.msk [vmem:[%s187 + $0x40] sm:$0xff] %vm189, %v3511
      %3530 = vst.msk [vmem:[%s187 + $0x48] sm:$0xff] %vm189, %v3512
      %3531 = vst.msk [vmem:[%s187 + $0x50] sm:$0xff] %vm189, %v3513
      %3532 = vst.msk [vmem:[%s187 + $0x58] sm:$0xff] %vm189, %v3514
      %3533 = vst.msk [vmem:[%s187 + $0x60] sm:$0xff] %vm189, %v3515
      %3534 = vst.msk [vmem:[%s187 + $0x68] sm:$0xff] %vm189, %v3516
      %3535 = vst.msk [vmem:[%s187 + $0x70] sm:$0xff] %vm189, %v3517
      %3536 = vst.msk [vmem:[%s187 + $0x78] sm:$0xff] %vm189, %v3518
      %3537 = vst.msk [vmem:[%s187 + $0x80] sm:$0xff] %vm189, %v3519
      %3538 = vst.msk [vmem:[%s187 + $0x88] sm:$0xff] %vm189, %v3520
      %s3539 = smul.u32 9, %s18
      %p3540 = scmp.lt.s32.totalorder %s17, 1
      %s3541 = scalar_select %p3540, %s17, 1
      %p3542 = scmp.lt.s32.totalorder %s3539, 80
      %s3543 = scalar_select %p3542, %s3539, 80
      %s3544 = smul.addr %s3543, 2
      %s3545 = smul.addr %s3541, 162
      %s3546 = sadd.s32 %s3544, %s3545
      %s3547 = smul.addr %s3546, 8
      %s3548 = scalar_lea.vmem %s2, %s3547
      // Predicated region
      $region29: #{tpu_custom_call.1} parent=27 // pred_check
        %p3549 = pneg %p97
      $region30: #{tpu_custom_call.1} parent=27 // pred_check_branch
        %3551 = sbr.rel (%p3549) target = $region32
      $region31: #{tpu_custom_call.1} parent=27 // pred_region
        %s3552 = smul.u32 9, %s18
      $region32: #{tpu_custom_call.1} parent=27 // pred_fallthru
        _
    $region28: #{tpu_custom_call.1} parent=5 // pred_fallthru
      _
    %p3553 = scmp.le.s32.totalorder 2, %s8
    // Predicated region
    $region33: #{tpu_custom_call.1} parent=5 // pred_check
      %p3554 = pneg %p3553
    $region34: #{tpu_custom_call.1} parent=5 // pred_check_branch
      %3556 = sbr.rel (%p3554) target = $region36
    $region35: #{tpu_custom_call.1} parent=5 // pred_region
      %s3557 = ssub.s32 %s8, 2
      // Predicated region
      $region37: #{tpu_custom_call.1} parent=35 // pred_check
        %p3558 = pneg %p103
      $region38: #{tpu_custom_call.1} parent=35 // pred_check_branch
        %3560 = sbr.rel (%p3558) target = $region40
      $region39: #{tpu_custom_call.1} parent=35 // pred_region
        %s3561 = smul.u32 9, %s20
        %p3562 = scmp.lt.s32.totalorder %s19, 1
        %s3563 = scalar_select %p3562, %s19, 1
        %p3564 = scmp.lt.s32.totalorder %s3561, 80
        %s3565 = scalar_select %p3564, %s3561, 80
        %s3566 = smul.addr %s3565, 2
        %s3567 = smul.addr %s3563, 162
        %s3568 = sadd.s32 %s3566, %s3567
        %s3569 = smul.addr %s3568, 8
        %s3570 = scalar_lea.vmem %s2, %s3569
      $region40: #{tpu_custom_call.1} parent=35 // pred_fallthru
        _
    $region36: #{tpu_custom_call.1} parent=5 // pred_fallthru
      _
  $region6: #{tpu_custom_call.1} parent=0 // loop_footer
    %s12 = sadd.s32 1, %s8
  $region7: #{tpu_custom_call.1} parent=0 // loop_footer_branch
    %7 = sbr.rel target = $region3
  $region8: #{tpu_custom_call.1} parent=0 // loop_exit
    _

</llo_original>
